<compile_context>
chip_gen: v5e
topology: v5e:2x2
jax: 0.10.0
libtpu: 0.0.40
codegen_flags: <defaults>
</compile_context>

<pallas_src>
import functools

import jax
import jax.numpy as jnp
from jax import lax
from jax.experimental import pallas as pl
from jax.experimental.pallas import tpu as pltpu


def _round_up(v, m):
    return ((v + m - 1) // m) * m


# ----------------------------------------------------------------------------
# Pallas kernel: per-mode batched real matmul on the MXU.
#   out[g, b, :] = x[g, b, :] @ w[g, :, :]
# g indexes flattened (corner, kx, ky) modes; the contraction axis packs
# [real | imag] input channels (K = 2*Cin) and the output axis packs
# [real | imag] output channels (N = 2*Cout), so one contraction does the
# full complex channel mix with f32 accumulation.
# ----------------------------------------------------------------------------
def _spectral_mix_kernel(x_ref, w_ref, o_ref):
    o_ref[...] = lax.dot_general(
        x_ref[...], w_ref[...],
        dimension_numbers=(((2,), (1,)), ((0,), (0,))),
        preferred_element_type=jnp.float32,
    ).astype(o_ref.dtype)


def _spectral_mix_pallas(x_mat, w_mat):
    """x_mat: (G, B, K) f32, w_mat: (G, K, N) f32 -> (G, B, N) f32."""
    G, B, K = x_mat.shape
    N = w_mat.shape[2]

    # Lane/sublane-dense padding (zero-pad; padded rows/cols are sliced off).
    Bp = _round_up(B, 8)
    Kp = _round_up(K, 128)
    Np = _round_up(N, 128)

    # Mode-axis tile: cap one buffer set (x + w + out block) at ~6 MiB so that
    # the double-buffered pipeline stays far below even v7x's 64 MiB VMEM.
    bytes_per_mode = (Bp * Kp + Kp * Np + Bp * Np) * 4
    tile = max(1, min(G, (6 * 1024 * 1024) // bytes_per_mode))
    Gp = _round_up(G, tile)

    x_p = jnp.pad(x_mat, ((0, Gp - G), (0, Bp - B), (0, Kp - K)))
    w_p = jnp.pad(w_mat, ((0, Gp - G), (0, Kp - K), (0, Np - N)))

    grid = (Gp // tile,)
    cost = pl.CostEstimate(
        flops=2 * Gp * Bp * Kp * Np,
        transcendentals=0,
        bytes_accessed=4 * (Gp * Bp * Kp + Gp * Kp * Np + Gp * Bp * Np),
    )

    out = pl.pallas_call(
        _spectral_mix_kernel,
        out_shape=jax.ShapeDtypeStruct((Gp, Bp, Np), jnp.float32),
        grid_spec=pltpu.PrefetchScalarGridSpec(
            num_scalar_prefetch=0,
            grid=grid,
            in_specs=[
                pl.BlockSpec((tile, Bp, Kp), lambda g: (g, 0, 0)),
                pl.BlockSpec((tile, Kp, Np), lambda g: (g, 0, 0)),
            ],
            out_specs=pl.BlockSpec((tile, Bp, Np), lambda g: (g, 0, 0)),
        ),
        compiler_params=pltpu.CompilerParams(
            dimension_semantics=("parallel",),
            vmem_limit_bytes=32 * 1024 * 1024,
        ),
        cost_estimate=cost,
    )(x_p, w_p)
    return out[:G, :B, :N]


# ----------------------------------------------------------------------------
# SpectralConv2d_fast forward (Pallas-backed channel mixing).
# ----------------------------------------------------------------------------
def spectral_conv2d_fast(x, weights1, weights2, modes1, modes2):
    """x: (B, Cin, H, W) f32 NCHW.  weights*: (Cin, Cout, m1, m2) complex64."""
    B, Cin, H, W = x.shape
    Cout = weights1.shape[1]
    Wf = W // 2 + 1

    x_ft = jnp.fft.rfft2(x)                                  # (B, Cin, H, Wf) c64

    # Gather the two retained corners, flatten (corner, kx, ky) into one axis.
    x_low = x_ft[:, :, :modes1, :modes2]
    x_high = x_ft[:, :, H - modes1:, :modes2]
    x_modes = jnp.concatenate([x_low, x_high], axis=2)       # (B, Cin, 2*m1, m2)

    xr = jnp.real(x_modes).astype(jnp.float32)
    xi = jnp.imag(x_modes).astype(jnp.float32)
    x_pack = jnp.concatenate([xr, xi], axis=1)               # (B, 2*Cin, 2*m1, m2)
    G = 2 * modes1 * modes2
    x_mat = jnp.transpose(x_pack, (2, 3, 0, 1)).reshape(G, B, 2 * Cin)

    w = jnp.stack([weights1, weights2], axis=0)              # (2, Cin, Cout, m1, m2)
    wr = jnp.real(w).astype(jnp.float32)
    wi = jnp.imag(w).astype(jnp.float32)
    # Real block matrix of the complex multiply: [[wr, wi], [-wi, wr]].
    w_top = jnp.concatenate([wr, wi], axis=2)                # (2, Cin, 2*Cout, m1, m2)
    w_bot = jnp.concatenate([-wi, wr], axis=2)
    w_block = jnp.concatenate([w_top, w_bot], axis=1)        # (2, 2*Cin, 2*Cout, m1, m2)
    w_mat = jnp.transpose(w_block, (0, 3, 4, 1, 2)).reshape(G, 2 * Cin, 2 * Cout)

    out_mat = _spectral_mix_pallas(x_mat, w_mat)             # (G, B, 2*Cout) f32

    out = out_mat.reshape(2, modes1, modes2, B, 2 * Cout)
    out_c = (out[..., :Cout] + 1j * out[..., Cout:]).astype(jnp.complex64)
    out_c = jnp.transpose(out_c, (0, 3, 4, 1, 2))            # (2, B, Cout, m1, m2)

    # NOTE: if 2*modes1 > H the two corner writes overlap (weights2 wins),
    # matching the PyTorch module's behavior.
    out_ft = jnp.zeros((B, Cout, H, Wf), dtype=jnp.complex64)
    out_ft = out_ft.at[:, :, :modes1, :modes2].set(out_c[0])
    out_ft = out_ft.at[:, :, H - modes1:, :modes2].set(out_c[1])

    return jnp.fft.irfft2(out_ft, s=(H, W))                  # (B, Cout, H, W) f32


# Pure-JAX reference spectral conv (mirrors the PyTorch forward exactly).
def _spectral_conv_reference(x, weights1, weights2, modes1, modes2):
    B, Cin, H, W = x.shape
    Cout = weights1.shape[1]
    Wf = W // 2 + 1
    x_ft = jnp.fft.rfft2(x)
    out_ft = jnp.zeros((B, Cout, H, Wf), dtype=jnp.complex64)
    out_ft = out_ft.at[:, :, :modes1, :modes2].set(
        jnp.einsum('bixy,ioxy->boxy', x_ft[:, :, :modes1, :modes2], weights1))
    out_ft = out_ft.at[:, :, H - modes1:, :modes2].set(
        jnp.einsum('bixy,ioxy->boxy', x_ft[:, :, H - modes1:, :modes2], weights2))
    return jnp.fft.irfft2(out_ft, s=(H, W))


# ----------------------------------------------------------------------------
# Full FNO2d forward (the glue layers are plain XLA; the four spectral convs
# use the Pallas kernel above).  Dropout is identity (eval mode).
# ----------------------------------------------------------------------------
def fno2d_forward(params, x, grid_coords, modes1, modes2, padding=1,
                  spectral_fn=spectral_conv2d_fast):
    h = jnp.concatenate([x, grid_coords], axis=-1)           # (B, H, W, C+2)
    h = h @ params["fc0_w"] + params["fc0_b"]                # (B, H, W, width)
    h = jnp.transpose(h, (0, 3, 1, 2))                       # (B, width, H, W)
    h = jnp.pad(h, ((0, 0), (0, 0), (0, padding), (0, padding)))

    for i in range(4):
        x1 = spectral_fn(h, params[f"conv{i}_w1"], params[f"conv{i}_w2"],
                         modes1, modes2)
        x2 = jnp.einsum('oi,bihw->bohw', params[f"w{i}_w"], h) \
            + params[f"w{i}_b"][None, :, None, None]
        h = x1 + x2
        if i < 3:
            h = jax.nn.gelu(h, approximate=False)

    h = h[..., :-padding, :-padding]
    h = jnp.transpose(h, (0, 2, 3, 1))                       # (B, H, W, width)
    h = h @ params["fc1_w"] + params["fc1_b"]
    h = jax.nn.gelu(h, approximate=False)
    h = h @ params["fc2_w"] + params["fc2_b"]
    return h


if __name__ == "__main__":
    # Small shapes consistent with the module.
    B = 2
    H = W = 16
    num_channels = 1
    initial_step = 4
    width = 8
    modes1 = modes2 = 6
    c_in = num_channels * initial_step

    key = jax.random.PRNGKey(0)
    keys = list(jax.random.split(key, 64))
    kit = iter(keys)

    def rn(shape, scale=0.1):
        return scale * jax.random.normal(next(kit), shape, dtype=jnp.float32)

    scale_w = 1.0 / (width * width)

    def cweights():
        r = jax.random.uniform(next(kit), (width, width, modes1, modes2))
        im = jax.random.uniform(next(kit), (width, width, modes1, modes2))
        return (scale_w * (r + 1j * im)).astype(jnp.complex64)

    params = {
        "fc0_w": rn((c_in + 2, width)),
        "fc0_b": rn((width,)),
        "fc1_w": rn((width, 128)),
        "fc1_b": rn((128,)),
        "fc2_w": rn((128, num_channels)),
        "fc2_b": rn((num_channels,)),
    }
    for i in range(4):
        params[f"conv{i}_w1"] = cweights()
        params[f"conv{i}_w2"] = cweights()
        params[f"w{i}_w"] = rn((width, width))
        params[f"w{i}_b"] = rn((width,))

    x = jax.random.normal(next(kit), (B, H, W, c_in), dtype=jnp.float32)
    gx = jnp.linspace(0.0, 1.0, H)
    gy = jnp.linspace(0.0, 1.0, W)
    gg = jnp.stack(jnp.meshgrid(gx, gy, indexing="ij"), axis=-1)  # (H, W, 2)
    grid_coords = jnp.broadcast_to(gg, (B, H, W, 2)).astype(jnp.float32)

    # --- check the Pallas spectral conv alone against the einsum reference ---
    xs = jax.random.normal(next(kit), (B, width, H + 1, W + 1), dtype=jnp.float32)
    sc_fn = jax.jit(functools.partial(spectral_conv2d_fast,
                                      modes1=modes1, modes2=modes2))
    sc_out = jax.block_until_ready(sc_fn(xs, params["conv0_w1"], params["conv0_w2"]))
    sc_ref = _spectral_conv_reference(xs, params["conv0_w1"], params["conv0_w2"],
                                      modes1, modes2)
    assert sc_out.shape == sc_ref.shape, (sc_out.shape, sc_ref.shape)
    assert jnp.allclose(sc_out, sc_ref, atol=1e-3, rtol=1e-3), \
        float(jnp.max(jnp.abs(sc_out - sc_ref)))

    # --- full FNO2d forward with the Pallas-backed spectral convs ---
    fwd = jax.jit(functools.partial(fno2d_forward, modes1=modes1, modes2=modes2,
                                    spectral_fn=spectral_conv2d_fast))
    out = jax.block_until_ready(fwd(params, x, grid_coords))

    ref = fno2d_forward(params, x, grid_coords, modes1=modes1, modes2=modes2,
                        spectral_fn=_spectral_conv_reference)
    assert out.shape == (B, H, W, num_channels), out.shape
    assert jnp.allclose(out, ref, atol=1e-3, rtol=1e-3), \
        float(jnp.max(jnp.abs(out - ref)))

    print("KERNEL_OK")
</pallas_src>

<mosaic_0001>
module attributes {stable_mosaic.version = 11 : i64} {
  func.func @_spectral_mix_kernel(%arg0: i32, %arg1: memref<72x8x128xf32, #tpu.memory_space<vmem>>, %arg2: memref<72x128x128xf32, #tpu.memory_space<vmem>>, %arg3: memref<72x8x128xf32, #tpu.memory_space<vmem>>) attributes {dimension_semantics = [#tpu.dimension_semantics<parallel>], iteration_bounds = array<i64: 1>, scalar_prefetch = 0 : i64, scratch_operands = 0 : i64, tpu.core_type = #tpu.core_type<tc>, window_params = [{transform_indices = @transform_0, window_bounds = array<i64: 72, 8, 128>}, {transform_indices = @transform_1, window_bounds = array<i64: 72, 128, 128>}, {transform_indices = @transform_2, window_bounds = array<i64: 72, 8, 128>}]} {
    %c0 = arith.constant 0 : index
    %c0_0 = arith.constant 0 : index
    %c0_1 = arith.constant 0 : index
    %0 = vector.load %arg1[%c0, %c0_0, %c0_1] : memref<72x8x128xf32, #tpu.memory_space<vmem>>, vector<72x8x128xf32>
    %c0_2 = arith.constant 0 : index
    %c0_3 = arith.constant 0 : index
    %c0_4 = arith.constant 0 : index
    %1 = vector.load %arg2[%c0_2, %c0_3, %c0_4] : memref<72x128x128xf32, #tpu.memory_space<vmem>>, vector<72x128x128xf32>
    %cst = arith.constant dense<0.000000e+00> : vector<72x8x128xf32>
    %2 = tpu.matmul %0, %1, %cst {dimension_numbers = #tpu.dot_dimension_numbers<[2], [1], [1], [2], [0, 0, 0, 1, 1, 2], [0], [0]>} : vector<72x8x128xf32>, vector<72x128x128xf32>, vector<72x8x128xf32> -> vector<72x8x128xf32>
    %c0_5 = arith.constant 0 : index
    %c0_6 = arith.constant 0 : index
    %c0_7 = arith.constant 0 : index
    %3 = vector.load %arg3[%c0_5, %c0_6, %c0_7] : memref<72x8x128xf32, #tpu.memory_space<vmem>>, vector<72x8x128xf32>
    tpu.vector_store %arg3[%c0_5, %c0_6, %c0_7], %2 {strides = array<i32>} : memref<72x8x128xf32, #tpu.memory_space<vmem>>, vector<72x8x128xf32>,
    return
  }
  func.func @transform_0(%arg0: i32) -> (i32, i32, i32) {
    %c0_i32 = arith.constant 0 : i32
    %c0_i32_0 = arith.constant 0 : i32
    %c0_i32_1 = arith.constant 0 : i32
    return %arg0, %c0_i32, %c0_i32_0 : i32, i32, i32
  }
  func.func @transform_1(%arg0: i32) -> (i32, i32, i32) {
    %c0_i32 = arith.constant 0 : i32
    %c0_i32_0 = arith.constant 0 : i32
    %c0_i32_1 = arith.constant 0 : i32
    return %arg0, %c0_i32, %c0_i32_0 : i32, i32, i32
  }
  func.func @transform_2(%arg0: i32) -> (i32, i32, i32) {
    %c0_i32 = arith.constant 0 : i32
    %c0_i32_0 = arith.constant 0 : i32
    %c0_i32_1 = arith.constant 0 : i32
    return %arg0, %c0_i32, %c0_i32_0 : i32, i32, i32
  }
}

</mosaic_0001>

<llo_original>
// kernel: custom-call.1
$region0: #{custom-call.1}
  %s0 = inlined_call_operand.hbm [shape: c64[8,8,6,6], index: 0, kind: input, shape index: {}]
  %s1 = inlined_call_operand.vmem [shape: f32[8,8,6,6], index: 1, kind: output, shape index: {}]
  %s2 = scalar_lea.hbm %s0, 288
  $region1: #{custom-call.1} parent=0
    #allocation0 [shape = 's32[1]{0}', space=sflag, size = 0x4, scoped, tag = 'scoped memory for custom-call.1']
    %3 = vsyncpa [#allocation0], 0
    %s5 = sshll.u32 %s2, 4
    %s6 = int_to_ptr.hbm [resolvable:$true] %s5
    %s7 = sshll.u32 %s1, 4
    %s8 = int_to_ptr.vmem [resolvable:$true] %s7
    %10 = dma.hbm_to_vmem [thread:$0]  %s6, 4608, %s8, [#allocation0]
    %12 = dma.done [#allocation0], 4608
    %13 = vsyncpa [#allocation0], 1

// kernel: custom-call
$region0: #{custom-call}
  %s0 = inlined_call_operand.hbm [shape: c64[8,8,6,6], index: 0, kind: input, shape index: {}]
  %s1 = inlined_call_operand.vmem [shape: f32[8,8,6,6], index: 1, kind: output, shape index: {}]
  $region1: #{custom-call} parent=0
    #allocation0 [shape = 's32[1]{0}', space=sflag, size = 0x4, scoped, tag = 'scoped memory for custom-call']
    %2 = vsyncpa [#allocation0], 0
    %s4 = sshll.u32 %s0, 4
    %s5 = int_to_ptr.hbm [resolvable:$true] %s4
    %s6 = sshll.u32 %s1, 4
    %s7 = int_to_ptr.vmem [resolvable:$true] %s6
    %9 = dma.hbm_to_vmem [thread:$0]  %s5, 4608, %s7, [#allocation0]
    %11 = dma.done [#allocation0], 4608
    %12 = vsyncpa [#allocation0], 1

// kernel: reverse.1
$region0: #{reverse.1}
  %s0 = inlined_call_operand.vmem [shape: f32[2,8,17,8], index: 0, kind: input, shape index: {}]
  %s1 = inlined_call_operand.vmem [shape: f32[2,8,17,8], index: 1, kind: output, shape index: {}]
  $region1: #{reverse.1} parent=0
    #allocation0 [shape = 'u8[65536]{0}', space=vmem, size = 0x10000, scoped, tag = 'operand span for operand 0']
    #allocation1 [shape = 'u8[65536]{0}', space=vmem, size = 0x10000, scoped, tag = 'operand span for operand 1']
    // Predicated region
    $region2: #{reverse.1} parent=1 // pred_check
      _
    $region3: #{reverse.1} parent=1 // pred_check_branch
      %3 = sbr.rel (0) target = $region5
    $region4: #{reverse.1} parent=1 // pred_region
      // Predicated region
      $region6: #{reverse.1} parent=4 // pred_check
        _
      $region7: #{reverse.1} parent=4 // pred_check_branch
        %5 = sbr.rel (0) target = $region9
      $region8: #{reverse.1} parent=4 // pred_region
        // Predicated region
        $region21: #{reverse.1} parent=8 // pred_check
          _
        $region22: #{reverse.1} parent=8 // pred_check_branch
          %51 = sbr.rel (0) target = $region24
        $region23: #{reverse.1} parent=8 // pred_region
          loop: start=0, step=1, limit=1
          $region25: #{reverse.1} parent=23 // loop_pre_header
            _
          $region26: #{reverse.1} parent=23 // loop_header
            %s53 = sphi 0, %s57
            %p54 = scmp.ge.s32.totalorder %s53, 1
            %s58 = sphi %s0, %s0
            %s59 = sphi [#allocation0], [#allocation0]
          $region27: #{reverse.1} parent=23 // loop_header_branch
            %56 = sbr.rel (%p54) target = $region31
          $region28: #{reverse.1} parent=23 // loop_body
            %v60 = vld [vmem:[%s58] sm:$0xff]
            %61 = vst [vmem:[%s59] sm:$0xff] %v60
            %v62 = vld [vmem:[%s58 + $0x8] sm:$0xff]
            %63 = vst [vmem:[%s59 + $0x8] sm:$0xff] %v62
            %v64 = vld [vmem:[%s58 + $0x10] sm:$0xff]
            %65 = vst [vmem:[%s59 + $0x10] sm:$0xff] %v64
            %v66 = vld [vmem:[%s58 + $0x18] sm:$0xff]
            %67 = vst [vmem:[%s59 + $0x18] sm:$0xff] %v66
            %v68 = vld [vmem:[%s58 + $0x20] sm:$0xff]
            %69 = vst [vmem:[%s59 + $0x20] sm:$0xff] %v68
            %v70 = vld [vmem:[%s58 + $0x28] sm:$0xff]
            %71 = vst [vmem:[%s59 + $0x28] sm:$0xff] %v70
            %v72 = vld [vmem:[%s58 + $0x30] sm:$0xff]
            %73 = vst [vmem:[%s59 + $0x30] sm:$0xff] %v72
            %v74 = vld [vmem:[%s58 + $0x38] sm:$0xff]
            %75 = vst [vmem:[%s59 + $0x38] sm:$0xff] %v74
            %v76 = vld [vmem:[%s58 + $0x40] sm:$0xff]
            %77 = vst [vmem:[%s59 + $0x40] sm:$0xff] %v76
            %v78 = vld [vmem:[%s58 + $0x48] sm:$0xff]
            %79 = vst [vmem:[%s59 + $0x48] sm:$0xff] %v78
            %v80 = vld [vmem:[%s58 + $0x50] sm:$0xff]
            %81 = vst [vmem:[%s59 + $0x50] sm:$0xff] %v80
            %v82 = vld [vmem:[%s58 + $0x58] sm:$0xff]
            %83 = vst [vmem:[%s59 + $0x58] sm:$0xff] %v82
            %v84 = vld [vmem:[%s58 + $0x60] sm:$0xff]
            %85 = vst [vmem:[%s59 + $0x60] sm:$0xff] %v84
            %v86 = vld [vmem:[%s58 + $0x68] sm:$0xff]
            %87 = vst [vmem:[%s59 + $0x68] sm:$0xff] %v86
            %v88 = vld [vmem:[%s58 + $0x70] sm:$0xff]
            %89 = vst [vmem:[%s59 + $0x70] sm:$0xff] %v88
            %v90 = vld [vmem:[%s58 + $0x78] sm:$0xff]
            %91 = vst [vmem:[%s59 + $0x78] sm:$0xff] %v90
          $region29: #{reverse.1} parent=23 // loop_footer
            %s57 = sadd.s32 1, %s53
          $region30: #{reverse.1} parent=23 // loop_footer_branch
            %52 = sbr.rel target = $region26
          $region31: #{reverse.1} parent=23 // loop_exit
            _
        $region24: #{reverse.1} parent=8 // pred_fallthru
          _
        // Predicated region
        $region32: #{reverse.1} parent=8 // pred_check
          _
        $region33: #{reverse.1} parent=8 // pred_check_branch
          %93 = sbr.rel target = $region35
        $region34: #{reverse.1} parent=8 // pred_region
          _
        $region35: #{reverse.1} parent=8 // pred_fallthru
          _
      $region9: #{reverse.1} parent=4 // pred_fallthru
        _
      // Predicated region
      $region10: #{reverse.1} parent=4 // pred_check
        _
      $region11: #{reverse.1} parent=4 // pred_check_branch
        %7 = sbr.rel target = $region13
      $region12: #{reverse.1} parent=4 // pred_region
        %s9 = ssub.s32 256, 1
        loop: start=0, step=1, limit=1
        $region14: #{reverse.1} parent=12 // loop_pre_header
          _
        $region15: #{reverse.1} parent=12 // loop_header
          %s11 = sphi 0, %s15
          %p12 = scmp.ge.s32.totalorder %s11, 1
          %s16 = sphi %s0, %s0
          %s17 = sphi [#allocation0], [#allocation0]
        $region16: #{reverse.1} parent=12 // loop_header_branch
          %14 = sbr.rel (%p12) target = $region20
        $region17: #{reverse.1} parent=12 // loop_body
          %v18 = vld [vmem:[%s16] sm:%s9]
          %19 = vst [vmem:[%s17] sm:%s9] %v18
          %v20 = vld [vmem:[%s16 + $0x8] sm:%s9]
          %21 = vst [vmem:[%s17 + $0x8] sm:%s9] %v20
          %v22 = vld [vmem:[%s16 + $0x10] sm:%s9]
          %23 = vst [vmem:[%s17 + $0x10] sm:%s9] %v22
          %v24 = vld [vmem:[%s16 + $0x18] sm:%s9]
          %25 = vst [vmem:[%s17 + $0x18] sm:%s9] %v24
          %v26 = vld [vmem:[%s16 + $0x20] sm:%s9]
          %27 = vst [vmem:[%s17 + $0x20] sm:%s9] %v26
          %v28 = vld [vmem:[%s16 + $0x28] sm:%s9]
          %29 = vst [vmem:[%s17 + $0x28] sm:%s9] %v28
          %v30 = vld [vmem:[%s16 + $0x30] sm:%s9]
          %31 = vst [vmem:[%s17 + $0x30] sm:%s9] %v30
          %v32 = vld [vmem:[%s16 + $0x38] sm:%s9]
          %33 = vst [vmem:[%s17 + $0x38] sm:%s9] %v32
          %v34 = vld [vmem:[%s16 + $0x40] sm:%s9]
          %35 = vst [vmem:[%s17 + $0x40] sm:%s9] %v34
          %v36 = vld [vmem:[%s16 + $0x48] sm:%s9]
          %37 = vst [vmem:[%s17 + $0x48] sm:%s9] %v36
          %v38 = vld [vmem:[%s16 + $0x50] sm:%s9]
          %39 = vst [vmem:[%s17 + $0x50] sm:%s9] %v38
          %v40 = vld [vmem:[%s16 + $0x58] sm:%s9]
          %41 = vst [vmem:[%s17 + $0x58] sm:%s9] %v40
          %v42 = vld [vmem:[%s16 + $0x60] sm:%s9]
          %43 = vst [vmem:[%s17 + $0x60] sm:%s9] %v42
          %v44 = vld [vmem:[%s16 + $0x68] sm:%s9]
          %45 = vst [vmem:[%s17 + $0x68] sm:%s9] %v44
          %v46 = vld [vmem:[%s16 + $0x70] sm:%s9]
          %47 = vst [vmem:[%s17 + $0x70] sm:%s9] %v46
          %v48 = vld [vmem:[%s16 + $0x78] sm:%s9]
          %49 = vst [vmem:[%s17 + $0x78] sm:%s9] %v48
        $region18: #{reverse.1} parent=12 // loop_footer
          %s15 = sadd.s32 1, %s11
        $region19: #{reverse.1} parent=12 // loop_footer_branch
          %10 = sbr.rel target = $region15
        $region20: #{reverse.1} parent=12 // loop_exit
          _
      $region13: #{reverse.1} parent=4 // pred_fallthru
        _
    $region5: #{reverse.1} parent=1 // pred_fallthru
      _
    %94 = vnop
    %s95 = scalar_lea.vmem [#allocation0], 7
    %v96 = vld [vmem:[%s95] ss:$-1 sm:$0xff]
    %97 = vst [vmem:[#allocation1] sm:$0xff] %v96
    %s98 = scalar_lea.vmem [#allocation1], 8
    %s99 = scalar_lea.vmem [#allocation0], 8
    %s100 = scalar_lea.vmem %s99, 7 [#allocation0]
    %v101 = vld [vmem:[%s100] ss:$-1 sm:$0xff]
    %102 = vst [vmem:[%s98] sm:$0xff] %v101
    %s103 = scalar_lea.vmem [#allocation1], 16
    %s104 = scalar_lea.vmem [#allocation0], 16
    %s105 = scalar_lea.vmem %s104, 7 [#allocation0]
    %v106 = vld [vmem:[%s105] ss:$-1 sm:$0xff]
    %107 = vst [vmem:[%s103] sm:$0xff] %v106
    %s108 = scalar_lea.vmem [#allocation1], 24
    %s109 = scalar_lea.vmem [#allocation0], 24
    %s110 = scalar_lea.vmem %s109, 7 [#allocation0]
    %v111 = vld [vmem:[%s110] ss:$-1 sm:$0xff]
    %112 = vst [vmem:[%s108] sm:$0xff] %v111
    %s113 = scalar_lea.vmem [#allocation1], 32
    %s114 = scalar_lea.vmem [#allocation0], 32
    %s115 = scalar_lea.vmem %s114, 7 [#allocation0]
    %v116 = vld [vmem:[%s115] ss:$-1 sm:$0xff]
    %117 = vst [vmem:[%s113] sm:$0xff] %v116
    %s118 = scalar_lea.vmem [#allocation1], 40
    %s119 = scalar_lea.vmem [#allocation0], 40
    %s120 = scalar_lea.vmem %s119, 7 [#allocation0]
    %v121 = vld [vmem:[%s120] ss:$-1 sm:$0xff]
    %122 = vst [vmem:[%s118] sm:$0xff] %v121
    %s123 = scalar_lea.vmem [#allocation1], 48
    %s124 = scalar_lea.vmem [#allocation0], 48
    %s125 = scalar_lea.vmem %s124, 7 [#allocation0]
    %v126 = vld [vmem:[%s125] ss:$-1 sm:$0xff]
    %127 = vst [vmem:[%s123] sm:$0xff] %v126
    %s128 = scalar_lea.vmem [#allocation1], 56
    %s129 = scalar_lea.vmem [#allocation0], 56
    %s130 = scalar_lea.vmem %s129, 7 [#allocation0]
    %v131 = vld [vmem:[%s130] ss:$-1 sm:$0xff]
    %132 = vst [vmem:[%s128] sm:$0xff] %v131
    %s133 = scalar_lea.vmem [#allocation1], 64
    %s134 = scalar_lea.vmem [#allocation0], 64
    %s135 = scalar_lea.vmem %s134, 7 [#allocation0]
    %v136 = vld [vmem:[%s135] ss:$-1 sm:$0xff]
    %137 = vst [vmem:[%s133] sm:$0xff] %v136
    %s138 = scalar_lea.vmem [#allocation1], 72
    %s139 = scalar_lea.vmem [#allocation0], 72
    %s140 = scalar_lea.vmem %s139, 7 [#allocation0]
    %v141 = vld [vmem:[%s140] ss:$-1 sm:$0xff]
    %142 = vst [vmem:[%s138] sm:$0xff] %v141
    %s143 = scalar_lea.vmem [#allocation1], 80
    %s144 = scalar_lea.vmem [#allocation0], 80
    %s145 = scalar_lea.vmem %s144, 7 [#allocation0]
    %v146 = vld [vmem:[%s145] ss:$-1 sm:$0xff]
    %147 = vst [vmem:[%s143] sm:$0xff] %v146
    %s148 = scalar_lea.vmem [#allocation1], 88
    %s149 = scalar_lea.vmem [#allocation0], 88
    %s150 = scalar_lea.vmem %s149, 7 [#allocation0]
    %v151 = vld [vmem:[%s150] ss:$-1 sm:$0xff]
    %152 = vst [vmem:[%s148] sm:$0xff] %v151
    %s153 = scalar_lea.vmem [#allocation1], 96
    %s154 = scalar_lea.vmem [#allocation0], 96
    %s155 = scalar_lea.vmem %s154, 7 [#allocation0]
    %v156 = vld [vmem:[%s155] ss:$-1 sm:$0xff]
    %157 = vst [vmem:[%s153] sm:$0xff] %v156
    %s158 = scalar_lea.vmem [#allocation1], 104
    %s159 = scalar_lea.vmem [#allocation0], 104
    %s160 = scalar_lea.vmem %s159, 7 [#allocation0]
    %v161 = vld [vmem:[%s160] ss:$-1 sm:$0xff]
    %162 = vst [vmem:[%s158] sm:$0xff] %v161
    %s163 = scalar_lea.vmem [#allocation1], 112
    %s164 = scalar_lea.vmem [#allocation0], 112
    %s165 = scalar_lea.vmem %s164, 7 [#allocation0]
    %v166 = vld [vmem:[%s165] ss:$-1 sm:$0xff]
    %167 = vst [vmem:[%s163] sm:$0xff] %v166
    %s168 = scalar_lea.vmem [#allocation1], 120
    %s169 = scalar_lea.vmem [#allocation0], 120
    %s170 = scalar_lea.vmem %s169, 7 [#allocation0]
    %v171 = vld [vmem:[%s170] ss:$-1 sm:$0xff]
    %172 = vst [vmem:[%s168] sm:$0xff] %v171
    // Predicated region
    $region36: #{reverse.1} parent=1 // pred_check
      _
    $region37: #{reverse.1} parent=1 // pred_check_branch
      %174 = sbr.rel (0) target = $region39
    $region38: #{reverse.1} parent=1 // pred_region
      // Predicated region
      $region40: #{reverse.1} parent=38 // pred_check
        _
      $region41: #{reverse.1} parent=38 // pred_check_branch
        %176 = sbr.rel (0) target = $region43
      $region42: #{reverse.1} parent=38 // pred_region
        // Predicated region
        $region55: #{reverse.1} parent=42 // pred_check
          _
        $region56: #{reverse.1} parent=42 // pred_check_branch
          %222 = sbr.rel (0) target = $region58
        $region57: #{reverse.1} parent=42 // pred_region
          loop: start=0, step=1, limit=1
          $region59: #{reverse.1} parent=57 // loop_pre_header
            _
          $region60: #{reverse.1} parent=57 // loop_header
            %s224 = sphi 0, %s228
            %p225 = scmp.ge.s32.totalorder %s224, 1
            %s229 = sphi [#allocation1], [#allocation1]
            %s230 = sphi %s1, %s1
          $region61: #{reverse.1} parent=57 // loop_header_branch
            %227 = sbr.rel (%p225) target = $region65
          $region62: #{reverse.1} parent=57 // loop_body
            %v231 = vld [vmem:[%s229] sm:$0xff]
            %232 = vst [vmem:[%s230] sm:$0xff] %v231
            %v233 = vld [vmem:[%s229 + $0x8] sm:$0xff]
            %234 = vst [vmem:[%s230 + $0x8] sm:$0xff] %v233
            %v235 = vld [vmem:[%s229 + $0x10] sm:$0xff]
            %236 = vst [vmem:[%s230 + $0x10] sm:$0xff] %v235
            %v237 = vld [vmem:[%s229 + $0x18] sm:$0xff]
            %238 = vst [vmem:[%s230 + $0x18] sm:$0xff] %v237
            %v239 = vld [vmem:[%s229 + $0x20] sm:$0xff]
            %240 = vst [vmem:[%s230 + $0x20] sm:$0xff] %v239
            %v241 = vld [vmem:[%s229 + $0x28] sm:$0xff]
            %242 = vst [vmem:[%s230 + $0x28] sm:$0xff] %v241
            %v243 = vld [vmem:[%s229 + $0x30] sm:$0xff]
            %244 = vst [vmem:[%s230 + $0x30] sm:$0xff] %v243
            %v245 = vld [vmem:[%s229 + $0x38] sm:$0xff]
            %246 = vst [vmem:[%s230 + $0x38] sm:$0xff] %v245
            %v247 = vld [vmem:[%s229 + $0x40] sm:$0xff]
            %248 = vst [vmem:[%s230 + $0x40] sm:$0xff] %v247
            %v249 = vld [vmem:[%s229 + $0x48] sm:$0xff]
            %250 = vst [vmem:[%s230 + $0x48] sm:$0xff] %v249
            %v251 = vld [vmem:[%s229 + $0x50] sm:$0xff]
            %252 = vst [vmem:[%s230 + $0x50] sm:$0xff] %v251
            %v253 = vld [vmem:[%s229 + $0x58] sm:$0xff]
            %254 = vst [vmem:[%s230 + $0x58] sm:$0xff] %v253
            %v255 = vld [vmem:[%s229 + $0x60] sm:$0xff]
            %256 = vst [vmem:[%s230 + $0x60] sm:$0xff] %v255
            %v257 = vld [vmem:[%s229 + $0x68] sm:$0xff]
            %258 = vst [vmem:[%s230 + $0x68] sm:$0xff] %v257
            %v259 = vld [vmem:[%s229 + $0x70] sm:$0xff]
            %260 = vst [vmem:[%s230 + $0x70] sm:$0xff] %v259
            %v261 = vld [vmem:[%s229 + $0x78] sm:$0xff]
            %262 = vst [vmem:[%s230 + $0x78] sm:$0xff] %v261
          $region63: #{reverse.1} parent=57 // loop_footer
            %s228 = sadd.s32 1, %s224
          $region64: #{reverse.1} parent=57 // loop_footer_branch
            %223 = sbr.rel target = $region60
          $region65: #{reverse.1} parent=57 // loop_exit
            _
        $region58: #{reverse.1} parent=42 // pred_fallthru
          _
        // Predicated region
        $region66: #{reverse.1} parent=42 // pred_check
          _
        $region67: #{reverse.1} parent=42 // pred_check_branch
          %264 = sbr.rel target = $region69
        $region68: #{reverse.1} parent=42 // pred_region
          _
        $region69: #{reverse.1} parent=42 // pred_fallthru
          _
      $region43: #{reverse.1} parent=38 // pred_fallthru
        _
      // Predicated region
      $region44: #{reverse.1} parent=38 // pred_check
        _
      $region45: #{reverse.1} parent=38 // pred_check_branch
        %178 = sbr.rel target = $region47
      $region46: #{reverse.1} parent=38 // pred_region
        %s180 = ssub.s32 256, 1
        loop: start=0, step=1, limit=1
        $region48: #{reverse.1} parent=46 // loop_pre_header
          _
        $region49: #{reverse.1} parent=46 // loop_header
          %s182 = sphi 0, %s186
          %p183 = scmp.ge.s32.totalorder %s182, 1
          %s187 = sphi [#allocation1], [#allocation1]
          %s188 = sphi %s1, %s1
        $region50: #{reverse.1} parent=46 // loop_header_branch
          %185 = sbr.rel (%p183) target = $region54
        $region51: #{reverse.1} parent=46 // loop_body
          %v189 = vld [vmem:[%s187] sm:%s180]
          %190 = vst [vmem:[%s188] sm:%s180] %v189
          %v191 = vld [vmem:[%s187 + $0x8] sm:%s180]
          %192 = vst [vmem:[%s188 + $0x8] sm:%s180] %v191
          %v193 = vld [vmem:[%s187 + $0x10] sm:%s180]
          %194 = vst [vmem:[%s188 + $0x10] sm:%s180] %v193
          %v195 = vld [vmem:[%s187 + $0x18] sm:%s180]
          %196 = vst [vmem:[%s188 + $0x18] sm:%s180] %v195
          %v197 = vld [vmem:[%s187 + $0x20] sm:%s180]
          %198 = vst [vmem:[%s188 + $0x20] sm:%s180] %v197
          %v199 = vld [vmem:[%s187 + $0x28] sm:%s180]
          %200 = vst [vmem:[%s188 + $0x28] sm:%s180] %v199
          %v201 = vld [vmem:[%s187 + $0x30] sm:%s180]
          %202 = vst [vmem:[%s188 + $0x30] sm:%s180] %v201
          %v203 = vld [vmem:[%s187 + $0x38] sm:%s180]
          %204 = vst [vmem:[%s188 + $0x38] sm:%s180] %v203
          %v205 = vld [vmem:[%s187 + $0x40] sm:%s180]
          %206 = vst [vmem:[%s188 + $0x40] sm:%s180] %v205
          %v207 = vld [vmem:[%s187 + $0x48] sm:%s180]
          %208 = vst [vmem:[%s188 + $0x48] sm:%s180] %v207
          %v209 = vld [vmem:[%s187 + $0x50] sm:%s180]
          %210 = vst [vmem:[%s188 + $0x50] sm:%s180] %v209
          %v211 = vld [vmem:[%s187 + $0x58] sm:%s180]
          %212 = vst [vmem:[%s188 + $0x58] sm:%s180] %v211
          %v213 = vld [vmem:[%s187 + $0x60] sm:%s180]
          %214 = vst [vmem:[%s188 + $0x60] sm:%s180] %v213
          %v215 = vld [vmem:[%s187 + $0x68] sm:%s180]
          %216 = vst [vmem:[%s188 + $0x68] sm:%s180] %v215
          %v217 = vld [vmem:[%s187 + $0x70] sm:%s180]
          %218 = vst [vmem:[%s188 + $0x70] sm:%s180] %v217
          %v219 = vld [vmem:[%s187 + $0x78] sm:%s180]
          %220 = vst [vmem:[%s188 + $0x78] sm:%s180] %v219
        $region52: #{reverse.1} parent=46 // loop_footer
          %s186 = sadd.s32 1, %s182
        $region53: #{reverse.1} parent=46 // loop_footer_branch
          %181 = sbr.rel target = $region49
        $region54: #{reverse.1} parent=46 // loop_exit
          _
      $region47: #{reverse.1} parent=38 // pred_fallthru
        _
    $region39: #{reverse.1} parent=1 // pred_fallthru
      _
    %265 = vnop

// kernel: spectral_conv2d_fast.1
$region0: #{spectral_conv2d_fast.1}
  #allocation0 [shape = 'u32[]', space=smem, size = 0x4, offset = 0x4, fixed_abs, tag = 'smem constant byte address 0x4 - core index']
  #allocation1 [shape = 'u32[72,128]{1,0:T(1,128)}', space=vmem, size = 0x9000, scoped, tag = 'internal scratch']
  %s0 = inlined_call_operand.vmem [shape: f32[72,8,128], index: 0, kind: input, shape index: {}]
  %s1 = inlined_call_operand.vmem [shape: f32[72,128,128], index: 1, kind: input, shape index: {}]
  %s2 = inlined_call_operand.vmem [shape: f32[72,8,128], index: 2, kind: output, shape index: {}]
  %s3 = sld [smem:[#allocation0]]
  $region18: #{spectral_conv2d_fast.1} parent=0
    _
  %s5 = ssub.s32 1, %s3
  %s6 = scalar_select 0, %s5, %s3
  // Predicated region
  $region2: #{spectral_conv2d_fast.1} parent=0 // pred_check
    _
  $region3: #{spectral_conv2d_fast.1} parent=0 // pred_check_branch
    %8 = sbr.rel (0) target = $region5
  $region4: #{spectral_conv2d_fast.1} parent=0 // pred_region
    _
  $region5: #{spectral_conv2d_fast.1} parent=0 // pred_fallthru
    _
  // Predicated region
  $region6: #{spectral_conv2d_fast.1} parent=0 // pred_check
    _
  $region7: #{spectral_conv2d_fast.1} parent=0 // pred_check_branch
    %10 = sbr.rel (0) target = $region9
  $region8: #{spectral_conv2d_fast.1} parent=0 // pred_region
    _
  $region9: #{spectral_conv2d_fast.1} parent=0 // pred_fallthru
    _
  %v11 = vld [vmem:[%s0] sm:$0xff]
  %v12 = vld [vmem:[%s0 + $0x8] sm:$0xff]
  %v13 = vld [vmem:[%s0 + $0x10] sm:$0xff]
  %v14 = vld [vmem:[%s0 + $0x18] sm:$0xff]
  %v15 = vld [vmem:[%s0 + $0x20] sm:$0xff]
  %v16 = vld [vmem:[%s0 + $0x28] sm:$0xff]
  %v17 = vld [vmem:[%s0 + $0x30] sm:$0xff]
  %v18 = vld [vmem:[%s0 + $0x38] sm:$0xff]
  %v19 = vld [vmem:[%s0 + $0x40] sm:$0xff]
  %v20 = vld [vmem:[%s0 + $0x48] sm:$0xff]
  %v21 = vld [vmem:[%s0 + $0x50] sm:$0xff]
  %v22 = vld [vmem:[%s0 + $0x58] sm:$0xff]
  %v23 = vld [vmem:[%s0 + $0x60] sm:$0xff]
  %v24 = vld [vmem:[%s0 + $0x68] sm:$0xff]
  %v25 = vld [vmem:[%s0 + $0x70] sm:$0xff]
  %v26 = vld [vmem:[%s0 + $0x78] sm:$0xff]
  %v27 = vld [vmem:[%s0 + $0x80] sm:$0xff]
  %v28 = vld [vmem:[%s0 + $0x88] sm:$0xff]
  %v29 = vld [vmem:[%s0 + $0x90] sm:$0xff]
  %v30 = vld [vmem:[%s0 + $0x98] sm:$0xff]
  %v31 = vld [vmem:[%s0 + $0xa0] sm:$0xff]
  %v32 = vld [vmem:[%s0 + $0xa8] sm:$0xff]
  %v33 = vld [vmem:[%s0 + $0xb0] sm:$0xff]
  %v34 = vld [vmem:[%s0 + $0xb8] sm:$0xff]
  %v35 = vld [vmem:[%s0 + $0xc0] sm:$0xff]
  %v36 = vld [vmem:[%s0 + $0xc8] sm:$0xff]
  %v37 = vld [vmem:[%s0 + $0xd0] sm:$0xff]
  %v38 = vld [vmem:[%s0 + $0xd8] sm:$0xff]
  %v39 = vld [vmem:[%s0 + $0xe0] sm:$0xff]
  %v40 = vld [vmem:[%s0 + $0xe8] sm:$0xff]
  %v41 = vld [vmem:[%s0 + $0xf0] sm:$0xff]
  %v42 = vld [vmem:[%s0 + $0xf8] sm:$0xff]
  %v43 = vld [vmem:[%s0 + $0x100] sm:$0xff]
  %v44 = vld [vmem:[%s0 + $0x108] sm:$0xff]
  %v45 = vld [vmem:[%s0 + $0x110] sm:$0xff]
  %v46 = vld [vmem:[%s0 + $0x118] sm:$0xff]
  %v47 = vld [vmem:[%s0 + $0x120] sm:$0xff]
  %v48 = vld [vmem:[%s0 + $0x128] sm:$0xff]
  %v49 = vld [vmem:[%s0 + $0x130] sm:$0xff]
  %v50 = vld [vmem:[%s0 + $0x138] sm:$0xff]
  %v51 = vld [vmem:[%s0 + $0x140] sm:$0xff]
  %v52 = vld [vmem:[%s0 + $0x148] sm:$0xff]
  %v53 = vld [vmem:[%s0 + $0x150] sm:$0xff]
  %v54 = vld [vmem:[%s0 + $0x158] sm:$0xff]
  %v55 = vld [vmem:[%s0 + $0x160] sm:$0xff]
  %v56 = vld [vmem:[%s0 + $0x168] sm:$0xff]
  %v57 = vld [vmem:[%s0 + $0x170] sm:$0xff]
  %v58 = vld [vmem:[%s0 + $0x178] sm:$0xff]
  %v59 = vld [vmem:[%s0 + $0x180] sm:$0xff]
  %v60 = vld [vmem:[%s0 + $0x188] sm:$0xff]
  %v61 = vld [vmem:[%s0 + $0x190] sm:$0xff]
  %v62 = vld [vmem:[%s0 + $0x198] sm:$0xff]
  %v63 = vld [vmem:[%s0 + $0x1a0] sm:$0xff]
  %v64 = vld [vmem:[%s0 + $0x1a8] sm:$0xff]
  %v65 = vld [vmem:[%s0 + $0x1b0] sm:$0xff]
  %v66 = vld [vmem:[%s0 + $0x1b8] sm:$0xff]
  %v67 = vld [vmem:[%s0 + $0x1c0] sm:$0xff]
  %v68 = vld [vmem:[%s0 + $0x1c8] sm:$0xff]
  %v69 = vld [vmem:[%s0 + $0x1d0] sm:$0xff]
  %v70 = vld [vmem:[%s0 + $0x1d8] sm:$0xff]
  %v71 = vld [vmem:[%s0 + $0x1e0] sm:$0xff]
  %v72 = vld [vmem:[%s0 + $0x1e8] sm:$0xff]
  %v73 = vld [vmem:[%s0 + $0x1f0] sm:$0xff]
  %v74 = vld [vmem:[%s0 + $0x1f8] sm:$0xff]
  %v75 = vld [vmem:[%s0 + $0x200] sm:$0xff]
  %v76 = vld [vmem:[%s0 + $0x208] sm:$0xff]
  %v77 = vld [vmem:[%s0 + $0x210] sm:$0xff]
  %v78 = vld [vmem:[%s0 + $0x218] sm:$0xff]
  %v79 = vld [vmem:[%s0 + $0x220] sm:$0xff]
  %v80 = vld [vmem:[%s0 + $0x228] sm:$0xff]
  %v81 = vld [vmem:[%s0 + $0x230] sm:$0xff]
  %v82 = vld [vmem:[%s0 + $0x238] sm:$0xff]
  %v83 = vld [vmem:[%s1] sm:$0xff]
  %v84 = vld [vmem:[%s1 + $0x8] sm:$0xff]
  %v85 = vld [vmem:[%s1 + $0x10] sm:$0xff]
  %v86 = vld [vmem:[%s1 + $0x18] sm:$0xff]
  %v87 = vld [vmem:[%s1 + $0x20] sm:$0xff]
  %v88 = vld [vmem:[%s1 + $0x28] sm:$0xff]
  %v89 = vld [vmem:[%s1 + $0x30] sm:$0xff]
  %v90 = vld [vmem:[%s1 + $0x38] sm:$0xff]
  %v91 = vld [vmem:[%s1 + $0x40] sm:$0xff]
  %v92 = vld [vmem:[%s1 + $0x48] sm:$0xff]
  %v93 = vld [vmem:[%s1 + $0x50] sm:$0xff]
  %v94 = vld [vmem:[%s1 + $0x58] sm:$0xff]
  %v95 = vld [vmem:[%s1 + $0x60] sm:$0xff]
  %v96 = vld [vmem:[%s1 + $0x68] sm:$0xff]
  %v97 = vld [vmem:[%s1 + $0x70] sm:$0xff]
  %v98 = vld [vmem:[%s1 + $0x78] sm:$0xff]
  %v99 = vld [vmem:[%s1 + $0x80] sm:$0xff]
  %v100 = vld [vmem:[%s1 + $0x88] sm:$0xff]
  %v101 = vld [vmem:[%s1 + $0x90] sm:$0xff]
  %v102 = vld [vmem:[%s1 + $0x98] sm:$0xff]
  %v103 = vld [vmem:[%s1 + $0xa0] sm:$0xff]
  %v104 = vld [vmem:[%s1 + $0xa8] sm:$0xff]
  %v105 = vld [vmem:[%s1 + $0xb0] sm:$0xff]
  %v106 = vld [vmem:[%s1 + $0xb8] sm:$0xff]
  %v107 = vld [vmem:[%s1 + $0xc0] sm:$0xff]
  %v108 = vld [vmem:[%s1 + $0xc8] sm:$0xff]
  %v109 = vld [vmem:[%s1 + $0xd0] sm:$0xff]
  %v110 = vld [vmem:[%s1 + $0xd8] sm:$0xff]
  %v111 = vld [vmem:[%s1 + $0xe0] sm:$0xff]
  %v112 = vld [vmem:[%s1 + $0xe8] sm:$0xff]
  %v113 = vld [vmem:[%s1 + $0xf0] sm:$0xff]
  %v114 = vld [vmem:[%s1 + $0xf8] sm:$0xff]
  %v115 = vld [vmem:[%s1 + $0x100] sm:$0xff]
  %v116 = vld [vmem:[%s1 + $0x108] sm:$0xff]
  %v117 = vld [vmem:[%s1 + $0x110] sm:$0xff]
  %v118 = vld [vmem:[%s1 + $0x118] sm:$0xff]
  %v119 = vld [vmem:[%s1 + $0x120] sm:$0xff]
  %v120 = vld [vmem:[%s1 + $0x128] sm:$0xff]
  %v121 = vld [vmem:[%s1 + $0x130] sm:$0xff]
  %v122 = vld [vmem:[%s1 + $0x138] sm:$0xff]
  %v123 = vld [vmem:[%s1 + $0x140] sm:$0xff]
  %v124 = vld [vmem:[%s1 + $0x148] sm:$0xff]
  %v125 = vld [vmem:[%s1 + $0x150] sm:$0xff]
  %v126 = vld [vmem:[%s1 + $0x158] sm:$0xff]
  %v127 = vld [vmem:[%s1 + $0x160] sm:$0xff]
  %v128 = vld [vmem:[%s1 + $0x168] sm:$0xff]
  %v129 = vld [vmem:[%s1 + $0x170] sm:$0xff]
  %v130 = vld [vmem:[%s1 + $0x178] sm:$0xff]
  %v131 = vld [vmem:[%s1 + $0x180] sm:$0xff]
  %v132 = vld [vmem:[%s1 + $0x188] sm:$0xff]
  %v133 = vld [vmem:[%s1 + $0x190] sm:$0xff]
  %v134 = vld [vmem:[%s1 + $0x198] sm:$0xff]
  %v135 = vld [vmem:[%s1 + $0x1a0] sm:$0xff]
  %v136 = vld [vmem:[%s1 + $0x1a8] sm:$0xff]
  %v137 = vld [vmem:[%s1 + $0x1b0] sm:$0xff]
  %v138 = vld [vmem:[%s1 + $0x1b8] sm:$0xff]
  %v139 = vld [vmem:[%s1 + $0x1c0] sm:$0xff]
  %v140 = vld [vmem:[%s1 + $0x1c8] sm:$0xff]
  %v141 = vld [vmem:[%s1 + $0x1d0] sm:$0xff]
  %v142 = vld [vmem:[%s1 + $0x1d8] sm:$0xff]
  %v143 = vld [vmem:[%s1 + $0x1e0] sm:$0xff]
  %v144 = vld [vmem:[%s1 + $0x1e8] sm:$0xff]
  %v145 = vld [vmem:[%s1 + $0x1f0] sm:$0xff]
  %v146 = vld [vmem:[%s1 + $0x1f8] sm:$0xff]
  %v147 = vld [vmem:[%s1 + $0x200] sm:$0xff]
  %v148 = vld [vmem:[%s1 + $0x208] sm:$0xff]
  %v149 = vld [vmem:[%s1 + $0x210] sm:$0xff]
  %v150 = vld [vmem:[%s1 + $0x218] sm:$0xff]
  %v151 = vld [vmem:[%s1 + $0x220] sm:$0xff]
  %v152 = vld [vmem:[%s1 + $0x228] sm:$0xff]
  %v153 = vld [vmem:[%s1 + $0x230] sm:$0xff]
  %v154 = vld [vmem:[%s1 + $0x238] sm:$0xff]
  %v155 = vld [vmem:[%s1 + $0x240] sm:$0xff]
  %v156 = vld [vmem:[%s1 + $0x248] sm:$0xff]
  %v157 = vld [vmem:[%s1 + $0x250] sm:$0xff]
  %v158 = vld [vmem:[%s1 + $0x258] sm:$0xff]
  %v159 = vld [vmem:[%s1 + $0x260] sm:$0xff]
  %v160 = vld [vmem:[%s1 + $0x268] sm:$0xff]
  %v161 = vld [vmem:[%s1 + $0x270] sm:$0xff]
  %v162 = vld [vmem:[%s1 + $0x278] sm:$0xff]
  %v163 = vld [vmem:[%s1 + $0x280] sm:$0xff]
  %v164 = vld [vmem:[%s1 + $0x288] sm:$0xff]
  %v165 = vld [vmem:[%s1 + $0x290] sm:$0xff]
  %v166 = vld [vmem:[%s1 + $0x298] sm:$0xff]
  %v167 = vld [vmem:[%s1 + $0x2a0] sm:$0xff]
  %v168 = vld [vmem:[%s1 + $0x2a8] sm:$0xff]
  %v169 = vld [vmem:[%s1 + $0x2b0] sm:$0xff]
  %v170 = vld [vmem:[%s1 + $0x2b8] sm:$0xff]
  %v171 = vld [vmem:[%s1 + $0x2c0] sm:$0xff]
  %v172 = vld [vmem:[%s1 + $0x2c8] sm:$0xff]
  %v173 = vld [vmem:[%s1 + $0x2d0] sm:$0xff]
  %v174 = vld [vmem:[%s1 + $0x2d8] sm:$0xff]
  %v175 = vld [vmem:[%s1 + $0x2e0] sm:$0xff]
  %v176 = vld [vmem:[%s1 + $0x2e8] sm:$0xff]
  %v177 = vld [vmem:[%s1 + $0x2f0] sm:$0xff]
  %v178 = vld [vmem:[%s1 + $0x2f8] sm:$0xff]
  %v179 = vld [vmem:[%s1 + $0x300] sm:$0xff]
  %v180 = vld [vmem:[%s1 + $0x308] sm:$0xff]
  %v181 = vld [vmem:[%s1 + $0x310] sm:$0xff]
  %v182 = vld [vmem:[%s1 + $0x318] sm:$0xff]
  %v183 = vld [vmem:[%s1 + $0x320] sm:$0xff]
  %v184 = vld [vmem:[%s1 + $0x328] sm:$0xff]
  %v185 = vld [vmem:[%s1 + $0x330] sm:$0xff]
  %v186 = vld [vmem:[%s1 + $0x338] sm:$0xff]
  %v187 = vld [vmem:[%s1 + $0x340] sm:$0xff]
  %v188 = vld [vmem:[%s1 + $0x348] sm:$0xff]
  %v189 = vld [vmem:[%s1 + $0x350] sm:$0xff]
  %v190 = vld [vmem:[%s1 + $0x358] sm:$0xff]
  %v191 = vld [vmem:[%s1 + $0x360] sm:$0xff]
  %v192 = vld [vmem:[%s1 + $0x368] sm:$0xff]
  %v193 = vld [vmem:[%s1 + $0x370] sm:$0xff]
  %v194 = vld [vmem:[%s1 + $0x378] sm:$0xff]
  %v195 = vld [vmem:[%s1 + $0x380] sm:$0xff]
  %v196 = vld [vmem:[%s1 + $0x388] sm:$0xff]
  %v197 = vld [vmem:[%s1 + $0x390] sm:$0xff]
  %v198 = vld [vmem:[%s1 + $0x398] sm:$0xff]
  %v199 = vld [vmem:[%s1 + $0x3a0] sm:$0xff]
  %v200 = vld [vmem:[%s1 + $0x3a8] sm:$0xff]
  %v201 = vld [vmem:[%s1 + $0x3b0] sm:$0xff]
  %v202 = vld [vmem:[%s1 + $0x3b8] sm:$0xff]
  %v203 = vld [vmem:[%s1 + $0x3c0] sm:$0xff]
  %v204 = vld [vmem:[%s1 + $0x3c8] sm:$0xff]
  %v205 = vld [vmem:[%s1 + $0x3d0] sm:$0xff]
  %v206 = vld [vmem:[%s1 + $0x3d8] sm:$0xff]
  %v207 = vld [vmem:[%s1 + $0x3e0] sm:$0xff]
  %v208 = vld [vmem:[%s1 + $0x3e8] sm:$0xff]
  %v209 = vld [vmem:[%s1 + $0x3f0] sm:$0xff]
  %v210 = vld [vmem:[%s1 + $0x3f8] sm:$0xff]
  %v211 = vld [vmem:[%s1 + $0x400] sm:$0xff]
  %v212 = vld [vmem:[%s1 + $0x408] sm:$0xff]
  %v213 = vld [vmem:[%s1 + $0x410] sm:$0xff]
  %v214 = vld [vmem:[%s1 + $0x418] sm:$0xff]
  %v215 = vld [vmem:[%s1 + $0x420] sm:$0xff]
  %v216 = vld [vmem:[%s1 + $0x428] sm:$0xff]
  %v217 = vld [vmem:[%s1 + $0x430] sm:$0xff]
  %v218 = vld [vmem:[%s1 + $0x438] sm:$0xff]
  %v219 = vld [vmem:[%s1 + $0x440] sm:$0xff]
  %v220 = vld [vmem:[%s1 + $0x448] sm:$0xff]
  %v221 = vld [vmem:[%s1 + $0x450] sm:$0xff]
  %v222 = vld [vmem:[%s1 + $0x458] sm:$0xff]
  %v223 = vld [vmem:[%s1 + $0x460] sm:$0xff]
  %v224 = vld [vmem:[%s1 + $0x468] sm:$0xff]
  %v225 = vld [vmem:[%s1 + $0x470] sm:$0xff]
  %v226 = vld [vmem:[%s1 + $0x478] sm:$0xff]
  %v227 = vld [vmem:[%s1 + $0x480] sm:$0xff]
  %v228 = vld [vmem:[%s1 + $0x488] sm:$0xff]
  %v229 = vld [vmem:[%s1 + $0x490] sm:$0xff]
  %v230 = vld [vmem:[%s1 + $0x498] sm:$0xff]
  %v231 = vld [vmem:[%s1 + $0x4a0] sm:$0xff]
  %v232 = vld [vmem:[%s1 + $0x4a8] sm:$0xff]
  %v233 = vld [vmem:[%s1 + $0x4b0] sm:$0xff]
  %v234 = vld [vmem:[%s1 + $0x4b8] sm:$0xff]
  %v235 = vld [vmem:[%s1 + $0x4c0] sm:$0xff]
  %v236 = vld [vmem:[%s1 + $0x4c8] sm:$0xff]
  %v237 = vld [vmem:[%s1 + $0x4d0] sm:$0xff]
  %v238 = vld [vmem:[%s1 + $0x4d8] sm:$0xff]
  %v239 = vld [vmem:[%s1 + $0x4e0] sm:$0xff]
  %v240 = vld [vmem:[%s1 + $0x4e8] sm:$0xff]
  %v241 = vld [vmem:[%s1 + $0x4f0] sm:$0xff]
  %v242 = vld [vmem:[%s1 + $0x4f8] sm:$0xff]
  %v243 = vld [vmem:[%s1 + $0x500] sm:$0xff]
  %v244 = vld [vmem:[%s1 + $0x508] sm:$0xff]
  %v245 = vld [vmem:[%s1 + $0x510] sm:$0xff]
  %v246 = vld [vmem:[%s1 + $0x518] sm:$0xff]
  %v247 = vld [vmem:[%s1 + $0x520] sm:$0xff]
  %v248 = vld [vmem:[%s1 + $0x528] sm:$0xff]
  %v249 = vld [vmem:[%s1 + $0x530] sm:$0xff]
  %v250 = vld [vmem:[%s1 + $0x538] sm:$0xff]
  %v251 = vld [vmem:[%s1 + $0x540] sm:$0xff]
  %v252 = vld [vmem:[%s1 + $0x548] sm:$0xff]
  %v253 = vld [vmem:[%s1 + $0x550] sm:$0xff]
  %v254 = vld [vmem:[%s1 + $0x558] sm:$0xff]
  %v255 = vld [vmem:[%s1 + $0x560] sm:$0xff]
  %v256 = vld [vmem:[%s1 + $0x568] sm:$0xff]
  %v257 = vld [vmem:[%s1 + $0x570] sm:$0xff]
  %v258 = vld [vmem:[%s1 + $0x578] sm:$0xff]
  %v259 = vld [vmem:[%s1 + $0x580] sm:$0xff]
  %v260 = vld [vmem:[%s1 + $0x588] sm:$0xff]
  %v261 = vld [vmem:[%s1 + $0x590] sm:$0xff]
  %v262 = vld [vmem:[%s1 + $0x598] sm:$0xff]
  %v263 = vld [vmem:[%s1 + $0x5a0] sm:$0xff]
  %v264 = vld [vmem:[%s1 + $0x5a8] sm:$0xff]
  %v265 = vld [vmem:[%s1 + $0x5b0] sm:$0xff]
  %v266 = vld [vmem:[%s1 + $0x5b8] sm:$0xff]
  %v267 = vld [vmem:[%s1 + $0x5c0] sm:$0xff]
  %v268 = vld [vmem:[%s1 + $0x5c8] sm:$0xff]
  %v269 = vld [vmem:[%s1 + $0x5d0] sm:$0xff]
  %v270 = vld [vmem:[%s1 + $0x5d8] sm:$0xff]
  %v271 = vld [vmem:[%s1 + $0x5e0] sm:$0xff]
  %v272 = vld [vmem:[%s1 + $0x5e8] sm:$0xff]
  %v273 = vld [vmem:[%s1 + $0x5f0] sm:$0xff]
  %v274 = vld [vmem:[%s1 + $0x5f8] sm:$0xff]
  %v275 = vld [vmem:[%s1 + $0x600] sm:$0xff]
  %v276 = vld [vmem:[%s1 + $0x608] sm:$0xff]
  %v277 = vld [vmem:[%s1 + $0x610] sm:$0xff]
  %v278 = vld [vmem:[%s1 + $0x618] sm:$0xff]
  %v279 = vld [vmem:[%s1 + $0x620] sm:$0xff]
  %v280 = vld [vmem:[%s1 + $0x628] sm:$0xff]
  %v281 = vld [vmem:[%s1 + $0x630] sm:$0xff]
  %v282 = vld [vmem:[%s1 + $0x638] sm:$0xff]
  %v283 = vld [vmem:[%s1 + $0x640] sm:$0xff]
  %v284 = vld [vmem:[%s1 + $0x648] sm:$0xff]
  %v285 = vld [vmem:[%s1 + $0x650] sm:$0xff]
  %v286 = vld [vmem:[%s1 + $0x658] sm:$0xff]
  %v287 = vld [vmem:[%s1 + $0x660] sm:$0xff]
  %v288 = vld [vmem:[%s1 + $0x668] sm:$0xff]
  %v289 = vld [vmem:[%s1 + $0x670] sm:$0xff]
  %v290 = vld [vmem:[%s1 + $0x678] sm:$0xff]
  %v291 = vld [vmem:[%s1 + $0x680] sm:$0xff]
  %v292 = vld [vmem:[%s1 + $0x688] sm:$0xff]
  %v293 = vld [vmem:[%s1 + $0x690] sm:$0xff]
  %v294 = vld [vmem:[%s1 + $0x698] sm:$0xff]
  %v295 = vld [vmem:[%s1 + $0x6a0] sm:$0xff]
  %v296 = vld [vmem:[%s1 + $0x6a8] sm:$0xff]
  %v297 = vld [vmem:[%s1 + $0x6b0] sm:$0xff]
  %v298 = vld [vmem:[%s1 + $0x6b8] sm:$0xff]
  %v299 = vld [vmem:[%s1 + $0x6c0] sm:$0xff]
  %v300 = vld [vmem:[%s1 + $0x6c8] sm:$0xff]
  %v301 = vld [vmem:[%s1 + $0x6d0] sm:$0xff]
  %v302 = vld [vmem:[%s1 + $0x6d8] sm:$0xff]
  %v303 = vld [vmem:[%s1 + $0x6e0] sm:$0xff]
  %v304 = vld [vmem:[%s1 + $0x6e8] sm:$0xff]
  %v305 = vld [vmem:[%s1 + $0x6f0] sm:$0xff]
  %v306 = vld [vmem:[%s1 + $0x6f8] sm:$0xff]
  %v307 = vld [vmem:[%s1 + $0x700] sm:$0xff]
  %v308 = vld [vmem:[%s1 + $0x708] sm:$0xff]
  %v309 = vld [vmem:[%s1 + $0x710] sm:$0xff]
  %v310 = vld [vmem:[%s1 + $0x718] sm:$0xff]
  %v311 = vld [vmem:[%s1 + $0x720] sm:$0xff]
  %v312 = vld [vmem:[%s1 + $0x728] sm:$0xff]
  %v313 = vld [vmem:[%s1 + $0x730] sm:$0xff]
  %v314 = vld [vmem:[%s1 + $0x738] sm:$0xff]
  %v315 = vld [vmem:[%s1 + $0x740] sm:$0xff]
  %v316 = vld [vmem:[%s1 + $0x748] sm:$0xff]
  %v317 = vld [vmem:[%s1 + $0x750] sm:$0xff]
  %v318 = vld [vmem:[%s1 + $0x758] sm:$0xff]
  %v319 = vld [vmem:[%s1 + $0x760] sm:$0xff]
  %v320 = vld [vmem:[%s1 + $0x768] sm:$0xff]
  %v321 = vld [vmem:[%s1 + $0x770] sm:$0xff]
  %v322 = vld [vmem:[%s1 + $0x778] sm:$0xff]
  %v323 = vld [vmem:[%s1 + $0x780] sm:$0xff]
  %v324 = vld [vmem:[%s1 + $0x788] sm:$0xff]
  %v325 = vld [vmem:[%s1 + $0x790] sm:$0xff]
  %v326 = vld [vmem:[%s1 + $0x798] sm:$0xff]
  %v327 = vld [vmem:[%s1 + $0x7a0] sm:$0xff]
  %v328 = vld [vmem:[%s1 + $0x7a8] sm:$0xff]
  %v329 = vld [vmem:[%s1 + $0x7b0] sm:$0xff]
  %v330 = vld [vmem:[%s1 + $0x7b8] sm:$0xff]
  %v331 = vld [vmem:[%s1 + $0x7c0] sm:$0xff]
  %v332 = vld [vmem:[%s1 + $0x7c8] sm:$0xff]
  %v333 = vld [vmem:[%s1 + $0x7d0] sm:$0xff]
  %v334 = vld [vmem:[%s1 + $0x7d8] sm:$0xff]
  %v335 = vld [vmem:[%s1 + $0x7e0] sm:$0xff]
  %v336 = vld [vmem:[%s1 + $0x7e8] sm:$0xff]
  %v337 = vld [vmem:[%s1 + $0x7f0] sm:$0xff]
  %v338 = vld [vmem:[%s1 + $0x7f8] sm:$0xff]
  %v339 = vld [vmem:[%s1 + $0x800] sm:$0xff]
  %v340 = vld [vmem:[%s1 + $0x808] sm:$0xff]
  %v341 = vld [vmem:[%s1 + $0x810] sm:$0xff]
  %v342 = vld [vmem:[%s1 + $0x818] sm:$0xff]
  %v343 = vld [vmem:[%s1 + $0x820] sm:$0xff]
  %v344 = vld [vmem:[%s1 + $0x828] sm:$0xff]
  %v345 = vld [vmem:[%s1 + $0x830] sm:$0xff]
  %v346 = vld [vmem:[%s1 + $0x838] sm:$0xff]
  %v347 = vld [vmem:[%s1 + $0x840] sm:$0xff]
  %v348 = vld [vmem:[%s1 + $0x848] sm:$0xff]
  %v349 = vld [vmem:[%s1 + $0x850] sm:$0xff]
  %v350 = vld [vmem:[%s1 + $0x858] sm:$0xff]
  %v351 = vld [vmem:[%s1 + $0x860] sm:$0xff]
  %v352 = vld [vmem:[%s1 + $0x868] sm:$0xff]
  %v353 = vld [vmem:[%s1 + $0x870] sm:$0xff]
  %v354 = vld [vmem:[%s1 + $0x878] sm:$0xff]
  %v355 = vld [vmem:[%s1 + $0x880] sm:$0xff]
  %v356 = vld [vmem:[%s1 + $0x888] sm:$0xff]
  %v357 = vld [vmem:[%s1 + $0x890] sm:$0xff]
  %v358 = vld [vmem:[%s1 + $0x898] sm:$0xff]
  %v359 = vld [vmem:[%s1 + $0x8a0] sm:$0xff]
  %v360 = vld [vmem:[%s1 + $0x8a8] sm:$0xff]
  %v361 = vld [vmem:[%s1 + $0x8b0] sm:$0xff]
  %v362 = vld [vmem:[%s1 + $0x8b8] sm:$0xff]
  %v363 = vld [vmem:[%s1 + $0x8c0] sm:$0xff]
  %v364 = vld [vmem:[%s1 + $0x8c8] sm:$0xff]
  %v365 = vld [vmem:[%s1 + $0x8d0] sm:$0xff]
  %v366 = vld [vmem:[%s1 + $0x8d8] sm:$0xff]
  %v367 = vld [vmem:[%s1 + $0x8e0] sm:$0xff]
  %v368 = vld [vmem:[%s1 + $0x8e8] sm:$0xff]
  %v369 = vld [vmem:[%s1 + $0x8f0] sm:$0xff]
  %v370 = vld [vmem:[%s1 + $0x8f8] sm:$0xff]
  %v371 = vld [vmem:[%s1 + $0x900] sm:$0xff]
  %v372 = vld [vmem:[%s1 + $0x908] sm:$0xff]
  %v373 = vld [vmem:[%s1 + $0x910] sm:$0xff]
  %v374 = vld [vmem:[%s1 + $0x918] sm:$0xff]
  %v375 = vld [vmem:[%s1 + $0x920] sm:$0xff]
  %v376 = vld [vmem:[%s1 + $0x928] sm:$0xff]
  %v377 = vld [vmem:[%s1 + $0x930] sm:$0xff]
  %v378 = vld [vmem:[%s1 + $0x938] sm:$0xff]
  %v379 = vld [vmem:[%s1 + $0x940] sm:$0xff]
  %v380 = vld [vmem:[%s1 + $0x948] sm:$0xff]
  %v381 = vld [vmem:[%s1 + $0x950] sm:$0xff]
  %v382 = vld [vmem:[%s1 + $0x958] sm:$0xff]
  %v383 = vld [vmem:[%s1 + $0x960] sm:$0xff]
  %v384 = vld [vmem:[%s1 + $0x968] sm:$0xff]
  %v385 = vld [vmem:[%s1 + $0x970] sm:$0xff]
  %v386 = vld [vmem:[%s1 + $0x978] sm:$0xff]
  %v387 = vld [vmem:[%s1 + $0x980] sm:$0xff]
  %v388 = vld [vmem:[%s1 + $0x988] sm:$0xff]
  %v389 = vld [vmem:[%s1 + $0x990] sm:$0xff]
  %v390 = vld [vmem:[%s1 + $0x998] sm:$0xff]
  %v391 = vld [vmem:[%s1 + $0x9a0] sm:$0xff]
  %v392 = vld [vmem:[%s1 + $0x9a8] sm:$0xff]
  %v393 = vld [vmem:[%s1 + $0x9b0] sm:$0xff]
  %v394 = vld [vmem:[%s1 + $0x9b8] sm:$0xff]
  %v395 = vld [vmem:[%s1 + $0x9c0] sm:$0xff]
  %v396 = vld [vmem:[%s1 + $0x9c8] sm:$0xff]
  %v397 = vld [vmem:[%s1 + $0x9d0] sm:$0xff]
  %v398 = vld [vmem:[%s1 + $0x9d8] sm:$0xff]
  %v399 = vld [vmem:[%s1 + $0x9e0] sm:$0xff]
  %v400 = vld [vmem:[%s1 + $0x9e8] sm:$0xff]
  %v401 = vld [vmem:[%s1 + $0x9f0] sm:$0xff]
  %v402 = vld [vmem:[%s1 + $0x9f8] sm:$0xff]
  %v403 = vld [vmem:[%s1 + $0xa00] sm:$0xff]
  %v404 = vld [vmem:[%s1 + $0xa08] sm:$0xff]
  %v405 = vld [vmem:[%s1 + $0xa10] sm:$0xff]
  %v406 = vld [vmem:[%s1 + $0xa18] sm:$0xff]
  %v407 = vld [vmem:[%s1 + $0xa20] sm:$0xff]
  %v408 = vld [vmem:[%s1 + $0xa28] sm:$0xff]
  %v409 = vld [vmem:[%s1 + $0xa30] sm:$0xff]
  %v410 = vld [vmem:[%s1 + $0xa38] sm:$0xff]
  %v411 = vld [vmem:[%s1 + $0xa40] sm:$0xff]
  %v412 = vld [vmem:[%s1 + $0xa48] sm:$0xff]
  %v413 = vld [vmem:[%s1 + $0xa50] sm:$0xff]
  %v414 = vld [vmem:[%s1 + $0xa58] sm:$0xff]
  %v415 = vld [vmem:[%s1 + $0xa60] sm:$0xff]
  %v416 = vld [vmem:[%s1 + $0xa68] sm:$0xff]
  %v417 = vld [vmem:[%s1 + $0xa70] sm:$0xff]
  %v418 = vld [vmem:[%s1 + $0xa78] sm:$0xff]
  %v419 = vld [vmem:[%s1 + $0xa80] sm:$0xff]
  %v420 = vld [vmem:[%s1 + $0xa88] sm:$0xff]
  %v421 = vld [vmem:[%s1 + $0xa90] sm:$0xff]
  %v422 = vld [vmem:[%s1 + $0xa98] sm:$0xff]
  %v423 = vld [vmem:[%s1 + $0xaa0] sm:$0xff]
  %v424 = vld [vmem:[%s1 + $0xaa8] sm:$0xff]
  %v425 = vld [vmem:[%s1 + $0xab0] sm:$0xff]
  %v426 = vld [vmem:[%s1 + $0xab8] sm:$0xff]
  %v427 = vld [vmem:[%s1 + $0xac0] sm:$0xff]
  %v428 = vld [vmem:[%s1 + $0xac8] sm:$0xff]
  %v429 = vld [vmem:[%s1 + $0xad0] sm:$0xff]
  %v430 = vld [vmem:[%s1 + $0xad8] sm:$0xff]
  %v431 = vld [vmem:[%s1 + $0xae0] sm:$0xff]
  %v432 = vld [vmem:[%s1 + $0xae8] sm:$0xff]
  %v433 = vld [vmem:[%s1 + $0xaf0] sm:$0xff]
  %v434 = vld [vmem:[%s1 + $0xaf8] sm:$0xff]
  %v435 = vld [vmem:[%s1 + $0xb00] sm:$0xff]
  %v436 = vld [vmem:[%s1 + $0xb08] sm:$0xff]
  %v437 = vld [vmem:[%s1 + $0xb10] sm:$0xff]
  %v438 = vld [vmem:[%s1 + $0xb18] sm:$0xff]
  %v439 = vld [vmem:[%s1 + $0xb20] sm:$0xff]
  %v440 = vld [vmem:[%s1 + $0xb28] sm:$0xff]
  %v441 = vld [vmem:[%s1 + $0xb30] sm:$0xff]
  %v442 = vld [vmem:[%s1 + $0xb38] sm:$0xff]
  %v443 = vld [vmem:[%s1 + $0xb40] sm:$0xff]
  %v444 = vld [vmem:[%s1 + $0xb48] sm:$0xff]
  %v445 = vld [vmem:[%s1 + $0xb50] sm:$0xff]
  %v446 = vld [vmem:[%s1 + $0xb58] sm:$0xff]
  %v447 = vld [vmem:[%s1 + $0xb60] sm:$0xff]
  %v448 = vld [vmem:[%s1 + $0xb68] sm:$0xff]
  %v449 = vld [vmem:[%s1 + $0xb70] sm:$0xff]
  %v450 = vld [vmem:[%s1 + $0xb78] sm:$0xff]
  %v451 = vld [vmem:[%s1 + $0xb80] sm:$0xff]
  %v452 = vld [vmem:[%s1 + $0xb88] sm:$0xff]
  %v453 = vld [vmem:[%s1 + $0xb90] sm:$0xff]
  %v454 = vld [vmem:[%s1 + $0xb98] sm:$0xff]
  %v455 = vld [vmem:[%s1 + $0xba0] sm:$0xff]
  %v456 = vld [vmem:[%s1 + $0xba8] sm:$0xff]
  %v457 = vld [vmem:[%s1 + $0xbb0] sm:$0xff]
  %v458 = vld [vmem:[%s1 + $0xbb8] sm:$0xff]
  %v459 = vld [vmem:[%s1 + $0xbc0] sm:$0xff]
  %v460 = vld [vmem:[%s1 + $0xbc8] sm:$0xff]
  %v461 = vld [vmem:[%s1 + $0xbd0] sm:$0xff]
  %v462 = vld [vmem:[%s1 + $0xbd8] sm:$0xff]
  %v463 = vld [vmem:[%s1 + $0xbe0] sm:$0xff]
  %v464 = vld [vmem:[%s1 + $0xbe8] sm:$0xff]
  %v465 = vld [vmem:[%s1 + $0xbf0] sm:$0xff]
  %v466 = vld [vmem:[%s1 + $0xbf8] sm:$0xff]
  %v467 = vld [vmem:[%s1 + $0xc00] sm:$0xff]
  %v468 = vld [vmem:[%s1 + $0xc08] sm:$0xff]
  %v469 = vld [vmem:[%s1 + $0xc10] sm:$0xff]
  %v470 = vld [vmem:[%s1 + $0xc18] sm:$0xff]
  %v471 = vld [vmem:[%s1 + $0xc20] sm:$0xff]
  %v472 = vld [vmem:[%s1 + $0xc28] sm:$0xff]
  %v473 = vld [vmem:[%s1 + $0xc30] sm:$0xff]
  %v474 = vld [vmem:[%s1 + $0xc38] sm:$0xff]
  %v475 = vld [vmem:[%s1 + $0xc40] sm:$0xff]
  %v476 = vld [vmem:[%s1 + $0xc48] sm:$0xff]
  %v477 = vld [vmem:[%s1 + $0xc50] sm:$0xff]
  %v478 = vld [vmem:[%s1 + $0xc58] sm:$0xff]
  %v479 = vld [vmem:[%s1 + $0xc60] sm:$0xff]
  %v480 = vld [vmem:[%s1 + $0xc68] sm:$0xff]
  %v481 = vld [vmem:[%s1 + $0xc70] sm:$0xff]
  %v482 = vld [vmem:[%s1 + $0xc78] sm:$0xff]
  %v483 = vld [vmem:[%s1 + $0xc80] sm:$0xff]
  %v484 = vld [vmem:[%s1 + $0xc88] sm:$0xff]
  %v485 = vld [vmem:[%s1 + $0xc90] sm:$0xff]
  %v486 = vld [vmem:[%s1 + $0xc98] sm:$0xff]
  %v487 = vld [vmem:[%s1 + $0xca0] sm:$0xff]
  %v488 = vld [vmem:[%s1 + $0xca8] sm:$0xff]
  %v489 = vld [vmem:[%s1 + $0xcb0] sm:$0xff]
  %v490 = vld [vmem:[%s1 + $0xcb8] sm:$0xff]
  %v491 = vld [vmem:[%s1 + $0xcc0] sm:$0xff]
  %v492 = vld [vmem:[%s1 + $0xcc8] sm:$0xff]
  %v493 = vld [vmem:[%s1 + $0xcd0] sm:$0xff]
  %v494 = vld [vmem:[%s1 + $0xcd8] sm:$0xff]
  %v495 = vld [vmem:[%s1 + $0xce0] sm:$0xff]
  %v496 = vld [vmem:[%s1 + $0xce8] sm:$0xff]
  %v497 = vld [vmem:[%s1 + $0xcf0] sm:$0xff]
  %v498 = vld [vmem:[%s1 + $0xcf8] sm:$0xff]
  %v499 = vld [vmem:[%s1 + $0xd00] sm:$0xff]
  %v500 = vld [vmem:[%s1 + $0xd08] sm:$0xff]
  %v501 = vld [vmem:[%s1 + $0xd10] sm:$0xff]
  %v502 = vld [vmem:[%s1 + $0xd18] sm:$0xff]
  %v503 = vld [vmem:[%s1 + $0xd20] sm:$0xff]
  %v504 = vld [vmem:[%s1 + $0xd28] sm:$0xff]
  %v505 = vld [vmem:[%s1 + $0xd30] sm:$0xff]
  %v506 = vld [vmem:[%s1 + $0xd38] sm:$0xff]
  %v507 = vld [vmem:[%s1 + $0xd40] sm:$0xff]
  %v508 = vld [vmem:[%s1 + $0xd48] sm:$0xff]
  %v509 = vld [vmem:[%s1 + $0xd50] sm:$0xff]
  %v510 = vld [vmem:[%s1 + $0xd58] sm:$0xff]
  %v511 = vld [vmem:[%s1 + $0xd60] sm:$0xff]
  %v512 = vld [vmem:[%s1 + $0xd68] sm:$0xff]
  %v513 = vld [vmem:[%s1 + $0xd70] sm:$0xff]
  %v514 = vld [vmem:[%s1 + $0xd78] sm:$0xff]
  %v515 = vld [vmem:[%s1 + $0xd80] sm:$0xff]
  %v516 = vld [vmem:[%s1 + $0xd88] sm:$0xff]
  %v517 = vld [vmem:[%s1 + $0xd90] sm:$0xff]
  %v518 = vld [vmem:[%s1 + $0xd98] sm:$0xff]
  %v519 = vld [vmem:[%s1 + $0xda0] sm:$0xff]
  %v520 = vld [vmem:[%s1 + $0xda8] sm:$0xff]
  %v521 = vld [vmem:[%s1 + $0xdb0] sm:$0xff]
  %v522 = vld [vmem:[%s1 + $0xdb8] sm:$0xff]
  %v523 = vld [vmem:[%s1 + $0xdc0] sm:$0xff]
  %v524 = vld [vmem:[%s1 + $0xdc8] sm:$0xff]
  %v525 = vld [vmem:[%s1 + $0xdd0] sm:$0xff]
  %v526 = vld [vmem:[%s1 + $0xdd8] sm:$0xff]
  %v527 = vld [vmem:[%s1 + $0xde0] sm:$0xff]
  %v528 = vld [vmem:[%s1 + $0xde8] sm:$0xff]
  %v529 = vld [vmem:[%s1 + $0xdf0] sm:$0xff]
  %v530 = vld [vmem:[%s1 + $0xdf8] sm:$0xff]
  %v531 = vld [vmem:[%s1 + $0xe00] sm:$0xff]
  %v532 = vld [vmem:[%s1 + $0xe08] sm:$0xff]
  %v533 = vld [vmem:[%s1 + $0xe10] sm:$0xff]
  %v534 = vld [vmem:[%s1 + $0xe18] sm:$0xff]
  %v535 = vld [vmem:[%s1 + $0xe20] sm:$0xff]
  %v536 = vld [vmem:[%s1 + $0xe28] sm:$0xff]
  %v537 = vld [vmem:[%s1 + $0xe30] sm:$0xff]
  %v538 = vld [vmem:[%s1 + $0xe38] sm:$0xff]
  %v539 = vld [vmem:[%s1 + $0xe40] sm:$0xff]
  %v540 = vld [vmem:[%s1 + $0xe48] sm:$0xff]
  %v541 = vld [vmem:[%s1 + $0xe50] sm:$0xff]
  %v542 = vld [vmem:[%s1 + $0xe58] sm:$0xff]
  %v543 = vld [vmem:[%s1 + $0xe60] sm:$0xff]
  %v544 = vld [vmem:[%s1 + $0xe68] sm:$0xff]
  %v545 = vld [vmem:[%s1 + $0xe70] sm:$0xff]
  %v546 = vld [vmem:[%s1 + $0xe78] sm:$0xff]
  %v547 = vld [vmem:[%s1 + $0xe80] sm:$0xff]
  %v548 = vld [vmem:[%s1 + $0xe88] sm:$0xff]
  %v549 = vld [vmem:[%s1 + $0xe90] sm:$0xff]
  %v550 = vld [vmem:[%s1 + $0xe98] sm:$0xff]
  %v551 = vld [vmem:[%s1 + $0xea0] sm:$0xff]
  %v552 = vld [vmem:[%s1 + $0xea8] sm:$0xff]
  %v553 = vld [vmem:[%s1 + $0xeb0] sm:$0xff]
  %v554 = vld [vmem:[%s1 + $0xeb8] sm:$0xff]
  %v555 = vld [vmem:[%s1 + $0xec0] sm:$0xff]
  %v556 = vld [vmem:[%s1 + $0xec8] sm:$0xff]
  %v557 = vld [vmem:[%s1 + $0xed0] sm:$0xff]
  %v558 = vld [vmem:[%s1 + $0xed8] sm:$0xff]
  %v559 = vld [vmem:[%s1 + $0xee0] sm:$0xff]
  %v560 = vld [vmem:[%s1 + $0xee8] sm:$0xff]
  %v561 = vld [vmem:[%s1 + $0xef0] sm:$0xff]
  %v562 = vld [vmem:[%s1 + $0xef8] sm:$0xff]
  %v563 = vld [vmem:[%s1 + $0xf00] sm:$0xff]
  %v564 = vld [vmem:[%s1 + $0xf08] sm:$0xff]
  %v565 = vld [vmem:[%s1 + $0xf10] sm:$0xff]
  %v566 = vld [vmem:[%s1 + $0xf18] sm:$0xff]
  %v567 = vld [vmem:[%s1 + $0xf20] sm:$0xff]
  %v568 = vld [vmem:[%s1 + $0xf28] sm:$0xff]
  %v569 = vld [vmem:[%s1 + $0xf30] sm:$0xff]
  %v570 = vld [vmem:[%s1 + $0xf38] sm:$0xff]
  %v571 = vld [vmem:[%s1 + $0xf40] sm:$0xff]
  %v572 = vld [vmem:[%s1 + $0xf48] sm:$0xff]
  %v573 = vld [vmem:[%s1 + $0xf50] sm:$0xff]
  %v574 = vld [vmem:[%s1 + $0xf58] sm:$0xff]
  %v575 = vld [vmem:[%s1 + $0xf60] sm:$0xff]
  %v576 = vld [vmem:[%s1 + $0xf68] sm:$0xff]
  %v577 = vld [vmem:[%s1 + $0xf70] sm:$0xff]
  %v578 = vld [vmem:[%s1 + $0xf78] sm:$0xff]
  %v579 = vld [vmem:[%s1 + $0xf80] sm:$0xff]
  %v580 = vld [vmem:[%s1 + $0xf88] sm:$0xff]
  %v581 = vld [vmem:[%s1 + $0xf90] sm:$0xff]
  %v582 = vld [vmem:[%s1 + $0xf98] sm:$0xff]
  %v583 = vld [vmem:[%s1 + $0xfa0] sm:$0xff]
  %v584 = vld [vmem:[%s1 + $0xfa8] sm:$0xff]
  %v585 = vld [vmem:[%s1 + $0xfb0] sm:$0xff]
  %v586 = vld [vmem:[%s1 + $0xfb8] sm:$0xff]
  %v587 = vld [vmem:[%s1 + $0xfc0] sm:$0xff]
  %v588 = vld [vmem:[%s1 + $0xfc8] sm:$0xff]
  %v589 = vld [vmem:[%s1 + $0xfd0] sm:$0xff]
  %v590 = vld [vmem:[%s1 + $0xfd8] sm:$0xff]
  %v591 = vld [vmem:[%s1 + $0xfe0] sm:$0xff]
  %v592 = vld [vmem:[%s1 + $0xfe8] sm:$0xff]
  %v593 = vld [vmem:[%s1 + $0xff0] sm:$0xff]
  %v594 = vld [vmem:[%s1 + $0xff8] sm:$0xff]
  %v595 = vld [vmem:[%s1 + $0x1000] sm:$0xff]
  %v596 = vld [vmem:[%s1 + $0x1008] sm:$0xff]
  %v597 = vld [vmem:[%s1 + $0x1010] sm:$0xff]
  %v598 = vld [vmem:[%s1 + $0x1018] sm:$0xff]
  %v599 = vld [vmem:[%s1 + $0x1020] sm:$0xff]
  %v600 = vld [vmem:[%s1 + $0x1028] sm:$0xff]
  %v601 = vld [vmem:[%s1 + $0x1030] sm:$0xff]
  %v602 = vld [vmem:[%s1 + $0x1038] sm:$0xff]
  %v603 = vld [vmem:[%s1 + $0x1040] sm:$0xff]
  %v604 = vld [vmem:[%s1 + $0x1048] sm:$0xff]
  %v605 = vld [vmem:[%s1 + $0x1050] sm:$0xff]
  %v606 = vld [vmem:[%s1 + $0x1058] sm:$0xff]
  %v607 = vld [vmem:[%s1 + $0x1060] sm:$0xff]
  %v608 = vld [vmem:[%s1 + $0x1068] sm:$0xff]
  %v609 = vld [vmem:[%s1 + $0x1070] sm:$0xff]
  %v610 = vld [vmem:[%s1 + $0x1078] sm:$0xff]
  %v611 = vld [vmem:[%s1 + $0x1080] sm:$0xff]
  %v612 = vld [vmem:[%s1 + $0x1088] sm:$0xff]
  %v613 = vld [vmem:[%s1 + $0x1090] sm:$0xff]
  %v614 = vld [vmem:[%s1 + $0x1098] sm:$0xff]
  %v615 = vld [vmem:[%s1 + $0x10a0] sm:$0xff]
  %v616 = vld [vmem:[%s1 + $0x10a8] sm:$0xff]
  %v617 = vld [vmem:[%s1 + $0x10b0] sm:$0xff]
  %v618 = vld [vmem:[%s1 + $0x10b8] sm:$0xff]
  %v619 = vld [vmem:[%s1 + $0x10c0] sm:$0xff]
  %v620 = vld [vmem:[%s1 + $0x10c8] sm:$0xff]
  %v621 = vld [vmem:[%s1 + $0x10d0] sm:$0xff]
  %v622 = vld [vmem:[%s1 + $0x10d8] sm:$0xff]
  %v623 = vld [vmem:[%s1 + $0x10e0] sm:$0xff]
  %v624 = vld [vmem:[%s1 + $0x10e8] sm:$0xff]
  %v625 = vld [vmem:[%s1 + $0x10f0] sm:$0xff]
  %v626 = vld [vmem:[%s1 + $0x10f8] sm:$0xff]
  %v627 = vld [vmem:[%s1 + $0x1100] sm:$0xff]
  %v628 = vld [vmem:[%s1 + $0x1108] sm:$0xff]
  %v629 = vld [vmem:[%s1 + $0x1110] sm:$0xff]
  %v630 = vld [vmem:[%s1 + $0x1118] sm:$0xff]
  %v631 = vld [vmem:[%s1 + $0x1120] sm:$0xff]
  %v632 = vld [vmem:[%s1 + $0x1128] sm:$0xff]
  %v633 = vld [vmem:[%s1 + $0x1130] sm:$0xff]
  %v634 = vld [vmem:[%s1 + $0x1138] sm:$0xff]
  %v635 = vld [vmem:[%s1 + $0x1140] sm:$0xff]
  %v636 = vld [vmem:[%s1 + $0x1148] sm:$0xff]
  %v637 = vld [vmem:[%s1 + $0x1150] sm:$0xff]
  %v638 = vld [vmem:[%s1 + $0x1158] sm:$0xff]
  %v639 = vld [vmem:[%s1 + $0x1160] sm:$0xff]
  %v640 = vld [vmem:[%s1 + $0x1168] sm:$0xff]
  %v641 = vld [vmem:[%s1 + $0x1170] sm:$0xff]
  %v642 = vld [vmem:[%s1 + $0x1178] sm:$0xff]
  %v643 = vld [vmem:[%s1 + $0x1180] sm:$0xff]
  %v644 = vld [vmem:[%s1 + $0x1188] sm:$0xff]
  %v645 = vld [vmem:[%s1 + $0x1190] sm:$0xff]
  %v646 = vld [vmem:[%s1 + $0x1198] sm:$0xff]
  %v647 = vld [vmem:[%s1 + $0x11a0] sm:$0xff]
  %v648 = vld [vmem:[%s1 + $0x11a8] sm:$0xff]
  %v649 = vld [vmem:[%s1 + $0x11b0] sm:$0xff]
  %v650 = vld [vmem:[%s1 + $0x11b8] sm:$0xff]
  %v651 = vld [vmem:[%s1 + $0x11c0] sm:$0xff]
  %v652 = vld [vmem:[%s1 + $0x11c8] sm:$0xff]
  %v653 = vld [vmem:[%s1 + $0x11d0] sm:$0xff]
  %v654 = vld [vmem:[%s1 + $0x11d8] sm:$0xff]
  %v655 = vld [vmem:[%s1 + $0x11e0] sm:$0xff]
  %v656 = vld [vmem:[%s1 + $0x11e8] sm:$0xff]
  %v657 = vld [vmem:[%s1 + $0x11f0] sm:$0xff]
  %v658 = vld [vmem:[%s1 + $0x11f8] sm:$0xff]
  %v659 = vld [vmem:[%s1 + $0x1200] sm:$0xff]
  %v660 = vld [vmem:[%s1 + $0x1208] sm:$0xff]
  %v661 = vld [vmem:[%s1 + $0x1210] sm:$0xff]
  %v662 = vld [vmem:[%s1 + $0x1218] sm:$0xff]
  %v663 = vld [vmem:[%s1 + $0x1220] sm:$0xff]
  %v664 = vld [vmem:[%s1 + $0x1228] sm:$0xff]
  %v665 = vld [vmem:[%s1 + $0x1230] sm:$0xff]
  %v666 = vld [vmem:[%s1 + $0x1238] sm:$0xff]
  %v667 = vld [vmem:[%s1 + $0x1240] sm:$0xff]
  %v668 = vld [vmem:[%s1 + $0x1248] sm:$0xff]
  %v669 = vld [vmem:[%s1 + $0x1250] sm:$0xff]
  %v670 = vld [vmem:[%s1 + $0x1258] sm:$0xff]
  %v671 = vld [vmem:[%s1 + $0x1260] sm:$0xff]
  %v672 = vld [vmem:[%s1 + $0x1268] sm:$0xff]
  %v673 = vld [vmem:[%s1 + $0x1270] sm:$0xff]
  %v674 = vld [vmem:[%s1 + $0x1278] sm:$0xff]
  %v675 = vld [vmem:[%s1 + $0x1280] sm:$0xff]
  %v676 = vld [vmem:[%s1 + $0x1288] sm:$0xff]
  %v677 = vld [vmem:[%s1 + $0x1290] sm:$0xff]
  %v678 = vld [vmem:[%s1 + $0x1298] sm:$0xff]
  %v679 = vld [vmem:[%s1 + $0x12a0] sm:$0xff]
  %v680 = vld [vmem:[%s1 + $0x12a8] sm:$0xff]
  %v681 = vld [vmem:[%s1 + $0x12b0] sm:$0xff]
  %v682 = vld [vmem:[%s1 + $0x12b8] sm:$0xff]
  %v683 = vld [vmem:[%s1 + $0x12c0] sm:$0xff]
  %v684 = vld [vmem:[%s1 + $0x12c8] sm:$0xff]
  %v685 = vld [vmem:[%s1 + $0x12d0] sm:$0xff]
  %v686 = vld [vmem:[%s1 + $0x12d8] sm:$0xff]
  %v687 = vld [vmem:[%s1 + $0x12e0] sm:$0xff]
  %v688 = vld [vmem:[%s1 + $0x12e8] sm:$0xff]
  %v689 = vld [vmem:[%s1 + $0x12f0] sm:$0xff]
  %v690 = vld [vmem:[%s1 + $0x12f8] sm:$0xff]
  %v691 = vld [vmem:[%s1 + $0x1300] sm:$0xff]
  %v692 = vld [vmem:[%s1 + $0x1308] sm:$0xff]
  %v693 = vld [vmem:[%s1 + $0x1310] sm:$0xff]
  %v694 = vld [vmem:[%s1 + $0x1318] sm:$0xff]
  %v695 = vld [vmem:[%s1 + $0x1320] sm:$0xff]
  %v696 = vld [vmem:[%s1 + $0x1328] sm:$0xff]
  %v697 = vld [vmem:[%s1 + $0x1330] sm:$0xff]
  %v698 = vld [vmem:[%s1 + $0x1338] sm:$0xff]
  %v699 = vld [vmem:[%s1 + $0x1340] sm:$0xff]
  %v700 = vld [vmem:[%s1 + $0x1348] sm:$0xff]
  %v701 = vld [vmem:[%s1 + $0x1350] sm:$0xff]
  %v702 = vld [vmem:[%s1 + $0x1358] sm:$0xff]
  %v703 = vld [vmem:[%s1 + $0x1360] sm:$0xff]
  %v704 = vld [vmem:[%s1 + $0x1368] sm:$0xff]
  %v705 = vld [vmem:[%s1 + $0x1370] sm:$0xff]
  %v706 = vld [vmem:[%s1 + $0x1378] sm:$0xff]
  %v707 = vld [vmem:[%s1 + $0x1380] sm:$0xff]
  %v708 = vld [vmem:[%s1 + $0x1388] sm:$0xff]
  %v709 = vld [vmem:[%s1 + $0x1390] sm:$0xff]
  %v710 = vld [vmem:[%s1 + $0x1398] sm:$0xff]
  %v711 = vld [vmem:[%s1 + $0x13a0] sm:$0xff]
  %v712 = vld [vmem:[%s1 + $0x13a8] sm:$0xff]
  %v713 = vld [vmem:[%s1 + $0x13b0] sm:$0xff]
  %v714 = vld [vmem:[%s1 + $0x13b8] sm:$0xff]
  %v715 = vld [vmem:[%s1 + $0x13c0] sm:$0xff]
  %v716 = vld [vmem:[%s1 + $0x13c8] sm:$0xff]
  %v717 = vld [vmem:[%s1 + $0x13d0] sm:$0xff]
  %v718 = vld [vmem:[%s1 + $0x13d8] sm:$0xff]
  %v719 = vld [vmem:[%s1 + $0x13e0] sm:$0xff]
  %v720 = vld [vmem:[%s1 + $0x13e8] sm:$0xff]
  %v721 = vld [vmem:[%s1 + $0x13f0] sm:$0xff]
  %v722 = vld [vmem:[%s1 + $0x13f8] sm:$0xff]
  %v723 = vld [vmem:[%s1 + $0x1400] sm:$0xff]
  %v724 = vld [vmem:[%s1 + $0x1408] sm:$0xff]
  %v725 = vld [vmem:[%s1 + $0x1410] sm:$0xff]
  %v726 = vld [vmem:[%s1 + $0x1418] sm:$0xff]
  %v727 = vld [vmem:[%s1 + $0x1420] sm:$0xff]
  %v728 = vld [vmem:[%s1 + $0x1428] sm:$0xff]
  %v729 = vld [vmem:[%s1 + $0x1430] sm:$0xff]
  %v730 = vld [vmem:[%s1 + $0x1438] sm:$0xff]
  %v731 = vld [vmem:[%s1 + $0x1440] sm:$0xff]
  %v732 = vld [vmem:[%s1 + $0x1448] sm:$0xff]
  %v733 = vld [vmem:[%s1 + $0x1450] sm:$0xff]
  %v734 = vld [vmem:[%s1 + $0x1458] sm:$0xff]
  %v735 = vld [vmem:[%s1 + $0x1460] sm:$0xff]
  %v736 = vld [vmem:[%s1 + $0x1468] sm:$0xff]
  %v737 = vld [vmem:[%s1 + $0x1470] sm:$0xff]
  %v738 = vld [vmem:[%s1 + $0x1478] sm:$0xff]
  %v739 = vld [vmem:[%s1 + $0x1480] sm:$0xff]
  %v740 = vld [vmem:[%s1 + $0x1488] sm:$0xff]
  %v741 = vld [vmem:[%s1 + $0x1490] sm:$0xff]
  %v742 = vld [vmem:[%s1 + $0x1498] sm:$0xff]
  %v743 = vld [vmem:[%s1 + $0x14a0] sm:$0xff]
  %v744 = vld [vmem:[%s1 + $0x14a8] sm:$0xff]
  %v745 = vld [vmem:[%s1 + $0x14b0] sm:$0xff]
  %v746 = vld [vmem:[%s1 + $0x14b8] sm:$0xff]
  %v747 = vld [vmem:[%s1 + $0x14c0] sm:$0xff]
  %v748 = vld [vmem:[%s1 + $0x14c8] sm:$0xff]
  %v749 = vld [vmem:[%s1 + $0x14d0] sm:$0xff]
  %v750 = vld [vmem:[%s1 + $0x14d8] sm:$0xff]
  %v751 = vld [vmem:[%s1 + $0x14e0] sm:$0xff]
  %v752 = vld [vmem:[%s1 + $0x14e8] sm:$0xff]
  %v753 = vld [vmem:[%s1 + $0x14f0] sm:$0xff]
  %v754 = vld [vmem:[%s1 + $0x14f8] sm:$0xff]
  %v755 = vld [vmem:[%s1 + $0x1500] sm:$0xff]
  %v756 = vld [vmem:[%s1 + $0x1508] sm:$0xff]
  %v757 = vld [vmem:[%s1 + $0x1510] sm:$0xff]
  %v758 = vld [vmem:[%s1 + $0x1518] sm:$0xff]
  %v759 = vld [vmem:[%s1 + $0x1520] sm:$0xff]
  %v760 = vld [vmem:[%s1 + $0x1528] sm:$0xff]
  %v761 = vld [vmem:[%s1 + $0x1530] sm:$0xff]
  %v762 = vld [vmem:[%s1 + $0x1538] sm:$0xff]
  %v763 = vld [vmem:[%s1 + $0x1540] sm:$0xff]
  %v764 = vld [vmem:[%s1 + $0x1548] sm:$0xff]
  %v765 = vld [vmem:[%s1 + $0x1550] sm:$0xff]
  %v766 = vld [vmem:[%s1 + $0x1558] sm:$0xff]
  %v767 = vld [vmem:[%s1 + $0x1560] sm:$0xff]
  %v768 = vld [vmem:[%s1 + $0x1568] sm:$0xff]
  %v769 = vld [vmem:[%s1 + $0x1570] sm:$0xff]
  %v770 = vld [vmem:[%s1 + $0x1578] sm:$0xff]
  %v771 = vld [vmem:[%s1 + $0x1580] sm:$0xff]
  %v772 = vld [vmem:[%s1 + $0x1588] sm:$0xff]
  %v773 = vld [vmem:[%s1 + $0x1590] sm:$0xff]
  %v774 = vld [vmem:[%s1 + $0x1598] sm:$0xff]
  %v775 = vld [vmem:[%s1 + $0x15a0] sm:$0xff]
  %v776 = vld [vmem:[%s1 + $0x15a8] sm:$0xff]
  %v777 = vld [vmem:[%s1 + $0x15b0] sm:$0xff]
  %v778 = vld [vmem:[%s1 + $0x15b8] sm:$0xff]
  %v779 = vld [vmem:[%s1 + $0x15c0] sm:$0xff]
  %v780 = vld [vmem:[%s1 + $0x15c8] sm:$0xff]
  %v781 = vld [vmem:[%s1 + $0x15d0] sm:$0xff]
  %v782 = vld [vmem:[%s1 + $0x15d8] sm:$0xff]
  %v783 = vld [vmem:[%s1 + $0x15e0] sm:$0xff]
  %v784 = vld [vmem:[%s1 + $0x15e8] sm:$0xff]
  %v785 = vld [vmem:[%s1 + $0x15f0] sm:$0xff]
  %v786 = vld [vmem:[%s1 + $0x15f8] sm:$0xff]
  %v787 = vld [vmem:[%s1 + $0x1600] sm:$0xff]
  %v788 = vld [vmem:[%s1 + $0x1608] sm:$0xff]
  %v789 = vld [vmem:[%s1 + $0x1610] sm:$0xff]
  %v790 = vld [vmem:[%s1 + $0x1618] sm:$0xff]
  %v791 = vld [vmem:[%s1 + $0x1620] sm:$0xff]
  %v792 = vld [vmem:[%s1 + $0x1628] sm:$0xff]
  %v793 = vld [vmem:[%s1 + $0x1630] sm:$0xff]
  %v794 = vld [vmem:[%s1 + $0x1638] sm:$0xff]
  %v795 = vld [vmem:[%s1 + $0x1640] sm:$0xff]
  %v796 = vld [vmem:[%s1 + $0x1648] sm:$0xff]
  %v797 = vld [vmem:[%s1 + $0x1650] sm:$0xff]
  %v798 = vld [vmem:[%s1 + $0x1658] sm:$0xff]
  %v799 = vld [vmem:[%s1 + $0x1660] sm:$0xff]
  %v800 = vld [vmem:[%s1 + $0x1668] sm:$0xff]
  %v801 = vld [vmem:[%s1 + $0x1670] sm:$0xff]
  %v802 = vld [vmem:[%s1 + $0x1678] sm:$0xff]
  %v803 = vld [vmem:[%s1 + $0x1680] sm:$0xff]
  %v804 = vld [vmem:[%s1 + $0x1688] sm:$0xff]
  %v805 = vld [vmem:[%s1 + $0x1690] sm:$0xff]
  %v806 = vld [vmem:[%s1 + $0x1698] sm:$0xff]
  %v807 = vld [vmem:[%s1 + $0x16a0] sm:$0xff]
  %v808 = vld [vmem:[%s1 + $0x16a8] sm:$0xff]
  %v809 = vld [vmem:[%s1 + $0x16b0] sm:$0xff]
  %v810 = vld [vmem:[%s1 + $0x16b8] sm:$0xff]
  %v811 = vld [vmem:[%s1 + $0x16c0] sm:$0xff]
  %v812 = vld [vmem:[%s1 + $0x16c8] sm:$0xff]
  %v813 = vld [vmem:[%s1 + $0x16d0] sm:$0xff]
  %v814 = vld [vmem:[%s1 + $0x16d8] sm:$0xff]
  %v815 = vld [vmem:[%s1 + $0x16e0] sm:$0xff]
  %v816 = vld [vmem:[%s1 + $0x16e8] sm:$0xff]
  %v817 = vld [vmem:[%s1 + $0x16f0] sm:$0xff]
  %v818 = vld [vmem:[%s1 + $0x16f8] sm:$0xff]
  %v819 = vld [vmem:[%s1 + $0x1700] sm:$0xff]
  %v820 = vld [vmem:[%s1 + $0x1708] sm:$0xff]
  %v821 = vld [vmem:[%s1 + $0x1710] sm:$0xff]
  %v822 = vld [vmem:[%s1 + $0x1718] sm:$0xff]
  %v823 = vld [vmem:[%s1 + $0x1720] sm:$0xff]
  %v824 = vld [vmem:[%s1 + $0x1728] sm:$0xff]
  %v825 = vld [vmem:[%s1 + $0x1730] sm:$0xff]
  %v826 = vld [vmem:[%s1 + $0x1738] sm:$0xff]
  %v827 = vld [vmem:[%s1 + $0x1740] sm:$0xff]
  %v828 = vld [vmem:[%s1 + $0x1748] sm:$0xff]
  %v829 = vld [vmem:[%s1 + $0x1750] sm:$0xff]
  %v830 = vld [vmem:[%s1 + $0x1758] sm:$0xff]
  %v831 = vld [vmem:[%s1 + $0x1760] sm:$0xff]
  %v832 = vld [vmem:[%s1 + $0x1768] sm:$0xff]
  %v833 = vld [vmem:[%s1 + $0x1770] sm:$0xff]
  %v834 = vld [vmem:[%s1 + $0x1778] sm:$0xff]
  %v835 = vld [vmem:[%s1 + $0x1780] sm:$0xff]
  %v836 = vld [vmem:[%s1 + $0x1788] sm:$0xff]
  %v837 = vld [vmem:[%s1 + $0x1790] sm:$0xff]
  %v838 = vld [vmem:[%s1 + $0x1798] sm:$0xff]
  %v839 = vld [vmem:[%s1 + $0x17a0] sm:$0xff]
  %v840 = vld [vmem:[%s1 + $0x17a8] sm:$0xff]
  %v841 = vld [vmem:[%s1 + $0x17b0] sm:$0xff]
  %v842 = vld [vmem:[%s1 + $0x17b8] sm:$0xff]
  %v843 = vld [vmem:[%s1 + $0x17c0] sm:$0xff]
  %v844 = vld [vmem:[%s1 + $0x17c8] sm:$0xff]
  %v845 = vld [vmem:[%s1 + $0x17d0] sm:$0xff]
  %v846 = vld [vmem:[%s1 + $0x17d8] sm:$0xff]
  %v847 = vld [vmem:[%s1 + $0x17e0] sm:$0xff]
  %v848 = vld [vmem:[%s1 + $0x17e8] sm:$0xff]
  %v849 = vld [vmem:[%s1 + $0x17f0] sm:$0xff]
  %v850 = vld [vmem:[%s1 + $0x17f8] sm:$0xff]
  %v851 = vld [vmem:[%s1 + $0x1800] sm:$0xff]
  %v852 = vld [vmem:[%s1 + $0x1808] sm:$0xff]
  %v853 = vld [vmem:[%s1 + $0x1810] sm:$0xff]
  %v854 = vld [vmem:[%s1 + $0x1818] sm:$0xff]
  %v855 = vld [vmem:[%s1 + $0x1820] sm:$0xff]
  %v856 = vld [vmem:[%s1 + $0x1828] sm:$0xff]
  %v857 = vld [vmem:[%s1 + $0x1830] sm:$0xff]
  %v858 = vld [vmem:[%s1 + $0x1838] sm:$0xff]
  %v859 = vld [vmem:[%s1 + $0x1840] sm:$0xff]
  %v860 = vld [vmem:[%s1 + $0x1848] sm:$0xff]
  %v861 = vld [vmem:[%s1 + $0x1850] sm:$0xff]
  %v862 = vld [vmem:[%s1 + $0x1858] sm:$0xff]
  %v863 = vld [vmem:[%s1 + $0x1860] sm:$0xff]
  %v864 = vld [vmem:[%s1 + $0x1868] sm:$0xff]
  %v865 = vld [vmem:[%s1 + $0x1870] sm:$0xff]
  %v866 = vld [vmem:[%s1 + $0x1878] sm:$0xff]
  %v867 = vld [vmem:[%s1 + $0x1880] sm:$0xff]
  %v868 = vld [vmem:[%s1 + $0x1888] sm:$0xff]
  %v869 = vld [vmem:[%s1 + $0x1890] sm:$0xff]
  %v870 = vld [vmem:[%s1 + $0x1898] sm:$0xff]
  %v871 = vld [vmem:[%s1 + $0x18a0] sm:$0xff]
  %v872 = vld [vmem:[%s1 + $0x18a8] sm:$0xff]
  %v873 = vld [vmem:[%s1 + $0x18b0] sm:$0xff]
  %v874 = vld [vmem:[%s1 + $0x18b8] sm:$0xff]
  %v875 = vld [vmem:[%s1 + $0x18c0] sm:$0xff]
  %v876 = vld [vmem:[%s1 + $0x18c8] sm:$0xff]
  %v877 = vld [vmem:[%s1 + $0x18d0] sm:$0xff]
  %v878 = vld [vmem:[%s1 + $0x18d8] sm:$0xff]
  %v879 = vld [vmem:[%s1 + $0x18e0] sm:$0xff]
  %v880 = vld [vmem:[%s1 + $0x18e8] sm:$0xff]
  %v881 = vld [vmem:[%s1 + $0x18f0] sm:$0xff]
  %v882 = vld [vmem:[%s1 + $0x18f8] sm:$0xff]
  %v883 = vld [vmem:[%s1 + $0x1900] sm:$0xff]
  %v884 = vld [vmem:[%s1 + $0x1908] sm:$0xff]
  %v885 = vld [vmem:[%s1 + $0x1910] sm:$0xff]
  %v886 = vld [vmem:[%s1 + $0x1918] sm:$0xff]
  %v887 = vld [vmem:[%s1 + $0x1920] sm:$0xff]
  %v888 = vld [vmem:[%s1 + $0x1928] sm:$0xff]
  %v889 = vld [vmem:[%s1 + $0x1930] sm:$0xff]
  %v890 = vld [vmem:[%s1 + $0x1938] sm:$0xff]
  %v891 = vld [vmem:[%s1 + $0x1940] sm:$0xff]
  %v892 = vld [vmem:[%s1 + $0x1948] sm:$0xff]
  %v893 = vld [vmem:[%s1 + $0x1950] sm:$0xff]
  %v894 = vld [vmem:[%s1 + $0x1958] sm:$0xff]
  %v895 = vld [vmem:[%s1 + $0x1960] sm:$0xff]
  %v896 = vld [vmem:[%s1 + $0x1968] sm:$0xff]
  %v897 = vld [vmem:[%s1 + $0x1970] sm:$0xff]
  %v898 = vld [vmem:[%s1 + $0x1978] sm:$0xff]
  %v899 = vld [vmem:[%s1 + $0x1980] sm:$0xff]
  %v900 = vld [vmem:[%s1 + $0x1988] sm:$0xff]
  %v901 = vld [vmem:[%s1 + $0x1990] sm:$0xff]
  %v902 = vld [vmem:[%s1 + $0x1998] sm:$0xff]
  %v903 = vld [vmem:[%s1 + $0x19a0] sm:$0xff]
  %v904 = vld [vmem:[%s1 + $0x19a8] sm:$0xff]
  %v905 = vld [vmem:[%s1 + $0x19b0] sm:$0xff]
  %v906 = vld [vmem:[%s1 + $0x19b8] sm:$0xff]
  %v907 = vld [vmem:[%s1 + $0x19c0] sm:$0xff]
  %v908 = vld [vmem:[%s1 + $0x19c8] sm:$0xff]
  %v909 = vld [vmem:[%s1 + $0x19d0] sm:$0xff]
  %v910 = vld [vmem:[%s1 + $0x19d8] sm:$0xff]
  %v911 = vld [vmem:[%s1 + $0x19e0] sm:$0xff]
  %v912 = vld [vmem:[%s1 + $0x19e8] sm:$0xff]
  %v913 = vld [vmem:[%s1 + $0x19f0] sm:$0xff]
  %v914 = vld [vmem:[%s1 + $0x19f8] sm:$0xff]
  %v915 = vld [vmem:[%s1 + $0x1a00] sm:$0xff]
  %v916 = vld [vmem:[%s1 + $0x1a08] sm:$0xff]
  %v917 = vld [vmem:[%s1 + $0x1a10] sm:$0xff]
  %v918 = vld [vmem:[%s1 + $0x1a18] sm:$0xff]
  %v919 = vld [vmem:[%s1 + $0x1a20] sm:$0xff]
  %v920 = vld [vmem:[%s1 + $0x1a28] sm:$0xff]
  %v921 = vld [vmem:[%s1 + $0x1a30] sm:$0xff]
  %v922 = vld [vmem:[%s1 + $0x1a38] sm:$0xff]
  %v923 = vld [vmem:[%s1 + $0x1a40] sm:$0xff]
  %v924 = vld [vmem:[%s1 + $0x1a48] sm:$0xff]
  %v925 = vld [vmem:[%s1 + $0x1a50] sm:$0xff]
  %v926 = vld [vmem:[%s1 + $0x1a58] sm:$0xff]
  %v927 = vld [vmem:[%s1 + $0x1a60] sm:$0xff]
  %v928 = vld [vmem:[%s1 + $0x1a68] sm:$0xff]
  %v929 = vld [vmem:[%s1 + $0x1a70] sm:$0xff]
  %v930 = vld [vmem:[%s1 + $0x1a78] sm:$0xff]
  %v931 = vld [vmem:[%s1 + $0x1a80] sm:$0xff]
  %v932 = vld [vmem:[%s1 + $0x1a88] sm:$0xff]
  %v933 = vld [vmem:[%s1 + $0x1a90] sm:$0xff]
  %v934 = vld [vmem:[%s1 + $0x1a98] sm:$0xff]
  %v935 = vld [vmem:[%s1 + $0x1aa0] sm:$0xff]
  %v936 = vld [vmem:[%s1 + $0x1aa8] sm:$0xff]
  %v937 = vld [vmem:[%s1 + $0x1ab0] sm:$0xff]
  %v938 = vld [vmem:[%s1 + $0x1ab8] sm:$0xff]
  %v939 = vld [vmem:[%s1 + $0x1ac0] sm:$0xff]
  %v940 = vld [vmem:[%s1 + $0x1ac8] sm:$0xff]
  %v941 = vld [vmem:[%s1 + $0x1ad0] sm:$0xff]
  %v942 = vld [vmem:[%s1 + $0x1ad8] sm:$0xff]
  %v943 = vld [vmem:[%s1 + $0x1ae0] sm:$0xff]
  %v944 = vld [vmem:[%s1 + $0x1ae8] sm:$0xff]
  %v945 = vld [vmem:[%s1 + $0x1af0] sm:$0xff]
  %v946 = vld [vmem:[%s1 + $0x1af8] sm:$0xff]
  %v947 = vld [vmem:[%s1 + $0x1b00] sm:$0xff]
  %v948 = vld [vmem:[%s1 + $0x1b08] sm:$0xff]
  %v949 = vld [vmem:[%s1 + $0x1b10] sm:$0xff]
  %v950 = vld [vmem:[%s1 + $0x1b18] sm:$0xff]
  %v951 = vld [vmem:[%s1 + $0x1b20] sm:$0xff]
  %v952 = vld [vmem:[%s1 + $0x1b28] sm:$0xff]
  %v953 = vld [vmem:[%s1 + $0x1b30] sm:$0xff]
  %v954 = vld [vmem:[%s1 + $0x1b38] sm:$0xff]
  %v955 = vld [vmem:[%s1 + $0x1b40] sm:$0xff]
  %v956 = vld [vmem:[%s1 + $0x1b48] sm:$0xff]
  %v957 = vld [vmem:[%s1 + $0x1b50] sm:$0xff]
  %v958 = vld [vmem:[%s1 + $0x1b58] sm:$0xff]
  %v959 = vld [vmem:[%s1 + $0x1b60] sm:$0xff]
  %v960 = vld [vmem:[%s1 + $0x1b68] sm:$0xff]
  %v961 = vld [vmem:[%s1 + $0x1b70] sm:$0xff]
  %v962 = vld [vmem:[%s1 + $0x1b78] sm:$0xff]
  %v963 = vld [vmem:[%s1 + $0x1b80] sm:$0xff]
  %v964 = vld [vmem:[%s1 + $0x1b88] sm:$0xff]
  %v965 = vld [vmem:[%s1 + $0x1b90] sm:$0xff]
  %v966 = vld [vmem:[%s1 + $0x1b98] sm:$0xff]
  %v967 = vld [vmem:[%s1 + $0x1ba0] sm:$0xff]
  %v968 = vld [vmem:[%s1 + $0x1ba8] sm:$0xff]
  %v969 = vld [vmem:[%s1 + $0x1bb0] sm:$0xff]
  %v970 = vld [vmem:[%s1 + $0x1bb8] sm:$0xff]
  %v971 = vld [vmem:[%s1 + $0x1bc0] sm:$0xff]
  %v972 = vld [vmem:[%s1 + $0x1bc8] sm:$0xff]
  %v973 = vld [vmem:[%s1 + $0x1bd0] sm:$0xff]
  %v974 = vld [vmem:[%s1 + $0x1bd8] sm:$0xff]
  %v975 = vld [vmem:[%s1 + $0x1be0] sm:$0xff]
  %v976 = vld [vmem:[%s1 + $0x1be8] sm:$0xff]
  %v977 = vld [vmem:[%s1 + $0x1bf0] sm:$0xff]
  %v978 = vld [vmem:[%s1 + $0x1bf8] sm:$0xff]
  %v979 = vld [vmem:[%s1 + $0x1c00] sm:$0xff]
  %v980 = vld [vmem:[%s1 + $0x1c08] sm:$0xff]
  %v981 = vld [vmem:[%s1 + $0x1c10] sm:$0xff]
  %v982 = vld [vmem:[%s1 + $0x1c18] sm:$0xff]
  %v983 = vld [vmem:[%s1 + $0x1c20] sm:$0xff]
  %v984 = vld [vmem:[%s1 + $0x1c28] sm:$0xff]
  %v985 = vld [vmem:[%s1 + $0x1c30] sm:$0xff]
  %v986 = vld [vmem:[%s1 + $0x1c38] sm:$0xff]
  %v987 = vld [vmem:[%s1 + $0x1c40] sm:$0xff]
  %v988 = vld [vmem:[%s1 + $0x1c48] sm:$0xff]
  %v989 = vld [vmem:[%s1 + $0x1c50] sm:$0xff]
  %v990 = vld [vmem:[%s1 + $0x1c58] sm:$0xff]
  %v991 = vld [vmem:[%s1 + $0x1c60] sm:$0xff]
  %v992 = vld [vmem:[%s1 + $0x1c68] sm:$0xff]
  %v993 = vld [vmem:[%s1 + $0x1c70] sm:$0xff]
  %v994 = vld [vmem:[%s1 + $0x1c78] sm:$0xff]
  %v995 = vld [vmem:[%s1 + $0x1c80] sm:$0xff]
  %v996 = vld [vmem:[%s1 + $0x1c88] sm:$0xff]
  %v997 = vld [vmem:[%s1 + $0x1c90] sm:$0xff]
  %v998 = vld [vmem:[%s1 + $0x1c98] sm:$0xff]
  %v999 = vld [vmem:[%s1 + $0x1ca0] sm:$0xff]
  %v1000 = vld [vmem:[%s1 + $0x1ca8] sm:$0xff]
  %v1001 = vld [vmem:[%s1 + $0x1cb0] sm:$0xff]
  %v1002 = vld [vmem:[%s1 + $0x1cb8] sm:$0xff]
  %v1003 = vld [vmem:[%s1 + $0x1cc0] sm:$0xff]
  %v1004 = vld [vmem:[%s1 + $0x1cc8] sm:$0xff]
  %v1005 = vld [vmem:[%s1 + $0x1cd0] sm:$0xff]
  %v1006 = vld [vmem:[%s1 + $0x1cd8] sm:$0xff]
  %v1007 = vld [vmem:[%s1 + $0x1ce0] sm:$0xff]
  %v1008 = vld [vmem:[%s1 + $0x1ce8] sm:$0xff]
  %v1009 = vld [vmem:[%s1 + $0x1cf0] sm:$0xff]
  %v1010 = vld [vmem:[%s1 + $0x1cf8] sm:$0xff]
  %v1011 = vld [vmem:[%s1 + $0x1d00] sm:$0xff]
  %v1012 = vld [vmem:[%s1 + $0x1d08] sm:$0xff]
  %v1013 = vld [vmem:[%s1 + $0x1d10] sm:$0xff]
  %v1014 = vld [vmem:[%s1 + $0x1d18] sm:$0xff]
  %v1015 = vld [vmem:[%s1 + $0x1d20] sm:$0xff]
  %v1016 = vld [vmem:[%s1 + $0x1d28] sm:$0xff]
  %v1017 = vld [vmem:[%s1 + $0x1d30] sm:$0xff]
  %v1018 = vld [vmem:[%s1 + $0x1d38] sm:$0xff]
  %v1019 = vld [vmem:[%s1 + $0x1d40] sm:$0xff]
  %v1020 = vld [vmem:[%s1 + $0x1d48] sm:$0xff]
  %v1021 = vld [vmem:[%s1 + $0x1d50] sm:$0xff]
  %v1022 = vld [vmem:[%s1 + $0x1d58] sm:$0xff]
  %v1023 = vld [vmem:[%s1 + $0x1d60] sm:$0xff]
  %v1024 = vld [vmem:[%s1 + $0x1d68] sm:$0xff]
  %v1025 = vld [vmem:[%s1 + $0x1d70] sm:$0xff]
  %v1026 = vld [vmem:[%s1 + $0x1d78] sm:$0xff]
  %v1027 = vld [vmem:[%s1 + $0x1d80] sm:$0xff]
  %v1028 = vld [vmem:[%s1 + $0x1d88] sm:$0xff]
  %v1029 = vld [vmem:[%s1 + $0x1d90] sm:$0xff]
  %v1030 = vld [vmem:[%s1 + $0x1d98] sm:$0xff]
  %v1031 = vld [vmem:[%s1 + $0x1da0] sm:$0xff]
  %v1032 = vld [vmem:[%s1 + $0x1da8] sm:$0xff]
  %v1033 = vld [vmem:[%s1 + $0x1db0] sm:$0xff]
  %v1034 = vld [vmem:[%s1 + $0x1db8] sm:$0xff]
  %v1035 = vld [vmem:[%s1 + $0x1dc0] sm:$0xff]
  %v1036 = vld [vmem:[%s1 + $0x1dc8] sm:$0xff]
  %v1037 = vld [vmem:[%s1 + $0x1dd0] sm:$0xff]
  %v1038 = vld [vmem:[%s1 + $0x1dd8] sm:$0xff]
  %v1039 = vld [vmem:[%s1 + $0x1de0] sm:$0xff]
  %v1040 = vld [vmem:[%s1 + $0x1de8] sm:$0xff]
  %v1041 = vld [vmem:[%s1 + $0x1df0] sm:$0xff]
  %v1042 = vld [vmem:[%s1 + $0x1df8] sm:$0xff]
  %v1043 = vld [vmem:[%s1 + $0x1e00] sm:$0xff]
  %v1044 = vld [vmem:[%s1 + $0x1e08] sm:$0xff]
  %v1045 = vld [vmem:[%s1 + $0x1e10] sm:$0xff]
  %v1046 = vld [vmem:[%s1 + $0x1e18] sm:$0xff]
  %v1047 = vld [vmem:[%s1 + $0x1e20] sm:$0xff]
  %v1048 = vld [vmem:[%s1 + $0x1e28] sm:$0xff]
  %v1049 = vld [vmem:[%s1 + $0x1e30] sm:$0xff]
  %v1050 = vld [vmem:[%s1 + $0x1e38] sm:$0xff]
  %v1051 = vld [vmem:[%s1 + $0x1e40] sm:$0xff]
  %v1052 = vld [vmem:[%s1 + $0x1e48] sm:$0xff]
  %v1053 = vld [vmem:[%s1 + $0x1e50] sm:$0xff]
  %v1054 = vld [vmem:[%s1 + $0x1e58] sm:$0xff]
  %v1055 = vld [vmem:[%s1 + $0x1e60] sm:$0xff]
  %v1056 = vld [vmem:[%s1 + $0x1e68] sm:$0xff]
  %v1057 = vld [vmem:[%s1 + $0x1e70] sm:$0xff]
  %v1058 = vld [vmem:[%s1 + $0x1e78] sm:$0xff]
  %v1059 = vld [vmem:[%s1 + $0x1e80] sm:$0xff]
  %v1060 = vld [vmem:[%s1 + $0x1e88] sm:$0xff]
  %v1061 = vld [vmem:[%s1 + $0x1e90] sm:$0xff]
  %v1062 = vld [vmem:[%s1 + $0x1e98] sm:$0xff]
  %v1063 = vld [vmem:[%s1 + $0x1ea0] sm:$0xff]
  %v1064 = vld [vmem:[%s1 + $0x1ea8] sm:$0xff]
  %v1065 = vld [vmem:[%s1 + $0x1eb0] sm:$0xff]
  %v1066 = vld [vmem:[%s1 + $0x1eb8] sm:$0xff]
  %v1067 = vld [vmem:[%s1 + $0x1ec0] sm:$0xff]
  %v1068 = vld [vmem:[%s1 + $0x1ec8] sm:$0xff]
  %v1069 = vld [vmem:[%s1 + $0x1ed0] sm:$0xff]
  %v1070 = vld [vmem:[%s1 + $0x1ed8] sm:$0xff]
  %v1071 = vld [vmem:[%s1 + $0x1ee0] sm:$0xff]
  %v1072 = vld [vmem:[%s1 + $0x1ee8] sm:$0xff]
  %v1073 = vld [vmem:[%s1 + $0x1ef0] sm:$0xff]
  %v1074 = vld [vmem:[%s1 + $0x1ef8] sm:$0xff]
  %v1075 = vld [vmem:[%s1 + $0x1f00] sm:$0xff]
  %v1076 = vld [vmem:[%s1 + $0x1f08] sm:$0xff]
  %v1077 = vld [vmem:[%s1 + $0x1f10] sm:$0xff]
  %v1078 = vld [vmem:[%s1 + $0x1f18] sm:$0xff]
  %v1079 = vld [vmem:[%s1 + $0x1f20] sm:$0xff]
  %v1080 = vld [vmem:[%s1 + $0x1f28] sm:$0xff]
  %v1081 = vld [vmem:[%s1 + $0x1f30] sm:$0xff]
  %v1082 = vld [vmem:[%s1 + $0x1f38] sm:$0xff]
  %v1083 = vld [vmem:[%s1 + $0x1f40] sm:$0xff]
  %v1084 = vld [vmem:[%s1 + $0x1f48] sm:$0xff]
  %v1085 = vld [vmem:[%s1 + $0x1f50] sm:$0xff]
  %v1086 = vld [vmem:[%s1 + $0x1f58] sm:$0xff]
  %v1087 = vld [vmem:[%s1 + $0x1f60] sm:$0xff]
  %v1088 = vld [vmem:[%s1 + $0x1f68] sm:$0xff]
  %v1089 = vld [vmem:[%s1 + $0x1f70] sm:$0xff]
  %v1090 = vld [vmem:[%s1 + $0x1f78] sm:$0xff]
  %v1091 = vld [vmem:[%s1 + $0x1f80] sm:$0xff]
  %v1092 = vld [vmem:[%s1 + $0x1f88] sm:$0xff]
  %v1093 = vld [vmem:[%s1 + $0x1f90] sm:$0xff]
  %v1094 = vld [vmem:[%s1 + $0x1f98] sm:$0xff]
  %v1095 = vld [vmem:[%s1 + $0x1fa0] sm:$0xff]
  %v1096 = vld [vmem:[%s1 + $0x1fa8] sm:$0xff]
  %v1097 = vld [vmem:[%s1 + $0x1fb0] sm:$0xff]
  %v1098 = vld [vmem:[%s1 + $0x1fb8] sm:$0xff]
  %v1099 = vld [vmem:[%s1 + $0x1fc0] sm:$0xff]
  %v1100 = vld [vmem:[%s1 + $0x1fc8] sm:$0xff]
  %v1101 = vld [vmem:[%s1 + $0x1fd0] sm:$0xff]
  %v1102 = vld [vmem:[%s1 + $0x1fd8] sm:$0xff]
  %v1103 = vld [vmem:[%s1 + $0x1fe0] sm:$0xff]
  %v1104 = vld [vmem:[%s1 + $0x1fe8] sm:$0xff]
  %v1105 = vld [vmem:[%s1 + $0x1ff0] sm:$0xff]
  %v1106 = vld [vmem:[%s1 + $0x1ff8] sm:$0xff]
  %v1107 = vld [vmem:[%s1 + $0x2000] sm:$0xff]
  %v1108 = vld [vmem:[%s1 + $0x2008] sm:$0xff]
  %v1109 = vld [vmem:[%s1 + $0x2010] sm:$0xff]
  %v1110 = vld [vmem:[%s1 + $0x2018] sm:$0xff]
  %v1111 = vld [vmem:[%s1 + $0x2020] sm:$0xff]
  %v1112 = vld [vmem:[%s1 + $0x2028] sm:$0xff]
  %v1113 = vld [vmem:[%s1 + $0x2030] sm:$0xff]
  %v1114 = vld [vmem:[%s1 + $0x2038] sm:$0xff]
  %v1115 = vld [vmem:[%s1 + $0x2040] sm:$0xff]
  %v1116 = vld [vmem:[%s1 + $0x2048] sm:$0xff]
  %v1117 = vld [vmem:[%s1 + $0x2050] sm:$0xff]
  %v1118 = vld [vmem:[%s1 + $0x2058] sm:$0xff]
  %v1119 = vld [vmem:[%s1 + $0x2060] sm:$0xff]
  %v1120 = vld [vmem:[%s1 + $0x2068] sm:$0xff]
  %v1121 = vld [vmem:[%s1 + $0x2070] sm:$0xff]
  %v1122 = vld [vmem:[%s1 + $0x2078] sm:$0xff]
  %v1123 = vld [vmem:[%s1 + $0x2080] sm:$0xff]
  %v1124 = vld [vmem:[%s1 + $0x2088] sm:$0xff]
  %v1125 = vld [vmem:[%s1 + $0x2090] sm:$0xff]
  %v1126 = vld [vmem:[%s1 + $0x2098] sm:$0xff]
  %v1127 = vld [vmem:[%s1 + $0x20a0] sm:$0xff]
  %v1128 = vld [vmem:[%s1 + $0x20a8] sm:$0xff]
  %v1129 = vld [vmem:[%s1 + $0x20b0] sm:$0xff]
  %v1130 = vld [vmem:[%s1 + $0x20b8] sm:$0xff]
  %v1131 = vld [vmem:[%s1 + $0x20c0] sm:$0xff]
  %v1132 = vld [vmem:[%s1 + $0x20c8] sm:$0xff]
  %v1133 = vld [vmem:[%s1 + $0x20d0] sm:$0xff]
  %v1134 = vld [vmem:[%s1 + $0x20d8] sm:$0xff]
  %v1135 = vld [vmem:[%s1 + $0x20e0] sm:$0xff]
  %v1136 = vld [vmem:[%s1 + $0x20e8] sm:$0xff]
  %v1137 = vld [vmem:[%s1 + $0x20f0] sm:$0xff]
  %v1138 = vld [vmem:[%s1 + $0x20f8] sm:$0xff]
  %v1139 = vld [vmem:[%s1 + $0x2100] sm:$0xff]
  %v1140 = vld [vmem:[%s1 + $0x2108] sm:$0xff]
  %v1141 = vld [vmem:[%s1 + $0x2110] sm:$0xff]
  %v1142 = vld [vmem:[%s1 + $0x2118] sm:$0xff]
  %v1143 = vld [vmem:[%s1 + $0x2120] sm:$0xff]
  %v1144 = vld [vmem:[%s1 + $0x2128] sm:$0xff]
  %v1145 = vld [vmem:[%s1 + $0x2130] sm:$0xff]
  %v1146 = vld [vmem:[%s1 + $0x2138] sm:$0xff]
  %v1147 = vld [vmem:[%s1 + $0x2140] sm:$0xff]
  %v1148 = vld [vmem:[%s1 + $0x2148] sm:$0xff]
  %v1149 = vld [vmem:[%s1 + $0x2150] sm:$0xff]
  %v1150 = vld [vmem:[%s1 + $0x2158] sm:$0xff]
  %v1151 = vld [vmem:[%s1 + $0x2160] sm:$0xff]
  %v1152 = vld [vmem:[%s1 + $0x2168] sm:$0xff]
  %v1153 = vld [vmem:[%s1 + $0x2170] sm:$0xff]
  %v1154 = vld [vmem:[%s1 + $0x2178] sm:$0xff]
  %v1155 = vld [vmem:[%s1 + $0x2180] sm:$0xff]
  %v1156 = vld [vmem:[%s1 + $0x2188] sm:$0xff]
  %v1157 = vld [vmem:[%s1 + $0x2190] sm:$0xff]
  %v1158 = vld [vmem:[%s1 + $0x2198] sm:$0xff]
  %v1159 = vld [vmem:[%s1 + $0x21a0] sm:$0xff]
  %v1160 = vld [vmem:[%s1 + $0x21a8] sm:$0xff]
  %v1161 = vld [vmem:[%s1 + $0x21b0] sm:$0xff]
  %v1162 = vld [vmem:[%s1 + $0x21b8] sm:$0xff]
  %v1163 = vld [vmem:[%s1 + $0x21c0] sm:$0xff]
  %v1164 = vld [vmem:[%s1 + $0x21c8] sm:$0xff]
  %v1165 = vld [vmem:[%s1 + $0x21d0] sm:$0xff]
  %v1166 = vld [vmem:[%s1 + $0x21d8] sm:$0xff]
  %v1167 = vld [vmem:[%s1 + $0x21e0] sm:$0xff]
  %v1168 = vld [vmem:[%s1 + $0x21e8] sm:$0xff]
  %v1169 = vld [vmem:[%s1 + $0x21f0] sm:$0xff]
  %v1170 = vld [vmem:[%s1 + $0x21f8] sm:$0xff]
  %v1171 = vld [vmem:[%s1 + $0x2200] sm:$0xff]
  %v1172 = vld [vmem:[%s1 + $0x2208] sm:$0xff]
  %v1173 = vld [vmem:[%s1 + $0x2210] sm:$0xff]
  %v1174 = vld [vmem:[%s1 + $0x2218] sm:$0xff]
  %v1175 = vld [vmem:[%s1 + $0x2220] sm:$0xff]
  %v1176 = vld [vmem:[%s1 + $0x2228] sm:$0xff]
  %v1177 = vld [vmem:[%s1 + $0x2230] sm:$0xff]
  %v1178 = vld [vmem:[%s1 + $0x2238] sm:$0xff]
  %v1179 = vld [vmem:[%s1 + $0x2240] sm:$0xff]
  %v1180 = vld [vmem:[%s1 + $0x2248] sm:$0xff]
  %v1181 = vld [vmem:[%s1 + $0x2250] sm:$0xff]
  %v1182 = vld [vmem:[%s1 + $0x2258] sm:$0xff]
  %v1183 = vld [vmem:[%s1 + $0x2260] sm:$0xff]
  %v1184 = vld [vmem:[%s1 + $0x2268] sm:$0xff]
  %v1185 = vld [vmem:[%s1 + $0x2270] sm:$0xff]
  %v1186 = vld [vmem:[%s1 + $0x2278] sm:$0xff]
  %v1187 = vld [vmem:[%s1 + $0x2280] sm:$0xff]
  %v1188 = vld [vmem:[%s1 + $0x2288] sm:$0xff]
  %v1189 = vld [vmem:[%s1 + $0x2290] sm:$0xff]
  %v1190 = vld [vmem:[%s1 + $0x2298] sm:$0xff]
  %v1191 = vld [vmem:[%s1 + $0x22a0] sm:$0xff]
  %v1192 = vld [vmem:[%s1 + $0x22a8] sm:$0xff]
  %v1193 = vld [vmem:[%s1 + $0x22b0] sm:$0xff]
  %v1194 = vld [vmem:[%s1 + $0x22b8] sm:$0xff]
  %v1195 = vld [vmem:[%s1 + $0x22c0] sm:$0xff]
  %v1196 = vld [vmem:[%s1 + $0x22c8] sm:$0xff]
  %v1197 = vld [vmem:[%s1 + $0x22d0] sm:$0xff]
  %v1198 = vld [vmem:[%s1 + $0x22d8] sm:$0xff]
  %v1199 = vld [vmem:[%s1 + $0x22e0] sm:$0xff]
  %v1200 = vld [vmem:[%s1 + $0x22e8] sm:$0xff]
  %v1201 = vld [vmem:[%s1 + $0x22f0] sm:$0xff]
  %v1202 = vld [vmem:[%s1 + $0x22f8] sm:$0xff]
  %v1203 = vld [vmem:[%s1 + $0x2300] sm:$0xff]
  %v1204 = vld [vmem:[%s1 + $0x2308] sm:$0xff]
  %v1205 = vld [vmem:[%s1 + $0x2310] sm:$0xff]
  %v1206 = vld [vmem:[%s1 + $0x2318] sm:$0xff]
  %v1207 = vld [vmem:[%s1 + $0x2320] sm:$0xff]
  %v1208 = vld [vmem:[%s1 + $0x2328] sm:$0xff]
  %v1209 = vld [vmem:[%s1 + $0x2330] sm:$0xff]
  %v1210 = vld [vmem:[%s1 + $0x2338] sm:$0xff]
  %v1211 = vld [vmem:[%s1 + $0x2340] sm:$0xff]
  %v1212 = vld [vmem:[%s1 + $0x2348] sm:$0xff]
  %v1213 = vld [vmem:[%s1 + $0x2350] sm:$0xff]
  %v1214 = vld [vmem:[%s1 + $0x2358] sm:$0xff]
  %v1215 = vld [vmem:[%s1 + $0x2360] sm:$0xff]
  %v1216 = vld [vmem:[%s1 + $0x2368] sm:$0xff]
  %v1217 = vld [vmem:[%s1 + $0x2370] sm:$0xff]
  %v1218 = vld [vmem:[%s1 + $0x2378] sm:$0xff]
  %v1219 = vld [vmem:[%s1 + $0x2380] sm:$0xff]
  %v1220 = vld [vmem:[%s1 + $0x2388] sm:$0xff]
  %v1221 = vld [vmem:[%s1 + $0x2390] sm:$0xff]
  %v1222 = vld [vmem:[%s1 + $0x2398] sm:$0xff]
  %v1223 = vld [vmem:[%s1 + $0x23a0] sm:$0xff]
  %v1224 = vld [vmem:[%s1 + $0x23a8] sm:$0xff]
  %v1225 = vld [vmem:[%s1 + $0x23b0] sm:$0xff]
  %v1226 = vld [vmem:[%s1 + $0x23b8] sm:$0xff]
  %v1227 = vld [vmem:[%s1 + $0x23c0] sm:$0xff]
  %v1228 = vld [vmem:[%s1 + $0x23c8] sm:$0xff]
  %v1229 = vld [vmem:[%s1 + $0x23d0] sm:$0xff]
  %v1230 = vld [vmem:[%s1 + $0x23d8] sm:$0xff]
  %v1231 = vld [vmem:[%s1 + $0x23e0] sm:$0xff]
  %v1232 = vld [vmem:[%s1 + $0x23e8] sm:$0xff]
  %v1233 = vld [vmem:[%s1 + $0x23f0] sm:$0xff]
  %v1234 = vld [vmem:[%s1 + $0x23f8] sm:$0xff]
  %1235 = vmatpush.msra.mxu0 %v98
  %1236 = vmatpush.msra.mxu0 %v97
  %1237 = vmatpush.msra.mxu0 %v96
  %1238 = vmatpush.msra.mxu0 %v95
  %1239 = vmatpush.msra.mxu0 %v94
  %1240 = vmatpush.msra.mxu0 %v93
  %1241 = vmatpush.msra.mxu0 %v92
  %1242 = vmatpush.msra.mxu0 %v91
  %1243 = vmatpush.msra.mxu0 %v90
  %1244 = vmatpush.msra.mxu0 %v89
  %1245 = vmatpush.msra.mxu0 %v88
  %1246 = vmatpush.msra.mxu0 %v87
  %1247 = vmatpush.msra.mxu0 %v86
  %1248 = vmatpush.msra.mxu0 %v85
  %1249 = vmatpush.msra.mxu0 %v84
  %1250 = vmatpush.msra.mxu0 %v83
  %1251 = vmatmul.f32.gmra.mxu0 %v11
  %v1252 = vpop.f32.mrf.mxu0
  %v1253 = vadd.f32 0.0, %v1252
  %1254 = vdwg.mxu0
  %1255 = vmatpush.msra.mxu0 %v114
  %1256 = vmatpush.msra.mxu0 %v113
  %1257 = vmatpush.msra.mxu0 %v112
  %1258 = vmatpush.msra.mxu0 %v111
  %1259 = vmatpush.msra.mxu0 %v110
  %1260 = vmatpush.msra.mxu0 %v109
  %1261 = vmatpush.msra.mxu0 %v108
  %1262 = vmatpush.msra.mxu0 %v107
  %1263 = vmatpush.msra.mxu0 %v106
  %1264 = vmatpush.msra.mxu0 %v105
  %1265 = vmatpush.msra.mxu0 %v104
  %1266 = vmatpush.msra.mxu0 %v103
  %1267 = vmatpush.msra.mxu0 %v102
  %1268 = vmatpush.msra.mxu0 %v101
  %1269 = vmatpush.msra.mxu0 %v100
  %1270 = vmatpush.msra.mxu0 %v99
  %1271 = vmatmul.f32.gmra.mxu0 %v12
  %v1272 = vpop.f32.mrf.mxu0
  %v1273 = vadd.f32 0.0, %v1272
  %1274 = vdwg.mxu0
  %1275 = vmatpush.msra.mxu0 %v130
  %1276 = vmatpush.msra.mxu0 %v129
  %1277 = vmatpush.msra.mxu0 %v128
  %1278 = vmatpush.msra.mxu0 %v127
  %1279 = vmatpush.msra.mxu0 %v126
  %1280 = vmatpush.msra.mxu0 %v125
  %1281 = vmatpush.msra.mxu0 %v124
  %1282 = vmatpush.msra.mxu0 %v123
  %1283 = vmatpush.msra.mxu0 %v122
  %1284 = vmatpush.msra.mxu0 %v121
  %1285 = vmatpush.msra.mxu0 %v120
  %1286 = vmatpush.msra.mxu0 %v119
  %1287 = vmatpush.msra.mxu0 %v118
  %1288 = vmatpush.msra.mxu0 %v117
  %1289 = vmatpush.msra.mxu0 %v116
  %1290 = vmatpush.msra.mxu0 %v115
  %1291 = vmatmul.f32.gmra.mxu0 %v13
  %v1292 = vpop.f32.mrf.mxu0
  %v1293 = vadd.f32 0.0, %v1292
  %1294 = vdwg.mxu0
  %1295 = vmatpush.msra.mxu0 %v146
  %1296 = vmatpush.msra.mxu0 %v145
  %1297 = vmatpush.msra.mxu0 %v144
  %1298 = vmatpush.msra.mxu0 %v143
  %1299 = vmatpush.msra.mxu0 %v142
  %1300 = vmatpush.msra.mxu0 %v141
  %1301 = vmatpush.msra.mxu0 %v140
  %1302 = vmatpush.msra.mxu0 %v139
  %1303 = vmatpush.msra.mxu0 %v138
  %1304 = vmatpush.msra.mxu0 %v137
  %1305 = vmatpush.msra.mxu0 %v136
  %1306 = vmatpush.msra.mxu0 %v135
  %1307 = vmatpush.msra.mxu0 %v134
  %1308 = vmatpush.msra.mxu0 %v133
  %1309 = vmatpush.msra.mxu0 %v132
  %1310 = vmatpush.msra.mxu0 %v131
  %1311 = vmatmul.f32.gmra.mxu0 %v14
  %v1312 = vpop.f32.mrf.mxu0
  %v1313 = vadd.f32 0.0, %v1312
  %1314 = vdwg.mxu0
  %1315 = vmatpush.msra.mxu0 %v162
  %1316 = vmatpush.msra.mxu0 %v161
  %1317 = vmatpush.msra.mxu0 %v160
  %1318 = vmatpush.msra.mxu0 %v159
  %1319 = vmatpush.msra.mxu0 %v158
  %1320 = vmatpush.msra.mxu0 %v157
  %1321 = vmatpush.msra.mxu0 %v156
  %1322 = vmatpush.msra.mxu0 %v155
  %1323 = vmatpush.msra.mxu0 %v154
  %1324 = vmatpush.msra.mxu0 %v153
  %1325 = vmatpush.msra.mxu0 %v152
  %1326 = vmatpush.msra.mxu0 %v151
  %1327 = vmatpush.msra.mxu0 %v150
  %1328 = vmatpush.msra.mxu0 %v149
  %1329 = vmatpush.msra.mxu0 %v148
  %1330 = vmatpush.msra.mxu0 %v147
  %1331 = vmatmul.f32.gmra.mxu0 %v15
  %v1332 = vpop.f32.mrf.mxu0
  %v1333 = vadd.f32 0.0, %v1332
  %1334 = vdwg.mxu0
  %1335 = vmatpush.msra.mxu0 %v178
  %1336 = vmatpush.msra.mxu0 %v177
  %1337 = vmatpush.msra.mxu0 %v176
  %1338 = vmatpush.msra.mxu0 %v175
  %1339 = vmatpush.msra.mxu0 %v174
  %1340 = vmatpush.msra.mxu0 %v173
  %1341 = vmatpush.msra.mxu0 %v172
  %1342 = vmatpush.msra.mxu0 %v171
  %1343 = vmatpush.msra.mxu0 %v170
  %1344 = vmatpush.msra.mxu0 %v169
  %1345 = vmatpush.msra.mxu0 %v168
  %1346 = vmatpush.msra.mxu0 %v167
  %1347 = vmatpush.msra.mxu0 %v166
  %1348 = vmatpush.msra.mxu0 %v165
  %1349 = vmatpush.msra.mxu0 %v164
  %1350 = vmatpush.msra.mxu0 %v163
  %1351 = vmatmul.f32.gmra.mxu0 %v16
  %v1352 = vpop.f32.mrf.mxu0
  %v1353 = vadd.f32 0.0, %v1352
  %1354 = vdwg.mxu0
  %1355 = vmatpush.msra.mxu0 %v194
  %1356 = vmatpush.msra.mxu0 %v193
  %1357 = vmatpush.msra.mxu0 %v192
  %1358 = vmatpush.msra.mxu0 %v191
  %1359 = vmatpush.msra.mxu0 %v190
  %1360 = vmatpush.msra.mxu0 %v189
  %1361 = vmatpush.msra.mxu0 %v188
  %1362 = vmatpush.msra.mxu0 %v187
  %1363 = vmatpush.msra.mxu0 %v186
  %1364 = vmatpush.msra.mxu0 %v185
  %1365 = vmatpush.msra.mxu0 %v184
  %1366 = vmatpush.msra.mxu0 %v183
  %1367 = vmatpush.msra.mxu0 %v182
  %1368 = vmatpush.msra.mxu0 %v181
  %1369 = vmatpush.msra.mxu0 %v180
  %1370 = vmatpush.msra.mxu0 %v179
  %1371 = vmatmul.f32.gmra.mxu0 %v17
  %v1372 = vpop.f32.mrf.mxu0
  %v1373 = vadd.f32 0.0, %v1372
  %1374 = vdwg.mxu0
  %1375 = vmatpush.msra.mxu0 %v210
  %1376 = vmatpush.msra.mxu0 %v209
  %1377 = vmatpush.msra.mxu0 %v208
  %1378 = vmatpush.msra.mxu0 %v207
  %1379 = vmatpush.msra.mxu0 %v206
  %1380 = vmatpush.msra.mxu0 %v205
  %1381 = vmatpush.msra.mxu0 %v204
  %1382 = vmatpush.msra.mxu0 %v203
  %1383 = vmatpush.msra.mxu0 %v202
  %1384 = vmatpush.msra.mxu0 %v201
  %1385 = vmatpush.msra.mxu0 %v200
  %1386 = vmatpush.msra.mxu0 %v199
  %1387 = vmatpush.msra.mxu0 %v198
  %1388 = vmatpush.msra.mxu0 %v197
  %1389 = vmatpush.msra.mxu0 %v196
  %1390 = vmatpush.msra.mxu0 %v195
  %1391 = vmatmul.f32.gmra.mxu0 %v18
  %v1392 = vpop.f32.mrf.mxu0
  %v1393 = vadd.f32 0.0, %v1392
  %1394 = vdwg.mxu0
  %1395 = vmatpush.msra.mxu0 %v226
  %1396 = vmatpush.msra.mxu0 %v225
  %1397 = vmatpush.msra.mxu0 %v224
  %1398 = vmatpush.msra.mxu0 %v223
  %1399 = vmatpush.msra.mxu0 %v222
  %1400 = vmatpush.msra.mxu0 %v221
  %1401 = vmatpush.msra.mxu0 %v220
  %1402 = vmatpush.msra.mxu0 %v219
  %1403 = vmatpush.msra.mxu0 %v218
  %1404 = vmatpush.msra.mxu0 %v217
  %1405 = vmatpush.msra.mxu0 %v216
  %1406 = vmatpush.msra.mxu0 %v215
  %1407 = vmatpush.msra.mxu0 %v214
  %1408 = vmatpush.msra.mxu0 %v213
  %1409 = vmatpush.msra.mxu0 %v212
  %1410 = vmatpush.msra.mxu0 %v211
  %1411 = vmatmul.f32.gmra.mxu0 %v19
  %v1412 = vpop.f32.mrf.mxu0
  %v1413 = vadd.f32 0.0, %v1412
  %1414 = vdwg.mxu0
  %1415 = vmatpush.msra.mxu0 %v242
  %1416 = vmatpush.msra.mxu0 %v241
  %1417 = vmatpush.msra.mxu0 %v240
  %1418 = vmatpush.msra.mxu0 %v239
  %1419 = vmatpush.msra.mxu0 %v238
  %1420 = vmatpush.msra.mxu0 %v237
  %1421 = vmatpush.msra.mxu0 %v236
  %1422 = vmatpush.msra.mxu0 %v235
  %1423 = vmatpush.msra.mxu0 %v234
  %1424 = vmatpush.msra.mxu0 %v233
  %1425 = vmatpush.msra.mxu0 %v232
  %1426 = vmatpush.msra.mxu0 %v231
  %1427 = vmatpush.msra.mxu0 %v230
  %1428 = vmatpush.msra.mxu0 %v229
  %1429 = vmatpush.msra.mxu0 %v228
  %1430 = vmatpush.msra.mxu0 %v227
  %1431 = vmatmul.f32.gmra.mxu0 %v20
  %v1432 = vpop.f32.mrf.mxu0
  %v1433 = vadd.f32 0.0, %v1432
  %1434 = vdwg.mxu0
  %1435 = vmatpush.msra.mxu0 %v258
  %1436 = vmatpush.msra.mxu0 %v257
  %1437 = vmatpush.msra.mxu0 %v256
  %1438 = vmatpush.msra.mxu0 %v255
  %1439 = vmatpush.msra.mxu0 %v254
  %1440 = vmatpush.msra.mxu0 %v253
  %1441 = vmatpush.msra.mxu0 %v252
  %1442 = vmatpush.msra.mxu0 %v251
  %1443 = vmatpush.msra.mxu0 %v250
  %1444 = vmatpush.msra.mxu0 %v249
  %1445 = vmatpush.msra.mxu0 %v248
  %1446 = vmatpush.msra.mxu0 %v247
  %1447 = vmatpush.msra.mxu0 %v246
  %1448 = vmatpush.msra.mxu0 %v245
  %1449 = vmatpush.msra.mxu0 %v244
  %1450 = vmatpush.msra.mxu0 %v243
  %1451 = vmatmul.f32.gmra.mxu0 %v21
  %v1452 = vpop.f32.mrf.mxu0
  %v1453 = vadd.f32 0.0, %v1452
  %1454 = vdwg.mxu0
  %1455 = vmatpush.msra.mxu0 %v274
  %1456 = vmatpush.msra.mxu0 %v273
  %1457 = vmatpush.msra.mxu0 %v272
  %1458 = vmatpush.msra.mxu0 %v271
  %1459 = vmatpush.msra.mxu0 %v270
  %1460 = vmatpush.msra.mxu0 %v269
  %1461 = vmatpush.msra.mxu0 %v268
  %1462 = vmatpush.msra.mxu0 %v267
  %1463 = vmatpush.msra.mxu0 %v266
  %1464 = vmatpush.msra.mxu0 %v265
  %1465 = vmatpush.msra.mxu0 %v264
  %1466 = vmatpush.msra.mxu0 %v263
  %1467 = vmatpush.msra.mxu0 %v262
  %1468 = vmatpush.msra.mxu0 %v261
  %1469 = vmatpush.msra.mxu0 %v260
  %1470 = vmatpush.msra.mxu0 %v259
  %1471 = vmatmul.f32.gmra.mxu0 %v22
  %v1472 = vpop.f32.mrf.mxu0
  %v1473 = vadd.f32 0.0, %v1472
  %1474 = vdwg.mxu0
  %1475 = vmatpush.msra.mxu0 %v290
  %1476 = vmatpush.msra.mxu0 %v289
  %1477 = vmatpush.msra.mxu0 %v288
  %1478 = vmatpush.msra.mxu0 %v287
  %1479 = vmatpush.msra.mxu0 %v286
  %1480 = vmatpush.msra.mxu0 %v285
  %1481 = vmatpush.msra.mxu0 %v284
  %1482 = vmatpush.msra.mxu0 %v283
  %1483 = vmatpush.msra.mxu0 %v282
  %1484 = vmatpush.msra.mxu0 %v281
  %1485 = vmatpush.msra.mxu0 %v280
  %1486 = vmatpush.msra.mxu0 %v279
  %1487 = vmatpush.msra.mxu0 %v278
  %1488 = vmatpush.msra.mxu0 %v277
  %1489 = vmatpush.msra.mxu0 %v276
  %1490 = vmatpush.msra.mxu0 %v275
  %1491 = vmatmul.f32.gmra.mxu0 %v23
  %v1492 = vpop.f32.mrf.mxu0
  %v1493 = vadd.f32 0.0, %v1492
  %1494 = vdwg.mxu0
  %1495 = vmatpush.msra.mxu0 %v306
  %1496 = vmatpush.msra.mxu0 %v305
  %1497 = vmatpush.msra.mxu0 %v304
  %1498 = vmatpush.msra.mxu0 %v303
  %1499 = vmatpush.msra.mxu0 %v302
  %1500 = vmatpush.msra.mxu0 %v301
  %1501 = vmatpush.msra.mxu0 %v300
  %1502 = vmatpush.msra.mxu0 %v299
  %1503 = vmatpush.msra.mxu0 %v298
  %1504 = vmatpush.msra.mxu0 %v297
  %1505 = vmatpush.msra.mxu0 %v296
  %1506 = vmatpush.msra.mxu0 %v295
  %1507 = vmatpush.msra.mxu0 %v294
  %1508 = vmatpush.msra.mxu0 %v293
  %1509 = vmatpush.msra.mxu0 %v292
  %1510 = vmatpush.msra.mxu0 %v291
  %1511 = vmatmul.f32.gmra.mxu0 %v24
  %v1512 = vpop.f32.mrf.mxu0
  %v1513 = vadd.f32 0.0, %v1512
  %1514 = vdwg.mxu0
  %1515 = vmatpush.msra.mxu0 %v322
  %1516 = vmatpush.msra.mxu0 %v321
  %1517 = vmatpush.msra.mxu0 %v320
  %1518 = vmatpush.msra.mxu0 %v319
  %1519 = vmatpush.msra.mxu0 %v318
  %1520 = vmatpush.msra.mxu0 %v317
  %1521 = vmatpush.msra.mxu0 %v316
  %1522 = vmatpush.msra.mxu0 %v315
  %1523 = vmatpush.msra.mxu0 %v314
  %1524 = vmatpush.msra.mxu0 %v313
  %1525 = vmatpush.msra.mxu0 %v312
  %1526 = vmatpush.msra.mxu0 %v311
  %1527 = vmatpush.msra.mxu0 %v310
  %1528 = vmatpush.msra.mxu0 %v309
  %1529 = vmatpush.msra.mxu0 %v308
  %1530 = vmatpush.msra.mxu0 %v307
  %1531 = vmatmul.f32.gmra.mxu0 %v25
  %v1532 = vpop.f32.mrf.mxu0
  %v1533 = vadd.f32 0.0, %v1532
  %1534 = vdwg.mxu0
  %1535 = vmatpush.msra.mxu0 %v338
  %1536 = vmatpush.msra.mxu0 %v337
  %1537 = vmatpush.msra.mxu0 %v336
  %1538 = vmatpush.msra.mxu0 %v335
  %1539 = vmatpush.msra.mxu0 %v334
  %1540 = vmatpush.msra.mxu0 %v333
  %1541 = vmatpush.msra.mxu0 %v332
  %1542 = vmatpush.msra.mxu0 %v331
  %1543 = vmatpush.msra.mxu0 %v330
  %1544 = vmatpush.msra.mxu0 %v329
  %1545 = vmatpush.msra.mxu0 %v328
  %1546 = vmatpush.msra.mxu0 %v327
  %1547 = vmatpush.msra.mxu0 %v326
  %1548 = vmatpush.msra.mxu0 %v325
  %1549 = vmatpush.msra.mxu0 %v324
  %1550 = vmatpush.msra.mxu0 %v323
  %1551 = vmatmul.f32.gmra.mxu0 %v26
  %v1552 = vpop.f32.mrf.mxu0
  %v1553 = vadd.f32 0.0, %v1552
  %1554 = vdwg.mxu0
  %1555 = vmatpush.msra.mxu0 %v354
  %1556 = vmatpush.msra.mxu0 %v353
  %1557 = vmatpush.msra.mxu0 %v352
  %1558 = vmatpush.msra.mxu0 %v351
  %1559 = vmatpush.msra.mxu0 %v350
  %1560 = vmatpush.msra.mxu0 %v349
  %1561 = vmatpush.msra.mxu0 %v348
  %1562 = vmatpush.msra.mxu0 %v347
  %1563 = vmatpush.msra.mxu0 %v346
  %1564 = vmatpush.msra.mxu0 %v345
  %1565 = vmatpush.msra.mxu0 %v344
  %1566 = vmatpush.msra.mxu0 %v343
  %1567 = vmatpush.msra.mxu0 %v342
  %1568 = vmatpush.msra.mxu0 %v341
  %1569 = vmatpush.msra.mxu0 %v340
  %1570 = vmatpush.msra.mxu0 %v339
  %1571 = vmatmul.f32.gmra.mxu0 %v27
  %v1572 = vpop.f32.mrf.mxu0
  %v1573 = vadd.f32 0.0, %v1572
  %1574 = vdwg.mxu0
  %1575 = vmatpush.msra.mxu0 %v370
  %1576 = vmatpush.msra.mxu0 %v369
  %1577 = vmatpush.msra.mxu0 %v368
  %1578 = vmatpush.msra.mxu0 %v367
  %1579 = vmatpush.msra.mxu0 %v366
  %1580 = vmatpush.msra.mxu0 %v365
  %1581 = vmatpush.msra.mxu0 %v364
  %1582 = vmatpush.msra.mxu0 %v363
  %1583 = vmatpush.msra.mxu0 %v362
  %1584 = vmatpush.msra.mxu0 %v361
  %1585 = vmatpush.msra.mxu0 %v360
  %1586 = vmatpush.msra.mxu0 %v359
  %1587 = vmatpush.msra.mxu0 %v358
  %1588 = vmatpush.msra.mxu0 %v357
  %1589 = vmatpush.msra.mxu0 %v356
  %1590 = vmatpush.msra.mxu0 %v355
  %1591 = vmatmul.f32.gmra.mxu0 %v28
  %v1592 = vpop.f32.mrf.mxu0
  %v1593 = vadd.f32 0.0, %v1592
  %1594 = vdwg.mxu0
  %1595 = vmatpush.msra.mxu0 %v386
  %1596 = vmatpush.msra.mxu0 %v385
  %1597 = vmatpush.msra.mxu0 %v384
  %1598 = vmatpush.msra.mxu0 %v383
  %1599 = vmatpush.msra.mxu0 %v382
  %1600 = vmatpush.msra.mxu0 %v381
  %1601 = vmatpush.msra.mxu0 %v380
  %1602 = vmatpush.msra.mxu0 %v379
  %1603 = vmatpush.msra.mxu0 %v378
  %1604 = vmatpush.msra.mxu0 %v377
  %1605 = vmatpush.msra.mxu0 %v376
  %1606 = vmatpush.msra.mxu0 %v375
  %1607 = vmatpush.msra.mxu0 %v374
  %1608 = vmatpush.msra.mxu0 %v373
  %1609 = vmatpush.msra.mxu0 %v372
  %1610 = vmatpush.msra.mxu0 %v371
  %1611 = vmatmul.f32.gmra.mxu0 %v29
  %v1612 = vpop.f32.mrf.mxu0
  %v1613 = vadd.f32 0.0, %v1612
  %1614 = vdwg.mxu0
  %1615 = vmatpush.msra.mxu0 %v402
  %1616 = vmatpush.msra.mxu0 %v401
  %1617 = vmatpush.msra.mxu0 %v400
  %1618 = vmatpush.msra.mxu0 %v399
  %1619 = vmatpush.msra.mxu0 %v398
  %1620 = vmatpush.msra.mxu0 %v397
  %1621 = vmatpush.msra.mxu0 %v396
  %1622 = vmatpush.msra.mxu0 %v395
  %1623 = vmatpush.msra.mxu0 %v394
  %1624 = vmatpush.msra.mxu0 %v393
  %1625 = vmatpush.msra.mxu0 %v392
  %1626 = vmatpush.msra.mxu0 %v391
  %1627 = vmatpush.msra.mxu0 %v390
  %1628 = vmatpush.msra.mxu0 %v389
  %1629 = vmatpush.msra.mxu0 %v388
  %1630 = vmatpush.msra.mxu0 %v387
  %1631 = vmatmul.f32.gmra.mxu0 %v30
  %v1632 = vpop.f32.mrf.mxu0
  %v1633 = vadd.f32 0.0, %v1632
  %1634 = vdwg.mxu0
  %1635 = vmatpush.msra.mxu0 %v418
  %1636 = vmatpush.msra.mxu0 %v417
  %1637 = vmatpush.msra.mxu0 %v416
  %1638 = vmatpush.msra.mxu0 %v415
  %1639 = vmatpush.msra.mxu0 %v414
  %1640 = vmatpush.msra.mxu0 %v413
  %1641 = vmatpush.msra.mxu0 %v412
  %1642 = vmatpush.msra.mxu0 %v411
  %1643 = vmatpush.msra.mxu0 %v410
  %1644 = vmatpush.msra.mxu0 %v409
  %1645 = vmatpush.msra.mxu0 %v408
  %1646 = vmatpush.msra.mxu0 %v407
  %1647 = vmatpush.msra.mxu0 %v406
  %1648 = vmatpush.msra.mxu0 %v405
  %1649 = vmatpush.msra.mxu0 %v404
  %1650 = vmatpush.msra.mxu0 %v403
  %1651 = vmatmul.f32.gmra.mxu0 %v31
  %v1652 = vpop.f32.mrf.mxu0
  %v1653 = vadd.f32 0.0, %v1652
  %1654 = vdwg.mxu0
  %1655 = vmatpush.msra.mxu0 %v434
  %1656 = vmatpush.msra.mxu0 %v433
  %1657 = vmatpush.msra.mxu0 %v432
  %1658 = vmatpush.msra.mxu0 %v431
  %1659 = vmatpush.msra.mxu0 %v430
  %1660 = vmatpush.msra.mxu0 %v429
  %1661 = vmatpush.msra.mxu0 %v428
  %1662 = vmatpush.msra.mxu0 %v427
  %1663 = vmatpush.msra.mxu0 %v426
  %1664 = vmatpush.msra.mxu0 %v425
  %1665 = vmatpush.msra.mxu0 %v424
  %1666 = vmatpush.msra.mxu0 %v423
  %1667 = vmatpush.msra.mxu0 %v422
  %1668 = vmatpush.msra.mxu0 %v421
  %1669 = vmatpush.msra.mxu0 %v420
  %1670 = vmatpush.msra.mxu0 %v419
  %1671 = vmatmul.f32.gmra.mxu0 %v32
  %v1672 = vpop.f32.mrf.mxu0
  %v1673 = vadd.f32 0.0, %v1672
  %1674 = vdwg.mxu0
  %1675 = vmatpush.msra.mxu0 %v450
  %1676 = vmatpush.msra.mxu0 %v449
  %1677 = vmatpush.msra.mxu0 %v448
  %1678 = vmatpush.msra.mxu0 %v447
  %1679 = vmatpush.msra.mxu0 %v446
  %1680 = vmatpush.msra.mxu0 %v445
  %1681 = vmatpush.msra.mxu0 %v444
  %1682 = vmatpush.msra.mxu0 %v443
  %1683 = vmatpush.msra.mxu0 %v442
  %1684 = vmatpush.msra.mxu0 %v441
  %1685 = vmatpush.msra.mxu0 %v440
  %1686 = vmatpush.msra.mxu0 %v439
  %1687 = vmatpush.msra.mxu0 %v438
  %1688 = vmatpush.msra.mxu0 %v437
  %1689 = vmatpush.msra.mxu0 %v436
  %1690 = vmatpush.msra.mxu0 %v435
  %1691 = vmatmul.f32.gmra.mxu0 %v33
  %v1692 = vpop.f32.mrf.mxu0
  %v1693 = vadd.f32 0.0, %v1692
  %1694 = vdwg.mxu0
  %1695 = vmatpush.msra.mxu0 %v466
  %1696 = vmatpush.msra.mxu0 %v465
  %1697 = vmatpush.msra.mxu0 %v464
  %1698 = vmatpush.msra.mxu0 %v463
  %1699 = vmatpush.msra.mxu0 %v462
  %1700 = vmatpush.msra.mxu0 %v461
  %1701 = vmatpush.msra.mxu0 %v460
  %1702 = vmatpush.msra.mxu0 %v459
  %1703 = vmatpush.msra.mxu0 %v458
  %1704 = vmatpush.msra.mxu0 %v457
  %1705 = vmatpush.msra.mxu0 %v456
  %1706 = vmatpush.msra.mxu0 %v455
  %1707 = vmatpush.msra.mxu0 %v454
  %1708 = vmatpush.msra.mxu0 %v453
  %1709 = vmatpush.msra.mxu0 %v452
  %1710 = vmatpush.msra.mxu0 %v451
  %1711 = vmatmul.f32.gmra.mxu0 %v34
  %v1712 = vpop.f32.mrf.mxu0
  %v1713 = vadd.f32 0.0, %v1712
  %1714 = vdwg.mxu0
  %1715 = vmatpush.msra.mxu0 %v482
  %1716 = vmatpush.msra.mxu0 %v481
  %1717 = vmatpush.msra.mxu0 %v480
  %1718 = vmatpush.msra.mxu0 %v479
  %1719 = vmatpush.msra.mxu0 %v478
  %1720 = vmatpush.msra.mxu0 %v477
  %1721 = vmatpush.msra.mxu0 %v476
  %1722 = vmatpush.msra.mxu0 %v475
  %1723 = vmatpush.msra.mxu0 %v474
  %1724 = vmatpush.msra.mxu0 %v473
  %1725 = vmatpush.msra.mxu0 %v472
  %1726 = vmatpush.msra.mxu0 %v471
  %1727 = vmatpush.msra.mxu0 %v470
  %1728 = vmatpush.msra.mxu0 %v469
  %1729 = vmatpush.msra.mxu0 %v468
  %1730 = vmatpush.msra.mxu0 %v467
  %1731 = vmatmul.f32.gmra.mxu0 %v35
  %v1732 = vpop.f32.mrf.mxu0
  %v1733 = vadd.f32 0.0, %v1732
  %1734 = vdwg.mxu0
  %1735 = vmatpush.msra.mxu0 %v498
  %1736 = vmatpush.msra.mxu0 %v497
  %1737 = vmatpush.msra.mxu0 %v496
  %1738 = vmatpush.msra.mxu0 %v495
  %1739 = vmatpush.msra.mxu0 %v494
  %1740 = vmatpush.msra.mxu0 %v493
  %1741 = vmatpush.msra.mxu0 %v492
  %1742 = vmatpush.msra.mxu0 %v491
  %1743 = vmatpush.msra.mxu0 %v490
  %1744 = vmatpush.msra.mxu0 %v489
  %1745 = vmatpush.msra.mxu0 %v488
  %1746 = vmatpush.msra.mxu0 %v487
  %1747 = vmatpush.msra.mxu0 %v486
  %1748 = vmatpush.msra.mxu0 %v485
  %1749 = vmatpush.msra.mxu0 %v484
  %1750 = vmatpush.msra.mxu0 %v483
  %1751 = vmatmul.f32.gmra.mxu0 %v36
  %v1752 = vpop.f32.mrf.mxu0
  %v1753 = vadd.f32 0.0, %v1752
  %1754 = vdwg.mxu0
  %1755 = vmatpush.msra.mxu0 %v514
  %1756 = vmatpush.msra.mxu0 %v513
  %1757 = vmatpush.msra.mxu0 %v512
  %1758 = vmatpush.msra.mxu0 %v511
  %1759 = vmatpush.msra.mxu0 %v510
  %1760 = vmatpush.msra.mxu0 %v509
  %1761 = vmatpush.msra.mxu0 %v508
  %1762 = vmatpush.msra.mxu0 %v507
  %1763 = vmatpush.msra.mxu0 %v506
  %1764 = vmatpush.msra.mxu0 %v505
  %1765 = vmatpush.msra.mxu0 %v504
  %1766 = vmatpush.msra.mxu0 %v503
  %1767 = vmatpush.msra.mxu0 %v502
  %1768 = vmatpush.msra.mxu0 %v501
  %1769 = vmatpush.msra.mxu0 %v500
  %1770 = vmatpush.msra.mxu0 %v499
  %1771 = vmatmul.f32.gmra.mxu0 %v37
  %v1772 = vpop.f32.mrf.mxu0
  %v1773 = vadd.f32 0.0, %v1772
  %1774 = vdwg.mxu0
  %1775 = vmatpush.msra.mxu0 %v530
  %1776 = vmatpush.msra.mxu0 %v529
  %1777 = vmatpush.msra.mxu0 %v528
  %1778 = vmatpush.msra.mxu0 %v527
  %1779 = vmatpush.msra.mxu0 %v526
  %1780 = vmatpush.msra.mxu0 %v525
  %1781 = vmatpush.msra.mxu0 %v524
  %1782 = vmatpush.msra.mxu0 %v523
  %1783 = vmatpush.msra.mxu0 %v522
  %1784 = vmatpush.msra.mxu0 %v521
  %1785 = vmatpush.msra.mxu0 %v520
  %1786 = vmatpush.msra.mxu0 %v519
  %1787 = vmatpush.msra.mxu0 %v518
  %1788 = vmatpush.msra.mxu0 %v517
  %1789 = vmatpush.msra.mxu0 %v516
  %1790 = vmatpush.msra.mxu0 %v515
  %1791 = vmatmul.f32.gmra.mxu0 %v38
  %v1792 = vpop.f32.mrf.mxu0
  %v1793 = vadd.f32 0.0, %v1792
  %1794 = vdwg.mxu0
  %1795 = vmatpush.msra.mxu0 %v546
  %1796 = vmatpush.msra.mxu0 %v545
  %1797 = vmatpush.msra.mxu0 %v544
  %1798 = vmatpush.msra.mxu0 %v543
  %1799 = vmatpush.msra.mxu0 %v542
  %1800 = vmatpush.msra.mxu0 %v541
  %1801 = vmatpush.msra.mxu0 %v540
  %1802 = vmatpush.msra.mxu0 %v539
  %1803 = vmatpush.msra.mxu0 %v538
  %1804 = vmatpush.msra.mxu0 %v537
  %1805 = vmatpush.msra.mxu0 %v536
  %1806 = vmatpush.msra.mxu0 %v535
  %1807 = vmatpush.msra.mxu0 %v534
  %1808 = vmatpush.msra.mxu0 %v533
  %1809 = vmatpush.msra.mxu0 %v532
  %1810 = vmatpush.msra.mxu0 %v531
  %1811 = vmatmul.f32.gmra.mxu0 %v39
  %v1812 = vpop.f32.mrf.mxu0
  %v1813 = vadd.f32 0.0, %v1812
  %1814 = vdwg.mxu0
  %1815 = vmatpush.msra.mxu0 %v562
  %1816 = vmatpush.msra.mxu0 %v561
  %1817 = vmatpush.msra.mxu0 %v560
  %1818 = vmatpush.msra.mxu0 %v559
  %1819 = vmatpush.msra.mxu0 %v558
  %1820 = vmatpush.msra.mxu0 %v557
  %1821 = vmatpush.msra.mxu0 %v556
  %1822 = vmatpush.msra.mxu0 %v555
  %1823 = vmatpush.msra.mxu0 %v554
  %1824 = vmatpush.msra.mxu0 %v553
  %1825 = vmatpush.msra.mxu0 %v552
  %1826 = vmatpush.msra.mxu0 %v551
  %1827 = vmatpush.msra.mxu0 %v550
  %1828 = vmatpush.msra.mxu0 %v549
  %1829 = vmatpush.msra.mxu0 %v548
  %1830 = vmatpush.msra.mxu0 %v547
  %1831 = vmatmul.f32.gmra.mxu0 %v40
  %v1832 = vpop.f32.mrf.mxu0
  %v1833 = vadd.f32 0.0, %v1832
  %1834 = vdwg.mxu0
  %1835 = vmatpush.msra.mxu0 %v578
  %1836 = vmatpush.msra.mxu0 %v577
  %1837 = vmatpush.msra.mxu0 %v576
  %1838 = vmatpush.msra.mxu0 %v575
  %1839 = vmatpush.msra.mxu0 %v574
  %1840 = vmatpush.msra.mxu0 %v573
  %1841 = vmatpush.msra.mxu0 %v572
  %1842 = vmatpush.msra.mxu0 %v571
  %1843 = vmatpush.msra.mxu0 %v570
  %1844 = vmatpush.msra.mxu0 %v569
  %1845 = vmatpush.msra.mxu0 %v568
  %1846 = vmatpush.msra.mxu0 %v567
  %1847 = vmatpush.msra.mxu0 %v566
  %1848 = vmatpush.msra.mxu0 %v565
  %1849 = vmatpush.msra.mxu0 %v564
  %1850 = vmatpush.msra.mxu0 %v563
  %1851 = vmatmul.f32.gmra.mxu0 %v41
  %v1852 = vpop.f32.mrf.mxu0
  %v1853 = vadd.f32 0.0, %v1852
  %1854 = vdwg.mxu0
  %1855 = vmatpush.msra.mxu0 %v594
  %1856 = vmatpush.msra.mxu0 %v593
  %1857 = vmatpush.msra.mxu0 %v592
  %1858 = vmatpush.msra.mxu0 %v591
  %1859 = vmatpush.msra.mxu0 %v590
  %1860 = vmatpush.msra.mxu0 %v589
  %1861 = vmatpush.msra.mxu0 %v588
  %1862 = vmatpush.msra.mxu0 %v587
  %1863 = vmatpush.msra.mxu0 %v586
  %1864 = vmatpush.msra.mxu0 %v585
  %1865 = vmatpush.msra.mxu0 %v584
  %1866 = vmatpush.msra.mxu0 %v583
  %1867 = vmatpush.msra.mxu0 %v582
  %1868 = vmatpush.msra.mxu0 %v581
  %1869 = vmatpush.msra.mxu0 %v580
  %1870 = vmatpush.msra.mxu0 %v579
  %1871 = vmatmul.f32.gmra.mxu0 %v42
  %v1872 = vpop.f32.mrf.mxu0
  %v1873 = vadd.f32 0.0, %v1872
  %1874 = vdwg.mxu0
  %1875 = vmatpush.msra.mxu0 %v610
  %1876 = vmatpush.msra.mxu0 %v609
  %1877 = vmatpush.msra.mxu0 %v608
  %1878 = vmatpush.msra.mxu0 %v607
  %1879 = vmatpush.msra.mxu0 %v606
  %1880 = vmatpush.msra.mxu0 %v605
  %1881 = vmatpush.msra.mxu0 %v604
  %1882 = vmatpush.msra.mxu0 %v603
  %1883 = vmatpush.msra.mxu0 %v602
  %1884 = vmatpush.msra.mxu0 %v601
  %1885 = vmatpush.msra.mxu0 %v600
  %1886 = vmatpush.msra.mxu0 %v599
  %1887 = vmatpush.msra.mxu0 %v598
  %1888 = vmatpush.msra.mxu0 %v597
  %1889 = vmatpush.msra.mxu0 %v596
  %1890 = vmatpush.msra.mxu0 %v595
  %1891 = vmatmul.f32.gmra.mxu0 %v43
  %v1892 = vpop.f32.mrf.mxu0
  %v1893 = vadd.f32 0.0, %v1892
  %1894 = vdwg.mxu0
  %1895 = vmatpush.msra.mxu0 %v626
  %1896 = vmatpush.msra.mxu0 %v625
  %1897 = vmatpush.msra.mxu0 %v624
  %1898 = vmatpush.msra.mxu0 %v623
  %1899 = vmatpush.msra.mxu0 %v622
  %1900 = vmatpush.msra.mxu0 %v621
  %1901 = vmatpush.msra.mxu0 %v620
  %1902 = vmatpush.msra.mxu0 %v619
  %1903 = vmatpush.msra.mxu0 %v618
  %1904 = vmatpush.msra.mxu0 %v617
  %1905 = vmatpush.msra.mxu0 %v616
  %1906 = vmatpush.msra.mxu0 %v615
  %1907 = vmatpush.msra.mxu0 %v614
  %1908 = vmatpush.msra.mxu0 %v613
  %1909 = vmatpush.msra.mxu0 %v612
  %1910 = vmatpush.msra.mxu0 %v611
  %1911 = vmatmul.f32.gmra.mxu0 %v44
  %v1912 = vpop.f32.mrf.mxu0
  %v1913 = vadd.f32 0.0, %v1912
  %1914 = vdwg.mxu0
  %1915 = vmatpush.msra.mxu0 %v642
  %1916 = vmatpush.msra.mxu0 %v641
  %1917 = vmatpush.msra.mxu0 %v640
  %1918 = vmatpush.msra.mxu0 %v639
  %1919 = vmatpush.msra.mxu0 %v638
  %1920 = vmatpush.msra.mxu0 %v637
  %1921 = vmatpush.msra.mxu0 %v636
  %1922 = vmatpush.msra.mxu0 %v635
  %1923 = vmatpush.msra.mxu0 %v634
  %1924 = vmatpush.msra.mxu0 %v633
  %1925 = vmatpush.msra.mxu0 %v632
  %1926 = vmatpush.msra.mxu0 %v631
  %1927 = vmatpush.msra.mxu0 %v630
  %1928 = vmatpush.msra.mxu0 %v629
  %1929 = vmatpush.msra.mxu0 %v628
  %1930 = vmatpush.msra.mxu0 %v627
  %1931 = vmatmul.f32.gmra.mxu0 %v45
  %v1932 = vpop.f32.mrf.mxu0
  %v1933 = vadd.f32 0.0, %v1932
  %1934 = vdwg.mxu0
  %1935 = vmatpush.msra.mxu0 %v658
  %1936 = vmatpush.msra.mxu0 %v657
  %1937 = vmatpush.msra.mxu0 %v656
  %1938 = vmatpush.msra.mxu0 %v655
  %1939 = vmatpush.msra.mxu0 %v654
  %1940 = vmatpush.msra.mxu0 %v653
  %1941 = vmatpush.msra.mxu0 %v652
  %1942 = vmatpush.msra.mxu0 %v651
  %1943 = vmatpush.msra.mxu0 %v650
  %1944 = vmatpush.msra.mxu0 %v649
  %1945 = vmatpush.msra.mxu0 %v648
  %1946 = vmatpush.msra.mxu0 %v647
  %1947 = vmatpush.msra.mxu0 %v646
  %1948 = vmatpush.msra.mxu0 %v645
  %1949 = vmatpush.msra.mxu0 %v644
  %1950 = vmatpush.msra.mxu0 %v643
  %1951 = vmatmul.f32.gmra.mxu0 %v46
  %v1952 = vpop.f32.mrf.mxu0
  %v1953 = vadd.f32 0.0, %v1952
  %1954 = vdwg.mxu0
  %1955 = vmatpush.msra.mxu0 %v674
  %1956 = vmatpush.msra.mxu0 %v673
  %1957 = vmatpush.msra.mxu0 %v672
  %1958 = vmatpush.msra.mxu0 %v671
  %1959 = vmatpush.msra.mxu0 %v670
  %1960 = vmatpush.msra.mxu0 %v669
  %1961 = vmatpush.msra.mxu0 %v668
  %1962 = vmatpush.msra.mxu0 %v667
  %1963 = vmatpush.msra.mxu0 %v666
  %1964 = vmatpush.msra.mxu0 %v665
  %1965 = vmatpush.msra.mxu0 %v664
  %1966 = vmatpush.msra.mxu0 %v663
  %1967 = vmatpush.msra.mxu0 %v662
  %1968 = vmatpush.msra.mxu0 %v661
  %1969 = vmatpush.msra.mxu0 %v660
  %1970 = vmatpush.msra.mxu0 %v659
  %1971 = vmatmul.f32.gmra.mxu0 %v47
  %v1972 = vpop.f32.mrf.mxu0
  %v1973 = vadd.f32 0.0, %v1972
  %1974 = vdwg.mxu0
  %1975 = vmatpush.msra.mxu0 %v690
  %1976 = vmatpush.msra.mxu0 %v689
  %1977 = vmatpush.msra.mxu0 %v688
  %1978 = vmatpush.msra.mxu0 %v687
  %1979 = vmatpush.msra.mxu0 %v686
  %1980 = vmatpush.msra.mxu0 %v685
  %1981 = vmatpush.msra.mxu0 %v684
  %1982 = vmatpush.msra.mxu0 %v683
  %1983 = vmatpush.msra.mxu0 %v682
  %1984 = vmatpush.msra.mxu0 %v681
  %1985 = vmatpush.msra.mxu0 %v680
  %1986 = vmatpush.msra.mxu0 %v679
  %1987 = vmatpush.msra.mxu0 %v678
  %1988 = vmatpush.msra.mxu0 %v677
  %1989 = vmatpush.msra.mxu0 %v676
  %1990 = vmatpush.msra.mxu0 %v675
  %1991 = vmatmul.f32.gmra.mxu0 %v48
  %v1992 = vpop.f32.mrf.mxu0
  %v1993 = vadd.f32 0.0, %v1992
  %1994 = vdwg.mxu0
  %1995 = vmatpush.msra.mxu0 %v706
  %1996 = vmatpush.msra.mxu0 %v705
  %1997 = vmatpush.msra.mxu0 %v704
  %1998 = vmatpush.msra.mxu0 %v703
  %1999 = vmatpush.msra.mxu0 %v702
  %2000 = vmatpush.msra.mxu0 %v701
  %2001 = vmatpush.msra.mxu0 %v700
  %2002 = vmatpush.msra.mxu0 %v699
  %2003 = vmatpush.msra.mxu0 %v698
  %2004 = vmatpush.msra.mxu0 %v697
  %2005 = vmatpush.msra.mxu0 %v696
  %2006 = vmatpush.msra.mxu0 %v695
  %2007 = vmatpush.msra.mxu0 %v694
  %2008 = vmatpush.msra.mxu0 %v693
  %2009 = vmatpush.msra.mxu0 %v692
  %2010 = vmatpush.msra.mxu0 %v691
  %2011 = vmatmul.f32.gmra.mxu0 %v49
  %v2012 = vpop.f32.mrf.mxu0
  %v2013 = vadd.f32 0.0, %v2012
  %2014 = vdwg.mxu0
  %2015 = vmatpush.msra.mxu0 %v722
  %2016 = vmatpush.msra.mxu0 %v721
  %2017 = vmatpush.msra.mxu0 %v720
  %2018 = vmatpush.msra.mxu0 %v719
  %2019 = vmatpush.msra.mxu0 %v718
  %2020 = vmatpush.msra.mxu0 %v717
  %2021 = vmatpush.msra.mxu0 %v716
  %2022 = vmatpush.msra.mxu0 %v715
  %2023 = vmatpush.msra.mxu0 %v714
  %2024 = vmatpush.msra.mxu0 %v713
  %2025 = vmatpush.msra.mxu0 %v712
  %2026 = vmatpush.msra.mxu0 %v711
  %2027 = vmatpush.msra.mxu0 %v710
  %2028 = vmatpush.msra.mxu0 %v709
  %2029 = vmatpush.msra.mxu0 %v708
  %2030 = vmatpush.msra.mxu0 %v707
  %2031 = vmatmul.f32.gmra.mxu0 %v50
  %v2032 = vpop.f32.mrf.mxu0
  %v2033 = vadd.f32 0.0, %v2032
  %2034 = vdwg.mxu0
  %2035 = vmatpush.msra.mxu0 %v738
  %2036 = vmatpush.msra.mxu0 %v737
  %2037 = vmatpush.msra.mxu0 %v736
  %2038 = vmatpush.msra.mxu0 %v735
  %2039 = vmatpush.msra.mxu0 %v734
  %2040 = vmatpush.msra.mxu0 %v733
  %2041 = vmatpush.msra.mxu0 %v732
  %2042 = vmatpush.msra.mxu0 %v731
  %2043 = vmatpush.msra.mxu0 %v730
  %2044 = vmatpush.msra.mxu0 %v729
  %2045 = vmatpush.msra.mxu0 %v728
  %2046 = vmatpush.msra.mxu0 %v727
  %2047 = vmatpush.msra.mxu0 %v726
  %2048 = vmatpush.msra.mxu0 %v725
  %2049 = vmatpush.msra.mxu0 %v724
  %2050 = vmatpush.msra.mxu0 %v723
  %2051 = vmatmul.f32.gmra.mxu0 %v51
  %v2052 = vpop.f32.mrf.mxu0
  %v2053 = vadd.f32 0.0, %v2052
  %2054 = vdwg.mxu0
  %2055 = vmatpush.msra.mxu0 %v754
  %2056 = vmatpush.msra.mxu0 %v753
  %2057 = vmatpush.msra.mxu0 %v752
  %2058 = vmatpush.msra.mxu0 %v751
  %2059 = vmatpush.msra.mxu0 %v750
  %2060 = vmatpush.msra.mxu0 %v749
  %2061 = vmatpush.msra.mxu0 %v748
  %2062 = vmatpush.msra.mxu0 %v747
  %2063 = vmatpush.msra.mxu0 %v746
  %2064 = vmatpush.msra.mxu0 %v745
  %2065 = vmatpush.msra.mxu0 %v744
  %2066 = vmatpush.msra.mxu0 %v743
  %2067 = vmatpush.msra.mxu0 %v742
  %2068 = vmatpush.msra.mxu0 %v741
  %2069 = vmatpush.msra.mxu0 %v740
  %2070 = vmatpush.msra.mxu0 %v739
  %2071 = vmatmul.f32.gmra.mxu0 %v52
  %v2072 = vpop.f32.mrf.mxu0
  %v2073 = vadd.f32 0.0, %v2072
  %2074 = vdwg.mxu0
  %2075 = vmatpush.msra.mxu0 %v770
  %2076 = vmatpush.msra.mxu0 %v769
  %2077 = vmatpush.msra.mxu0 %v768
  %2078 = vmatpush.msra.mxu0 %v767
  %2079 = vmatpush.msra.mxu0 %v766
  %2080 = vmatpush.msra.mxu0 %v765
  %2081 = vmatpush.msra.mxu0 %v764
  %2082 = vmatpush.msra.mxu0 %v763
  %2083 = vmatpush.msra.mxu0 %v762
  %2084 = vmatpush.msra.mxu0 %v761
  %2085 = vmatpush.msra.mxu0 %v760
  %2086 = vmatpush.msra.mxu0 %v759
  %2087 = vmatpush.msra.mxu0 %v758
  %2088 = vmatpush.msra.mxu0 %v757
  %2089 = vmatpush.msra.mxu0 %v756
  %2090 = vmatpush.msra.mxu0 %v755
  %2091 = vmatmul.f32.gmra.mxu0 %v53
  %v2092 = vpop.f32.mrf.mxu0
  %v2093 = vadd.f32 0.0, %v2092
  %2094 = vdwg.mxu0
  %2095 = vmatpush.msra.mxu0 %v786
  %2096 = vmatpush.msra.mxu0 %v785
  %2097 = vmatpush.msra.mxu0 %v784
  %2098 = vmatpush.msra.mxu0 %v783
  %2099 = vmatpush.msra.mxu0 %v782
  %2100 = vmatpush.msra.mxu0 %v781
  %2101 = vmatpush.msra.mxu0 %v780
  %2102 = vmatpush.msra.mxu0 %v779
  %2103 = vmatpush.msra.mxu0 %v778
  %2104 = vmatpush.msra.mxu0 %v777
  %2105 = vmatpush.msra.mxu0 %v776
  %2106 = vmatpush.msra.mxu0 %v775
  %2107 = vmatpush.msra.mxu0 %v774
  %2108 = vmatpush.msra.mxu0 %v773
  %2109 = vmatpush.msra.mxu0 %v772
  %2110 = vmatpush.msra.mxu0 %v771
  %2111 = vmatmul.f32.gmra.mxu0 %v54
  %v2112 = vpop.f32.mrf.mxu0
  %v2113 = vadd.f32 0.0, %v2112
  %2114 = vdwg.mxu0
  %2115 = vmatpush.msra.mxu0 %v802
  %2116 = vmatpush.msra.mxu0 %v801
  %2117 = vmatpush.msra.mxu0 %v800
  %2118 = vmatpush.msra.mxu0 %v799
  %2119 = vmatpush.msra.mxu0 %v798
  %2120 = vmatpush.msra.mxu0 %v797
  %2121 = vmatpush.msra.mxu0 %v796
  %2122 = vmatpush.msra.mxu0 %v795
  %2123 = vmatpush.msra.mxu0 %v794
  %2124 = vmatpush.msra.mxu0 %v793
  %2125 = vmatpush.msra.mxu0 %v792
  %2126 = vmatpush.msra.mxu0 %v791
  %2127 = vmatpush.msra.mxu0 %v790
  %2128 = vmatpush.msra.mxu0 %v789
  %2129 = vmatpush.msra.mxu0 %v788
  %2130 = vmatpush.msra.mxu0 %v787
  %2131 = vmatmul.f32.gmra.mxu0 %v55
  %v2132 = vpop.f32.mrf.mxu0
  %v2133 = vadd.f32 0.0, %v2132
  %2134 = vdwg.mxu0
  %2135 = vmatpush.msra.mxu0 %v818
  %2136 = vmatpush.msra.mxu0 %v817
  %2137 = vmatpush.msra.mxu0 %v816
  %2138 = vmatpush.msra.mxu0 %v815
  %2139 = vmatpush.msra.mxu0 %v814
  %2140 = vmatpush.msra.mxu0 %v813
  %2141 = vmatpush.msra.mxu0 %v812
  %2142 = vmatpush.msra.mxu0 %v811
  %2143 = vmatpush.msra.mxu0 %v810
  %2144 = vmatpush.msra.mxu0 %v809
  %2145 = vmatpush.msra.mxu0 %v808
  %2146 = vmatpush.msra.mxu0 %v807
  %2147 = vmatpush.msra.mxu0 %v806
  %2148 = vmatpush.msra.mxu0 %v805
  %2149 = vmatpush.msra.mxu0 %v804
  %2150 = vmatpush.msra.mxu0 %v803
  %2151 = vmatmul.f32.gmra.mxu0 %v56
  %v2152 = vpop.f32.mrf.mxu0
  %v2153 = vadd.f32 0.0, %v2152
  %2154 = vdwg.mxu0
  %2155 = vmatpush.msra.mxu0 %v834
  %2156 = vmatpush.msra.mxu0 %v833
  %2157 = vmatpush.msra.mxu0 %v832
  %2158 = vmatpush.msra.mxu0 %v831
  %2159 = vmatpush.msra.mxu0 %v830
  %2160 = vmatpush.msra.mxu0 %v829
  %2161 = vmatpush.msra.mxu0 %v828
  %2162 = vmatpush.msra.mxu0 %v827
  %2163 = vmatpush.msra.mxu0 %v826
  %2164 = vmatpush.msra.mxu0 %v825
  %2165 = vmatpush.msra.mxu0 %v824
  %2166 = vmatpush.msra.mxu0 %v823
  %2167 = vmatpush.msra.mxu0 %v822
  %2168 = vmatpush.msra.mxu0 %v821
  %2169 = vmatpush.msra.mxu0 %v820
  %2170 = vmatpush.msra.mxu0 %v819
  %2171 = vmatmul.f32.gmra.mxu0 %v57
  %v2172 = vpop.f32.mrf.mxu0
  %v2173 = vadd.f32 0.0, %v2172
  %2174 = vdwg.mxu0
  %2175 = vmatpush.msra.mxu0 %v850
  %2176 = vmatpush.msra.mxu0 %v849
  %2177 = vmatpush.msra.mxu0 %v848
  %2178 = vmatpush.msra.mxu0 %v847
  %2179 = vmatpush.msra.mxu0 %v846
  %2180 = vmatpush.msra.mxu0 %v845
  %2181 = vmatpush.msra.mxu0 %v844
  %2182 = vmatpush.msra.mxu0 %v843
  %2183 = vmatpush.msra.mxu0 %v842
  %2184 = vmatpush.msra.mxu0 %v841
  %2185 = vmatpush.msra.mxu0 %v840
  %2186 = vmatpush.msra.mxu0 %v839
  %2187 = vmatpush.msra.mxu0 %v838
  %2188 = vmatpush.msra.mxu0 %v837
  %2189 = vmatpush.msra.mxu0 %v836
  %2190 = vmatpush.msra.mxu0 %v835
  %2191 = vmatmul.f32.gmra.mxu0 %v58
  %v2192 = vpop.f32.mrf.mxu0
  %v2193 = vadd.f32 0.0, %v2192
  %2194 = vdwg.mxu0
  %2195 = vmatpush.msra.mxu0 %v866
  %2196 = vmatpush.msra.mxu0 %v865
  %2197 = vmatpush.msra.mxu0 %v864
  %2198 = vmatpush.msra.mxu0 %v863
  %2199 = vmatpush.msra.mxu0 %v862
  %2200 = vmatpush.msra.mxu0 %v861
  %2201 = vmatpush.msra.mxu0 %v860
  %2202 = vmatpush.msra.mxu0 %v859
  %2203 = vmatpush.msra.mxu0 %v858
  %2204 = vmatpush.msra.mxu0 %v857
  %2205 = vmatpush.msra.mxu0 %v856
  %2206 = vmatpush.msra.mxu0 %v855
  %2207 = vmatpush.msra.mxu0 %v854
  %2208 = vmatpush.msra.mxu0 %v853
  %2209 = vmatpush.msra.mxu0 %v852
  %2210 = vmatpush.msra.mxu0 %v851
  %2211 = vmatmul.f32.gmra.mxu0 %v59
  %v2212 = vpop.f32.mrf.mxu0
  %v2213 = vadd.f32 0.0, %v2212
  %2214 = vdwg.mxu0
  %2215 = vmatpush.msra.mxu0 %v882
  %2216 = vmatpush.msra.mxu0 %v881
  %2217 = vmatpush.msra.mxu0 %v880
  %2218 = vmatpush.msra.mxu0 %v879
  %2219 = vmatpush.msra.mxu0 %v878
  %2220 = vmatpush.msra.mxu0 %v877
  %2221 = vmatpush.msra.mxu0 %v876
  %2222 = vmatpush.msra.mxu0 %v875
  %2223 = vmatpush.msra.mxu0 %v874
  %2224 = vmatpush.msra.mxu0 %v873
  %2225 = vmatpush.msra.mxu0 %v872
  %2226 = vmatpush.msra.mxu0 %v871
  %2227 = vmatpush.msra.mxu0 %v870
  %2228 = vmatpush.msra.mxu0 %v869
  %2229 = vmatpush.msra.mxu0 %v868
  %2230 = vmatpush.msra.mxu0 %v867
  %2231 = vmatmul.f32.gmra.mxu0 %v60
  %v2232 = vpop.f32.mrf.mxu0
  %v2233 = vadd.f32 0.0, %v2232
  %2234 = vdwg.mxu0
  %2235 = vmatpush.msra.mxu0 %v898
  %2236 = vmatpush.msra.mxu0 %v897
  %2237 = vmatpush.msra.mxu0 %v896
  %2238 = vmatpush.msra.mxu0 %v895
  %2239 = vmatpush.msra.mxu0 %v894
  %2240 = vmatpush.msra.mxu0 %v893
  %2241 = vmatpush.msra.mxu0 %v892
  %2242 = vmatpush.msra.mxu0 %v891
  %2243 = vmatpush.msra.mxu0 %v890
  %2244 = vmatpush.msra.mxu0 %v889
  %2245 = vmatpush.msra.mxu0 %v888
  %2246 = vmatpush.msra.mxu0 %v887
  %2247 = vmatpush.msra.mxu0 %v886
  %2248 = vmatpush.msra.mxu0 %v885
  %2249 = vmatpush.msra.mxu0 %v884
  %2250 = vmatpush.msra.mxu0 %v883
  %2251 = vmatmul.f32.gmra.mxu0 %v61
  %v2252 = vpop.f32.mrf.mxu0
  %v2253 = vadd.f32 0.0, %v2252
  %2254 = vdwg.mxu0
  %2255 = vmatpush.msra.mxu0 %v914
  %2256 = vmatpush.msra.mxu0 %v913
  %2257 = vmatpush.msra.mxu0 %v912
  %2258 = vmatpush.msra.mxu0 %v911
  %2259 = vmatpush.msra.mxu0 %v910
  %2260 = vmatpush.msra.mxu0 %v909
  %2261 = vmatpush.msra.mxu0 %v908
  %2262 = vmatpush.msra.mxu0 %v907
  %2263 = vmatpush.msra.mxu0 %v906
  %2264 = vmatpush.msra.mxu0 %v905
  %2265 = vmatpush.msra.mxu0 %v904
  %2266 = vmatpush.msra.mxu0 %v903
  %2267 = vmatpush.msra.mxu0 %v902
  %2268 = vmatpush.msra.mxu0 %v901
  %2269 = vmatpush.msra.mxu0 %v900
  %2270 = vmatpush.msra.mxu0 %v899
  %2271 = vmatmul.f32.gmra.mxu0 %v62
  %v2272 = vpop.f32.mrf.mxu0
  %v2273 = vadd.f32 0.0, %v2272
  %2274 = vdwg.mxu0
  %2275 = vmatpush.msra.mxu0 %v930
  %2276 = vmatpush.msra.mxu0 %v929
  %2277 = vmatpush.msra.mxu0 %v928
  %2278 = vmatpush.msra.mxu0 %v927
  %2279 = vmatpush.msra.mxu0 %v926
  %2280 = vmatpush.msra.mxu0 %v925
  %2281 = vmatpush.msra.mxu0 %v924
  %2282 = vmatpush.msra.mxu0 %v923
  %2283 = vmatpush.msra.mxu0 %v922
  %2284 = vmatpush.msra.mxu0 %v921
  %2285 = vmatpush.msra.mxu0 %v920
  %2286 = vmatpush.msra.mxu0 %v919
  %2287 = vmatpush.msra.mxu0 %v918
  %2288 = vmatpush.msra.mxu0 %v917
  %2289 = vmatpush.msra.mxu0 %v916
  %2290 = vmatpush.msra.mxu0 %v915
  %2291 = vmatmul.f32.gmra.mxu0 %v63
  %v2292 = vpop.f32.mrf.mxu0
  %v2293 = vadd.f32 0.0, %v2292
  %2294 = vdwg.mxu0
  %2295 = vmatpush.msra.mxu0 %v946
  %2296 = vmatpush.msra.mxu0 %v945
  %2297 = vmatpush.msra.mxu0 %v944
  %2298 = vmatpush.msra.mxu0 %v943
  %2299 = vmatpush.msra.mxu0 %v942
  %2300 = vmatpush.msra.mxu0 %v941
  %2301 = vmatpush.msra.mxu0 %v940
  %2302 = vmatpush.msra.mxu0 %v939
  %2303 = vmatpush.msra.mxu0 %v938
  %2304 = vmatpush.msra.mxu0 %v937
  %2305 = vmatpush.msra.mxu0 %v936
  %2306 = vmatpush.msra.mxu0 %v935
  %2307 = vmatpush.msra.mxu0 %v934
  %2308 = vmatpush.msra.mxu0 %v933
  %2309 = vmatpush.msra.mxu0 %v932
  %2310 = vmatpush.msra.mxu0 %v931
  %2311 = vmatmul.f32.gmra.mxu0 %v64
  %v2312 = vpop.f32.mrf.mxu0
  %v2313 = vadd.f32 0.0, %v2312
  %2314 = vdwg.mxu0
  %2315 = vmatpush.msra.mxu0 %v962
  %2316 = vmatpush.msra.mxu0 %v961
  %2317 = vmatpush.msra.mxu0 %v960
  %2318 = vmatpush.msra.mxu0 %v959
  %2319 = vmatpush.msra.mxu0 %v958
  %2320 = vmatpush.msra.mxu0 %v957
  %2321 = vmatpush.msra.mxu0 %v956
  %2322 = vmatpush.msra.mxu0 %v955
  %2323 = vmatpush.msra.mxu0 %v954
  %2324 = vmatpush.msra.mxu0 %v953
  %2325 = vmatpush.msra.mxu0 %v952
  %2326 = vmatpush.msra.mxu0 %v951
  %2327 = vmatpush.msra.mxu0 %v950
  %2328 = vmatpush.msra.mxu0 %v949
  %2329 = vmatpush.msra.mxu0 %v948
  %2330 = vmatpush.msra.mxu0 %v947
  %2331 = vmatmul.f32.gmra.mxu0 %v65
  %v2332 = vpop.f32.mrf.mxu0
  %v2333 = vadd.f32 0.0, %v2332
  %2334 = vdwg.mxu0
  %2335 = vmatpush.msra.mxu0 %v978
  %2336 = vmatpush.msra.mxu0 %v977
  %2337 = vmatpush.msra.mxu0 %v976
  %2338 = vmatpush.msra.mxu0 %v975
  %2339 = vmatpush.msra.mxu0 %v974
  %2340 = vmatpush.msra.mxu0 %v973
  %2341 = vmatpush.msra.mxu0 %v972
  %2342 = vmatpush.msra.mxu0 %v971
  %2343 = vmatpush.msra.mxu0 %v970
  %2344 = vmatpush.msra.mxu0 %v969
  %2345 = vmatpush.msra.mxu0 %v968
  %2346 = vmatpush.msra.mxu0 %v967
  %2347 = vmatpush.msra.mxu0 %v966
  %2348 = vmatpush.msra.mxu0 %v965
  %2349 = vmatpush.msra.mxu0 %v964
  %2350 = vmatpush.msra.mxu0 %v963
  %2351 = vmatmul.f32.gmra.mxu0 %v66
  %v2352 = vpop.f32.mrf.mxu0
  %v2353 = vadd.f32 0.0, %v2352
  %2354 = vdwg.mxu0
  %2355 = vmatpush.msra.mxu0 %v994
  %2356 = vmatpush.msra.mxu0 %v993
  %2357 = vmatpush.msra.mxu0 %v992
  %2358 = vmatpush.msra.mxu0 %v991
  %2359 = vmatpush.msra.mxu0 %v990
  %2360 = vmatpush.msra.mxu0 %v989
  %2361 = vmatpush.msra.mxu0 %v988
  %2362 = vmatpush.msra.mxu0 %v987
  %2363 = vmatpush.msra.mxu0 %v986
  %2364 = vmatpush.msra.mxu0 %v985
  %2365 = vmatpush.msra.mxu0 %v984
  %2366 = vmatpush.msra.mxu0 %v983
  %2367 = vmatpush.msra.mxu0 %v982
  %2368 = vmatpush.msra.mxu0 %v981
  %2369 = vmatpush.msra.mxu0 %v980
  %2370 = vmatpush.msra.mxu0 %v979
  %2371 = vmatmul.f32.gmra.mxu0 %v67
  %v2372 = vpop.f32.mrf.mxu0
  %v2373 = vadd.f32 0.0, %v2372
  %2374 = vdwg.mxu0
  %2375 = vmatpush.msra.mxu0 %v1010
  %2376 = vmatpush.msra.mxu0 %v1009
  %2377 = vmatpush.msra.mxu0 %v1008
  %2378 = vmatpush.msra.mxu0 %v1007
  %2379 = vmatpush.msra.mxu0 %v1006
  %2380 = vmatpush.msra.mxu0 %v1005
  %2381 = vmatpush.msra.mxu0 %v1004
  %2382 = vmatpush.msra.mxu0 %v1003
  %2383 = vmatpush.msra.mxu0 %v1002
  %2384 = vmatpush.msra.mxu0 %v1001
  %2385 = vmatpush.msra.mxu0 %v1000
  %2386 = vmatpush.msra.mxu0 %v999
  %2387 = vmatpush.msra.mxu0 %v998
  %2388 = vmatpush.msra.mxu0 %v997
  %2389 = vmatpush.msra.mxu0 %v996
  %2390 = vmatpush.msra.mxu0 %v995
  %2391 = vmatmul.f32.gmra.mxu0 %v68
  %v2392 = vpop.f32.mrf.mxu0
  %v2393 = vadd.f32 0.0, %v2392
  %2394 = vdwg.mxu0
  %2395 = vmatpush.msra.mxu0 %v1026
  %2396 = vmatpush.msra.mxu0 %v1025
  %2397 = vmatpush.msra.mxu0 %v1024
  %2398 = vmatpush.msra.mxu0 %v1023
  %2399 = vmatpush.msra.mxu0 %v1022
  %2400 = vmatpush.msra.mxu0 %v1021
  %2401 = vmatpush.msra.mxu0 %v1020
  %2402 = vmatpush.msra.mxu0 %v1019
  %2403 = vmatpush.msra.mxu0 %v1018
  %2404 = vmatpush.msra.mxu0 %v1017
  %2405 = vmatpush.msra.mxu0 %v1016
  %2406 = vmatpush.msra.mxu0 %v1015
  %2407 = vmatpush.msra.mxu0 %v1014
  %2408 = vmatpush.msra.mxu0 %v1013
  %2409 = vmatpush.msra.mxu0 %v1012
  %2410 = vmatpush.msra.mxu0 %v1011
  %2411 = vmatmul.f32.gmra.mxu0 %v69
  %v2412 = vpop.f32.mrf.mxu0
  %v2413 = vadd.f32 0.0, %v2412
  %2414 = vdwg.mxu0
  %2415 = vmatpush.msra.mxu0 %v1042
  %2416 = vmatpush.msra.mxu0 %v1041
  %2417 = vmatpush.msra.mxu0 %v1040
  %2418 = vmatpush.msra.mxu0 %v1039
  %2419 = vmatpush.msra.mxu0 %v1038
  %2420 = vmatpush.msra.mxu0 %v1037
  %2421 = vmatpush.msra.mxu0 %v1036
  %2422 = vmatpush.msra.mxu0 %v1035
  %2423 = vmatpush.msra.mxu0 %v1034
  %2424 = vmatpush.msra.mxu0 %v1033
  %2425 = vmatpush.msra.mxu0 %v1032
  %2426 = vmatpush.msra.mxu0 %v1031
  %2427 = vmatpush.msra.mxu0 %v1030
  %2428 = vmatpush.msra.mxu0 %v1029
  %2429 = vmatpush.msra.mxu0 %v1028
  %2430 = vmatpush.msra.mxu0 %v1027
  %2431 = vmatmul.f32.gmra.mxu0 %v70
  %v2432 = vpop.f32.mrf.mxu0
  %v2433 = vadd.f32 0.0, %v2432
  %2434 = vdwg.mxu0
  %2435 = vmatpush.msra.mxu0 %v1058
  %2436 = vmatpush.msra.mxu0 %v1057
  %2437 = vmatpush.msra.mxu0 %v1056
  %2438 = vmatpush.msra.mxu0 %v1055
  %2439 = vmatpush.msra.mxu0 %v1054
  %2440 = vmatpush.msra.mxu0 %v1053
  %2441 = vmatpush.msra.mxu0 %v1052
  %2442 = vmatpush.msra.mxu0 %v1051
  %2443 = vmatpush.msra.mxu0 %v1050
  %2444 = vmatpush.msra.mxu0 %v1049
  %2445 = vmatpush.msra.mxu0 %v1048
  %2446 = vmatpush.msra.mxu0 %v1047
  %2447 = vmatpush.msra.mxu0 %v1046
  %2448 = vmatpush.msra.mxu0 %v1045
  %2449 = vmatpush.msra.mxu0 %v1044
  %2450 = vmatpush.msra.mxu0 %v1043
  %2451 = vmatmul.f32.gmra.mxu0 %v71
  %v2452 = vpop.f32.mrf.mxu0
  %v2453 = vadd.f32 0.0, %v2452
  %2454 = vdwg.mxu0
  %2455 = vmatpush.msra.mxu0 %v1074
  %2456 = vmatpush.msra.mxu0 %v1073
  %2457 = vmatpush.msra.mxu0 %v1072
  %2458 = vmatpush.msra.mxu0 %v1071
  %2459 = vmatpush.msra.mxu0 %v1070
  %2460 = vmatpush.msra.mxu0 %v1069
  %2461 = vmatpush.msra.mxu0 %v1068
  %2462 = vmatpush.msra.mxu0 %v1067
  %2463 = vmatpush.msra.mxu0 %v1066
  %2464 = vmatpush.msra.mxu0 %v1065
  %2465 = vmatpush.msra.mxu0 %v1064
  %2466 = vmatpush.msra.mxu0 %v1063
  %2467 = vmatpush.msra.mxu0 %v1062
  %2468 = vmatpush.msra.mxu0 %v1061
  %2469 = vmatpush.msra.mxu0 %v1060
  %2470 = vmatpush.msra.mxu0 %v1059
  %2471 = vmatmul.f32.gmra.mxu0 %v72
  %v2472 = vpop.f32.mrf.mxu0
  %v2473 = vadd.f32 0.0, %v2472
  %2474 = vdwg.mxu0
  %2475 = vmatpush.msra.mxu0 %v1090
  %2476 = vmatpush.msra.mxu0 %v1089
  %2477 = vmatpush.msra.mxu0 %v1088
  %2478 = vmatpush.msra.mxu0 %v1087
  %2479 = vmatpush.msra.mxu0 %v1086
  %2480 = vmatpush.msra.mxu0 %v1085
  %2481 = vmatpush.msra.mxu0 %v1084
  %2482 = vmatpush.msra.mxu0 %v1083
  %2483 = vmatpush.msra.mxu0 %v1082
  %2484 = vmatpush.msra.mxu0 %v1081
  %2485 = vmatpush.msra.mxu0 %v1080
  %2486 = vmatpush.msra.mxu0 %v1079
  %2487 = vmatpush.msra.mxu0 %v1078
  %2488 = vmatpush.msra.mxu0 %v1077
  %2489 = vmatpush.msra.mxu0 %v1076
  %2490 = vmatpush.msra.mxu0 %v1075
  %2491 = vmatmul.f32.gmra.mxu0 %v73
  %v2492 = vpop.f32.mrf.mxu0
  %v2493 = vadd.f32 0.0, %v2492
  %2494 = vdwg.mxu0
  %2495 = vmatpush.msra.mxu0 %v1106
  %2496 = vmatpush.msra.mxu0 %v1105
  %2497 = vmatpush.msra.mxu0 %v1104
  %2498 = vmatpush.msra.mxu0 %v1103
  %2499 = vmatpush.msra.mxu0 %v1102
  %2500 = vmatpush.msra.mxu0 %v1101
  %2501 = vmatpush.msra.mxu0 %v1100
  %2502 = vmatpush.msra.mxu0 %v1099
  %2503 = vmatpush.msra.mxu0 %v1098
  %2504 = vmatpush.msra.mxu0 %v1097
  %2505 = vmatpush.msra.mxu0 %v1096
  %2506 = vmatpush.msra.mxu0 %v1095
  %2507 = vmatpush.msra.mxu0 %v1094
  %2508 = vmatpush.msra.mxu0 %v1093
  %2509 = vmatpush.msra.mxu0 %v1092
  %2510 = vmatpush.msra.mxu0 %v1091
  %2511 = vmatmul.f32.gmra.mxu0 %v74
  %v2512 = vpop.f32.mrf.mxu0
  %v2513 = vadd.f32 0.0, %v2512
  %2514 = vdwg.mxu0
  %2515 = vmatpush.msra.mxu0 %v1122
  %2516 = vmatpush.msra.mxu0 %v1121
  %2517 = vmatpush.msra.mxu0 %v1120
  %2518 = vmatpush.msra.mxu0 %v1119
  %2519 = vmatpush.msra.mxu0 %v1118
  %2520 = vmatpush.msra.mxu0 %v1117
  %2521 = vmatpush.msra.mxu0 %v1116
  %2522 = vmatpush.msra.mxu0 %v1115
  %2523 = vmatpush.msra.mxu0 %v1114
  %2524 = vmatpush.msra.mxu0 %v1113
  %2525 = vmatpush.msra.mxu0 %v1112
  %2526 = vmatpush.msra.mxu0 %v1111
  %2527 = vmatpush.msra.mxu0 %v1110
  %2528 = vmatpush.msra.mxu0 %v1109
  %2529 = vmatpush.msra.mxu0 %v1108
  %2530 = vmatpush.msra.mxu0 %v1107
  %2531 = vmatmul.f32.gmra.mxu0 %v75
  %v2532 = vpop.f32.mrf.mxu0
  %v2533 = vadd.f32 0.0, %v2532
  %2534 = vdwg.mxu0
  %2535 = vmatpush.msra.mxu0 %v1138
  %2536 = vmatpush.msra.mxu0 %v1137
  %2537 = vmatpush.msra.mxu0 %v1136
  %2538 = vmatpush.msra.mxu0 %v1135
  %2539 = vmatpush.msra.mxu0 %v1134
  %2540 = vmatpush.msra.mxu0 %v1133
  %2541 = vmatpush.msra.mxu0 %v1132
  %2542 = vmatpush.msra.mxu0 %v1131
  %2543 = vmatpush.msra.mxu0 %v1130
  %2544 = vmatpush.msra.mxu0 %v1129
  %2545 = vmatpush.msra.mxu0 %v1128
  %2546 = vmatpush.msra.mxu0 %v1127
  %2547 = vmatpush.msra.mxu0 %v1126
  %2548 = vmatpush.msra.mxu0 %v1125
  %2549 = vmatpush.msra.mxu0 %v1124
  %2550 = vmatpush.msra.mxu0 %v1123
  %2551 = vmatmul.f32.gmra.mxu0 %v76
  %v2552 = vpop.f32.mrf.mxu0
  %v2553 = vadd.f32 0.0, %v2552
  %2554 = vdwg.mxu0
  %2555 = vmatpush.msra.mxu0 %v1154
  %2556 = vmatpush.msra.mxu0 %v1153
  %2557 = vmatpush.msra.mxu0 %v1152
  %2558 = vmatpush.msra.mxu0 %v1151
  %2559 = vmatpush.msra.mxu0 %v1150
  %2560 = vmatpush.msra.mxu0 %v1149
  %2561 = vmatpush.msra.mxu0 %v1148
  %2562 = vmatpush.msra.mxu0 %v1147
  %2563 = vmatpush.msra.mxu0 %v1146
  %2564 = vmatpush.msra.mxu0 %v1145
  %2565 = vmatpush.msra.mxu0 %v1144
  %2566 = vmatpush.msra.mxu0 %v1143
  %2567 = vmatpush.msra.mxu0 %v1142
  %2568 = vmatpush.msra.mxu0 %v1141
  %2569 = vmatpush.msra.mxu0 %v1140
  %2570 = vmatpush.msra.mxu0 %v1139
  %2571 = vmatmul.f32.gmra.mxu0 %v77
  %v2572 = vpop.f32.mrf.mxu0
  %v2573 = vadd.f32 0.0, %v2572
  %2574 = vdwg.mxu0
  %2575 = vmatpush.msra.mxu0 %v1170
  %2576 = vmatpush.msra.mxu0 %v1169
  %2577 = vmatpush.msra.mxu0 %v1168
  %2578 = vmatpush.msra.mxu0 %v1167
  %2579 = vmatpush.msra.mxu0 %v1166
  %2580 = vmatpush.msra.mxu0 %v1165
  %2581 = vmatpush.msra.mxu0 %v1164
  %2582 = vmatpush.msra.mxu0 %v1163
  %2583 = vmatpush.msra.mxu0 %v1162
  %2584 = vmatpush.msra.mxu0 %v1161
  %2585 = vmatpush.msra.mxu0 %v1160
  %2586 = vmatpush.msra.mxu0 %v1159
  %2587 = vmatpush.msra.mxu0 %v1158
  %2588 = vmatpush.msra.mxu0 %v1157
  %2589 = vmatpush.msra.mxu0 %v1156
  %2590 = vmatpush.msra.mxu0 %v1155
  %2591 = vmatmul.f32.gmra.mxu0 %v78
  %v2592 = vpop.f32.mrf.mxu0
  %v2593 = vadd.f32 0.0, %v2592
  %2594 = vdwg.mxu0
  %2595 = vmatpush.msra.mxu0 %v1186
  %2596 = vmatpush.msra.mxu0 %v1185
  %2597 = vmatpush.msra.mxu0 %v1184
  %2598 = vmatpush.msra.mxu0 %v1183
  %2599 = vmatpush.msra.mxu0 %v1182
  %2600 = vmatpush.msra.mxu0 %v1181
  %2601 = vmatpush.msra.mxu0 %v1180
  %2602 = vmatpush.msra.mxu0 %v1179
  %2603 = vmatpush.msra.mxu0 %v1178
  %2604 = vmatpush.msra.mxu0 %v1177
  %2605 = vmatpush.msra.mxu0 %v1176
  %2606 = vmatpush.msra.mxu0 %v1175
  %2607 = vmatpush.msra.mxu0 %v1174
  %2608 = vmatpush.msra.mxu0 %v1173
  %2609 = vmatpush.msra.mxu0 %v1172
  %2610 = vmatpush.msra.mxu0 %v1171
  %2611 = vmatmul.f32.gmra.mxu0 %v79
  %v2612 = vpop.f32.mrf.mxu0
  %v2613 = vadd.f32 0.0, %v2612
  %2614 = vdwg.mxu0
  %2615 = vmatpush.msra.mxu0 %v1202
  %2616 = vmatpush.msra.mxu0 %v1201
  %2617 = vmatpush.msra.mxu0 %v1200
  %2618 = vmatpush.msra.mxu0 %v1199
  %2619 = vmatpush.msra.mxu0 %v1198
  %2620 = vmatpush.msra.mxu0 %v1197
  %2621 = vmatpush.msra.mxu0 %v1196
  %2622 = vmatpush.msra.mxu0 %v1195
  %2623 = vmatpush.msra.mxu0 %v1194
  %2624 = vmatpush.msra.mxu0 %v1193
  %2625 = vmatpush.msra.mxu0 %v1192
  %2626 = vmatpush.msra.mxu0 %v1191
  %2627 = vmatpush.msra.mxu0 %v1190
  %2628 = vmatpush.msra.mxu0 %v1189
  %2629 = vmatpush.msra.mxu0 %v1188
  %2630 = vmatpush.msra.mxu0 %v1187
  %2631 = vmatmul.f32.gmra.mxu0 %v80
  %v2632 = vpop.f32.mrf.mxu0
  %v2633 = vadd.f32 0.0, %v2632
  %2634 = vdwg.mxu0
  %2635 = vmatpush.msra.mxu0 %v1218
  %2636 = vmatpush.msra.mxu0 %v1217
  %2637 = vmatpush.msra.mxu0 %v1216
  %2638 = vmatpush.msra.mxu0 %v1215
  %2639 = vmatpush.msra.mxu0 %v1214
  %2640 = vmatpush.msra.mxu0 %v1213
  %2641 = vmatpush.msra.mxu0 %v1212
  %2642 = vmatpush.msra.mxu0 %v1211
  %2643 = vmatpush.msra.mxu0 %v1210
  %2644 = vmatpush.msra.mxu0 %v1209
  %2645 = vmatpush.msra.mxu0 %v1208
  %2646 = vmatpush.msra.mxu0 %v1207
  %2647 = vmatpush.msra.mxu0 %v1206
  %2648 = vmatpush.msra.mxu0 %v1205
  %2649 = vmatpush.msra.mxu0 %v1204
  %2650 = vmatpush.msra.mxu0 %v1203
  %2651 = vmatmul.f32.gmra.mxu0 %v81
  %v2652 = vpop.f32.mrf.mxu0
  %v2653 = vadd.f32 0.0, %v2652
  %2654 = vdwg.mxu0
  %2655 = vmatpush.msra.mxu0 %v1234
  %2656 = vmatpush.msra.mxu0 %v1233
  %2657 = vmatpush.msra.mxu0 %v1232
  %2658 = vmatpush.msra.mxu0 %v1231
  %2659 = vmatpush.msra.mxu0 %v1230
  %2660 = vmatpush.msra.mxu0 %v1229
  %2661 = vmatpush.msra.mxu0 %v1228
  %2662 = vmatpush.msra.mxu0 %v1227
  %2663 = vmatpush.msra.mxu0 %v1226
  %2664 = vmatpush.msra.mxu0 %v1225
  %2665 = vmatpush.msra.mxu0 %v1224
  %2666 = vmatpush.msra.mxu0 %v1223
  %2667 = vmatpush.msra.mxu0 %v1222
  %2668 = vmatpush.msra.mxu0 %v1221
  %2669 = vmatpush.msra.mxu0 %v1220
  %2670 = vmatpush.msra.mxu0 %v1219
  %2671 = vmatmul.f32.gmra.mxu0 %v82
  %v2672 = vpop.f32.mrf.mxu0
  %v2673 = vadd.f32 0.0, %v2672
  %2674 = vdwg.mxu0
  %2675 = vst [vmem:[%s2] sm:$0xff] %v1253
  %2676 = vst [vmem:[%s2 + $0x8] sm:$0xff] %v1273
  %2677 = vst [vmem:[%s2 + $0x10] sm:$0xff] %v1293
  %2678 = vst [vmem:[%s2 + $0x18] sm:$0xff] %v1313
  %2679 = vst [vmem:[%s2 + $0x20] sm:$0xff] %v1333
  %2680 = vst [vmem:[%s2 + $0x28] sm:$0xff] %v1353
  %2681 = vst [vmem:[%s2 + $0x30] sm:$0xff] %v1373
  %2682 = vst [vmem:[%s2 + $0x38] sm:$0xff] %v1393
  %2683 = vst [vmem:[%s2 + $0x40] sm:$0xff] %v1413
  %2684 = vst [vmem:[%s2 + $0x48] sm:$0xff] %v1433
  %2685 = vst [vmem:[%s2 + $0x50] sm:$0xff] %v1453
  %2686 = vst [vmem:[%s2 + $0x58] sm:$0xff] %v1473
  %2687 = vst [vmem:[%s2 + $0x60] sm:$0xff] %v1493
  %2688 = vst [vmem:[%s2 + $0x68] sm:$0xff] %v1513
  %2689 = vst [vmem:[%s2 + $0x70] sm:$0xff] %v1533
  %2690 = vst [vmem:[%s2 + $0x78] sm:$0xff] %v1553
  %2691 = vst [vmem:[%s2 + $0x80] sm:$0xff] %v1573
  %2692 = vst [vmem:[%s2 + $0x88] sm:$0xff] %v1593
  %2693 = vst [vmem:[%s2 + $0x90] sm:$0xff] %v1613
  %2694 = vst [vmem:[%s2 + $0x98] sm:$0xff] %v1633
  %2695 = vst [vmem:[%s2 + $0xa0] sm:$0xff] %v1653
  %2696 = vst [vmem:[%s2 + $0xa8] sm:$0xff] %v1673
  %2697 = vst [vmem:[%s2 + $0xb0] sm:$0xff] %v1693
  %2698 = vst [vmem:[%s2 + $0xb8] sm:$0xff] %v1713
  %2699 = vst [vmem:[%s2 + $0xc0] sm:$0xff] %v1733
  %2700 = vst [vmem:[%s2 + $0xc8] sm:$0xff] %v1753
  %2701 = vst [vmem:[%s2 + $0xd0] sm:$0xff] %v1773
  %2702 = vst [vmem:[%s2 + $0xd8] sm:$0xff] %v1793
  %2703 = vst [vmem:[%s2 + $0xe0] sm:$0xff] %v1813
  %2704 = vst [vmem:[%s2 + $0xe8] sm:$0xff] %v1833
  %2705 = vst [vmem:[%s2 + $0xf0] sm:$0xff] %v1853
  %2706 = vst [vmem:[%s2 + $0xf8] sm:$0xff] %v1873
  %2707 = vst [vmem:[%s2 + $0x100] sm:$0xff] %v1893
  %2708 = vst [vmem:[%s2 + $0x108] sm:$0xff] %v1913
  %2709 = vst [vmem:[%s2 + $0x110] sm:$0xff] %v1933
  %2710 = vst [vmem:[%s2 + $0x118] sm:$0xff] %v1953
  %2711 = vst [vmem:[%s2 + $0x120] sm:$0xff] %v1973
  %2712 = vst [vmem:[%s2 + $0x128] sm:$0xff] %v1993
  %2713 = vst [vmem:[%s2 + $0x130] sm:$0xff] %v2013
  %2714 = vst [vmem:[%s2 + $0x138] sm:$0xff] %v2033
  %2715 = vst [vmem:[%s2 + $0x140] sm:$0xff] %v2053
  %2716 = vst [vmem:[%s2 + $0x148] sm:$0xff] %v2073
  %2717 = vst [vmem:[%s2 + $0x150] sm:$0xff] %v2093
  %2718 = vst [vmem:[%s2 + $0x158] sm:$0xff] %v2113
  %2719 = vst [vmem:[%s2 + $0x160] sm:$0xff] %v2133
  %2720 = vst [vmem:[%s2 + $0x168] sm:$0xff] %v2153
  %2721 = vst [vmem:[%s2 + $0x170] sm:$0xff] %v2173
  %2722 = vst [vmem:[%s2 + $0x178] sm:$0xff] %v2193
  %2723 = vst [vmem:[%s2 + $0x180] sm:$0xff] %v2213
  %2724 = vst [vmem:[%s2 + $0x188] sm:$0xff] %v2233
  %2725 = vst [vmem:[%s2 + $0x190] sm:$0xff] %v2253
  %2726 = vst [vmem:[%s2 + $0x198] sm:$0xff] %v2273
  %2727 = vst [vmem:[%s2 + $0x1a0] sm:$0xff] %v2293
  %2728 = vst [vmem:[%s2 + $0x1a8] sm:$0xff] %v2313
  %2729 = vst [vmem:[%s2 + $0x1b0] sm:$0xff] %v2333
  %2730 = vst [vmem:[%s2 + $0x1b8] sm:$0xff] %v2353
  %2731 = vst [vmem:[%s2 + $0x1c0] sm:$0xff] %v2373
  %2732 = vst [vmem:[%s2 + $0x1c8] sm:$0xff] %v2393
  %2733 = vst [vmem:[%s2 + $0x1d0] sm:$0xff] %v2413
  %2734 = vst [vmem:[%s2 + $0x1d8] sm:$0xff] %v2433
  %2735 = vst [vmem:[%s2 + $0x1e0] sm:$0xff] %v2453
  %2736 = vst [vmem:[%s2 + $0x1e8] sm:$0xff] %v2473
  %2737 = vst [vmem:[%s2 + $0x1f0] sm:$0xff] %v2493
  %2738 = vst [vmem:[%s2 + $0x1f8] sm:$0xff] %v2513
  %2739 = vst [vmem:[%s2 + $0x200] sm:$0xff] %v2533
  %2740 = vst [vmem:[%s2 + $0x208] sm:$0xff] %v2553
  %2741 = vst [vmem:[%s2 + $0x210] sm:$0xff] %v2573
  %2742 = vst [vmem:[%s2 + $0x218] sm:$0xff] %v2593
  %2743 = vst [vmem:[%s2 + $0x220] sm:$0xff] %v2613
  %2744 = vst [vmem:[%s2 + $0x228] sm:$0xff] %v2633
  %2745 = vst [vmem:[%s2 + $0x230] sm:$0xff] %v2653
  %2746 = vst [vmem:[%s2 + $0x238] sm:$0xff] %v2673
  // Predicated region
  $region10: #{spectral_conv2d_fast.1} parent=0 // pred_check
    _
  $region11: #{spectral_conv2d_fast.1} parent=0 // pred_check_branch
    %2748 = sbr.rel (0) target = $region13
  $region12: #{spectral_conv2d_fast.1} parent=0 // pred_region
    _
  $region13: #{spectral_conv2d_fast.1} parent=0 // pred_fallthru
    _
  // Predicated region
  $region14: #{spectral_conv2d_fast.1} parent=0 // pred_check
    _
  $region15: #{spectral_conv2d_fast.1} parent=0 // pred_check_branch
    %2750 = sbr.rel (0) target = $region17
  $region16: #{spectral_conv2d_fast.1} parent=0 // pred_region
    _
  $region17: #{spectral_conv2d_fast.1} parent=0 // pred_fallthru
    _

</llo_original>
